<compile_context>
chip_gen: v6e
topology: v6e:2x2x1
jax: 0.10.0
libtpu: 0.0.40
codegen_flags: <defaults>
</compile_context>

<pallas_src>
import jax
import jax.numpy as jnp
from jax import lax
from jax.experimental import pallas as pl
from jax.experimental.pallas import tpu as pltpu

HIDDEN = 768
OUT = 3072
EPS = 1e-12


def fused_kernel(x187_ref, x154_ref, gamma_ref, beta_ref, w_ref, b_ref,
                 o_ref, y_scratch):
    # N-panel index (inner grid axis).  LayerNorm only needs to run once per
    # row tile; cache the (bf16) normalized activations in VMEM scratch.
    j = pl.program_id(1)

    @pl.when(j == 0)
    def _():
        # Dropout(p=0.1) in eval mode is identity, so dropout+add == add.
        x = x187_ref[...] + x154_ref[...]                    # (tm, HIDDEN) f32
        mean = jnp.mean(x, axis=-1, keepdims=True)
        centered = x - mean
        var = jnp.mean(centered * centered, axis=-1, keepdims=True)
        xn = centered * lax.rsqrt(var + EPS)
        y = xn * gamma_ref[...] + beta_ref[...]              # f32 LN math
        y_scratch[...] = y.astype(jnp.bfloat16)

    # Linear panel: (tm, H) bf16 @ (H, tn) bf16 -> f32 accumulate, + bias.
    o_ref[...] = (
        jnp.dot(y_scratch[...], w_ref[...], preferred_element_type=jnp.float32)
        + b_ref[...]
    )


def fused_dropout_add_layernorm_linear(x187, x154, gamma, beta, w_t_bf16, b,
                                       *, tm=192, tn=768):
    B, S, H = x187.shape
    assert H == HIDDEN and w_t_bf16.shape == (HIDDEN, OUT)
    rows = B * S
    assert rows % tm == 0, "row count must be divisible by the row tile"
    assert OUT % tn == 0, "OUT must be divisible by the N tile"

    x187_2d = x187.reshape(rows, H)
    x154_2d = x154.reshape(rows, H)
    gamma_2d = gamma.reshape(1, H)
    beta_2d = beta.reshape(1, H)
    b_2d = b.reshape(1, OUT)

    out = pl.pallas_call(
        fused_kernel,
        out_shape=jax.ShapeDtypeStruct((rows, OUT), jnp.float32),
        grid_spec=pltpu.PrefetchScalarGridSpec(
            num_scalar_prefetch=0,
            grid=(rows // tm, OUT // tn),
            in_specs=[
                pl.BlockSpec((tm, H), lambda i, j: (i, 0)),     # x187 row tile
                pl.BlockSpec((tm, H), lambda i, j: (i, 0)),     # x154 row tile
                pl.BlockSpec((1, H), lambda i, j: (0, 0)),      # LN gamma
                pl.BlockSpec((1, H), lambda i, j: (0, 0)),      # LN beta
                pl.BlockSpec((H, tn), lambda i, j: (0, j)),     # W^T panel (bf16)
                pl.BlockSpec((1, tn), lambda i, j: (0, j)),     # bias panel
            ],
            out_specs=pl.BlockSpec((tm, tn), lambda i, j: (i, j)),
            scratch_shapes=[pltpu.VMEM((tm, HIDDEN), jnp.bfloat16)],
        ),
        compiler_params=pltpu.CompilerParams(
            dimension_semantics=("parallel", "arbitrary"),
        ),
    )(x187_2d, x154_2d, gamma_2d, beta_2d, w_t_bf16, b_2d)

    return out.reshape(B, S, OUT)


def reference_f32(x187, x154, gamma, beta, w_t_f32, b):
    x = x187 + x154
    mean = jnp.mean(x, axis=-1, keepdims=True)
    var = jnp.mean((x - mean) ** 2, axis=-1, keepdims=True)
    xn = (x - mean) * lax.rsqrt(var + EPS)
    y = xn * gamma + beta
    return (jnp.dot(y.reshape(-1, HIDDEN), w_t_f32,
                    precision=lax.Precision.HIGHEST,
                    preferred_element_type=jnp.float32)
            + b).reshape(x.shape[0], x.shape[1], OUT)


def reference_bf16_matched(x187, x154, gamma, beta, w_t_bf16, b):
    # Same bf16 quantization of y and W as the kernel, f32 accumulation.
    x = x187 + x154
    mean = jnp.mean(x, axis=-1, keepdims=True)
    var = jnp.mean((x - mean) ** 2, axis=-1, keepdims=True)
    xn = (x - mean) * lax.rsqrt(var + EPS)
    y = (xn * gamma + beta).astype(jnp.bfloat16).astype(jnp.float32)
    w = w_t_bf16.astype(jnp.float32)
    return (jnp.dot(y.reshape(-1, HIDDEN), w,
                    precision=lax.Precision.HIGHEST,
                    preferred_element_type=jnp.float32)
            + b).reshape(x.shape[0], x.shape[1], OUT)


if __name__ == "__main__":
    key = jax.random.PRNGKey(0)
    k1, k2, k3, k4, k5, k6 = jax.random.split(key, 6)

    B, S = 1, 384
    x187 = jax.random.normal(k1, (B, S, HIDDEN), dtype=jnp.float32)
    x154 = jax.random.normal(k2, (B, S, HIDDEN), dtype=jnp.float32)

    # Deterministic synthetic parameters (not a checkpoint load).
    gamma = 1.0 + 0.1 * jax.random.normal(k5, (HIDDEN,), dtype=jnp.float32)
    beta = 0.1 * jax.random.normal(k6, (HIDDEN,), dtype=jnp.float32)
    # PyTorch Linear weight is (OUT, HIDDEN); keep it pre-transposed (HIDDEN, OUT)
    # and stream it to the kernel in bfloat16.
    w_t_f32 = (jax.random.normal(k3, (HIDDEN, OUT), dtype=jnp.float32)
               * (1.0 / jnp.sqrt(HIDDEN)))
    w_t_bf16 = w_t_f32.astype(jnp.bfloat16)
    b = jax.random.normal(k4, (OUT,), dtype=jnp.float32) * 0.02

    out = fused_dropout_add_layernorm_linear(x187, x154, gamma, beta,
                                             w_t_bf16, b)
    out = jax.block_until_ready(out)
    assert out.shape == (B, S, OUT)

    # Tight check against a reference with the same bf16 quantization.
    ref_bf16 = reference_bf16_matched(x187, x154, gamma, beta, w_t_bf16, b)
    assert jnp.max(jnp.abs(out - ref_bf16)) < 2e-3, "mismatch vs bf16-matched ref"

    # Looser sanity check against the full-f32 reference (bf16 weight/activation
    # rounding over K=768 gives ~1e-2 absolute error on O(1) outputs).
    ref_f32 = reference_f32(x187, x154, gamma, beta, w_t_f32, b)
    assert jnp.max(jnp.abs(out - ref_f32)) < 1e-1, "mismatch vs f32 reference"

    print("KERNEL_OK")
</pallas_src>

<mosaic_0001>
module attributes {stable_mosaic.version = 11 : i64} {
  func.func @fused_kernel(%arg0: i32, %arg1: i32, %arg2: memref<192x768xf32, #tpu.memory_space<vmem>>, %arg3: memref<192x768xf32, #tpu.memory_space<vmem>>, %arg4: memref<1x768xf32, #tpu.memory_space<vmem>>, %arg5: memref<1x768xf32, #tpu.memory_space<vmem>>, %arg6: memref<768x768xbf16, #tpu.memory_space<vmem>>, %arg7: memref<1x768xf32, #tpu.memory_space<vmem>>, %arg8: memref<192x768xf32, #tpu.memory_space<vmem>>, %arg9: memref<192x768xbf16, #tpu.memory_space<vmem>>) attributes {dimension_semantics = [#tpu.dimension_semantics<parallel>, #tpu.dimension_semantics<arbitrary>], iteration_bounds = array<i64: 2, 4>, scalar_prefetch = 0 : i64, scratch_operands = 1 : i64, tpu.core_type = #tpu.core_type<tc>, window_params = [{transform_indices = @transform_0, window_bounds = array<i64: 192, 768>}, {transform_indices = @transform_1, window_bounds = array<i64: 192, 768>}, {pipeline_mode = #tpu.pipeline_mode<synchronous>, transform_indices = @transform_2, window_bounds = array<i64: 1, 768>}, {pipeline_mode = #tpu.pipeline_mode<synchronous>, transform_indices = @transform_3, window_bounds = array<i64: 1, 768>}, {transform_indices = @transform_4, window_bounds = array<i64: 768, 768>}, {transform_indices = @transform_5, window_bounds = array<i64: 1, 768>}, {transform_indices = @transform_6, window_bounds = array<i64: 192, 768>}]} {
    %c0_i32 = arith.constant 0 : i32
    %0 = arith.cmpi eq, %arg1, %c0_i32 : i32
    %1 = arith.extui %0 : i1 to i32
    %c0_i32_0 = arith.constant 0 : i32
    %2 = arith.cmpi ne, %1, %c0_i32_0 : i32
    scf.if %2 {
      %c0_8 = arith.constant 0 : index
      %c0_9 = arith.constant 0 : index
      %10 = vector.load %arg2[%c0_8, %c0_9] : memref<192x768xf32, #tpu.memory_space<vmem>>, vector<192x768xf32>
      %c0_10 = arith.constant 0 : index
      %c0_11 = arith.constant 0 : index
      %11 = vector.load %arg3[%c0_10, %c0_11] : memref<192x768xf32, #tpu.memory_space<vmem>>, vector<192x768xf32>
      %12 = arith.addf %10, %11 : vector<192x768xf32>
      %cst_12 = arith.constant dense<0.000000e+00> : vector<192xf32>
      %13 = vector.multi_reduction <add>, %12, %cst_12 [1] : vector<192x768xf32> to vector<192xf32>
      %14 = vector.shape_cast %13 : vector<192xf32> to vector<192x1xf32>
      %cst_13 = arith.constant 7.680000e+02 : f32
      %15 = vector.broadcast %cst_13 : f32 to vector<192x1xf32>
      %16 = arith.divf %14, %15 : vector<192x1xf32>
      %17 = vector.broadcast %16 : vector<192x1xf32> to vector<192x768xf32>
      %18 = arith.subf %12, %17 : vector<192x768xf32>
      %19 = arith.mulf %18, %18 : vector<192x768xf32>
      %cst_14 = arith.constant dense<0.000000e+00> : vector<192xf32>
      %20 = vector.multi_reduction <add>, %19, %cst_14 [1] : vector<192x768xf32> to vector<192xf32>
      %21 = vector.shape_cast %20 : vector<192xf32> to vector<192x1xf32>
      %cst_15 = arith.constant 7.680000e+02 : f32
      %22 = vector.broadcast %cst_15 : f32 to vector<192x1xf32>
      %23 = arith.divf %21, %22 : vector<192x1xf32>
      %cst_16 = arith.constant 9.99999996E-13 : f32
      %24 = vector.broadcast %cst_16 : f32 to vector<192x1xf32>
      %25 = arith.addf %23, %24 : vector<192x1xf32>
      %26 = math.rsqrt %25 : vector<192x1xf32>
      %27 = vector.broadcast %26 : vector<192x1xf32> to vector<192x768xf32>
      %28 = arith.mulf %18, %27 : vector<192x768xf32>
      %c0_17 = arith.constant 0 : index
      %c0_18 = arith.constant 0 : index
      %29 = vector.load %arg4[%c0_17, %c0_18] : memref<1x768xf32, #tpu.memory_space<vmem>>, vector<1x768xf32>
      %30 = vector.broadcast %29 : vector<1x768xf32> to vector<192x768xf32>
      %31 = arith.mulf %28, %30 : vector<192x768xf32>
      %c0_19 = arith.constant 0 : index
      %c0_20 = arith.constant 0 : index
      %32 = vector.load %arg5[%c0_19, %c0_20] : memref<1x768xf32, #tpu.memory_space<vmem>>, vector<1x768xf32>
      %33 = vector.broadcast %32 : vector<1x768xf32> to vector<192x768xf32>
      %34 = arith.addf %31, %33 : vector<192x768xf32>
      %35 = arith.truncf %34 : vector<192x768xf32> to vector<192x768xbf16>
      %c0_21 = arith.constant 0 : index
      %c0_22 = arith.constant 0 : index
      %36 = vector.load %arg9[%c0_21, %c0_22] : memref<192x768xbf16, #tpu.memory_space<vmem>>, vector<192x768xbf16>
      tpu.vector_store %arg9[%c0_21, %c0_22], %35 {strides = array<i32>} : memref<192x768xbf16, #tpu.memory_space<vmem>>, vector<192x768xbf16>,
    } else {
    }
    %c0 = arith.constant 0 : index
    %c0_1 = arith.constant 0 : index
    %3 = vector.load %arg9[%c0, %c0_1] : memref<192x768xbf16, #tpu.memory_space<vmem>>, vector<192x768xbf16>
    %c0_2 = arith.constant 0 : index
    %c0_3 = arith.constant 0 : index
    %4 = vector.load %arg6[%c0_2, %c0_3] : memref<768x768xbf16, #tpu.memory_space<vmem>>, vector<768x768xbf16>
    %cst = arith.constant dense<0.000000e+00> : vector<192x768xf32>
    %5 = tpu.matmul %3, %4, %cst {dimension_numbers = #tpu.dot_dimension_numbers<[1], [0], [0], [1], [0, 0, 1, 1], [], []>} : vector<192x768xbf16>, vector<768x768xbf16>, vector<192x768xf32> -> vector<192x768xf32>
    %c0_4 = arith.constant 0 : index
    %c0_5 = arith.constant 0 : index
    %6 = vector.load %arg7[%c0_4, %c0_5] : memref<1x768xf32, #tpu.memory_space<vmem>>, vector<1x768xf32>
    %7 = vector.broadcast %6 : vector<1x768xf32> to vector<192x768xf32>
    %8 = arith.addf %5, %7 : vector<192x768xf32>
    %c0_6 = arith.constant 0 : index
    %c0_7 = arith.constant 0 : index
    %9 = vector.load %arg8[%c0_6, %c0_7] : memref<192x768xf32, #tpu.memory_space<vmem>>, vector<192x768xf32>
    tpu.vector_store %arg8[%c0_6, %c0_7], %8 {strides = array<i32>} : memref<192x768xf32, #tpu.memory_space<vmem>>, vector<192x768xf32>,
    return
  }
  func.func @transform_0(%arg0: i32, %arg1: i32) -> (i32, i32) {
    %c0_i32 = arith.constant 0 : i32
    %c0_i32_0 = arith.constant 0 : i32
    return %arg0, %c0_i32 : i32, i32
  }
  func.func @transform_1(%arg0: i32, %arg1: i32) -> (i32, i32) {
    %c0_i32 = arith.constant 0 : i32
    %c0_i32_0 = arith.constant 0 : i32
    return %arg0, %c0_i32 : i32, i32
  }
  func.func @transform_2(%arg0: i32, %arg1: i32) -> (i32, i32) {
    %c0_i32 = arith.constant 0 : i32
    %c0_i32_0 = arith.constant 0 : i32
    %c0_i32_1 = arith.constant 0 : i32
    return %c0_i32, %c0_i32_0 : i32, i32
  }
  func.func @transform_3(%arg0: i32, %arg1: i32) -> (i32, i32) {
    %c0_i32 = arith.constant 0 : i32
    %c0_i32_0 = arith.constant 0 : i32
    %c0_i32_1 = arith.constant 0 : i32
    return %c0_i32, %c0_i32_0 : i32, i32
  }
  func.func @transform_4(%arg0: i32, %arg1: i32) -> (i32, i32) {
    %c0_i32 = arith.constant 0 : i32
    %c0_i32_0 = arith.constant 0 : i32
    return %c0_i32, %arg1 : i32, i32
  }
  func.func @transform_5(%arg0: i32, %arg1: i32) -> (i32, i32) {
    %c0_i32 = arith.constant 0 : i32
    %c0_i32_0 = arith.constant 0 : i32
    return %c0_i32, %arg1 : i32, i32
  }
  func.func @transform_6(%arg0: i32, %arg1: i32) -> (i32, i32) {
    %c0_i32 = arith.constant 0 : i32
    return %arg0, %arg1 : i32, i32
  }
}

</mosaic_0001>

<llo_original>
// kernel: tpu_custom_call.1
$region0: #{tpu_custom_call.1}
  #allocation0 [shape = 'u32[]', space=smem, size = 0x4, offset = 0x4, fixed_abs, tag = 'smem constant byte address 0x4 - core index']
  #allocation1 [shape = 'u32[144,128]{1,0:T(1,128)}', space=vmem, size = 0x12000, scoped, tag = 'internal scratch']
  #allocation2 [shape = 'bf16[192,768]{1,0:T(8,128)(2,1)}', space=vmem, size = 0x48000, scoped, tag = 'scratch operand']
  %s0 = inlined_call_operand.hbm [shape: f32[384,768], index: 0, kind: input, shape index: {}]
  %s1 = inlined_call_operand.hbm [shape: f32[384,768], index: 1, kind: input, shape index: {}]
  %s2 = inlined_call_operand.hbm [shape: f32[1,768], index: 2, kind: input, shape index: {}]
  %s3 = inlined_call_operand.hbm [shape: f32[1,768], index: 3, kind: input, shape index: {}]
  %s4 = inlined_call_operand.hbm [shape: bf16[768,3072], index: 4, kind: input, shape index: {}]
  %s5 = inlined_call_operand.hbm [shape: f32[1,3072], index: 5, kind: input, shape index: {}]
  %s6 = inlined_call_operand.hbm [shape: f32[384,3072], index: 6, kind: output, shape index: {}]
  %s7 = sld [smem:[#allocation0]]
  $region85: #{tpu_custom_call.1} parent=0
    _
  %s9 = ssub.s32 1, %s7
  %s10 = scalar_select 0, %s9, %s7
  $region1: #{tpu_custom_call.1} parent=0
    #allocation3 [shape = 'u8[1179648]{0}', space=vmem, size = 0x120000, scoped, tag = 'input window, operand 0']
    #allocation4 [shape = 's32[2]{0}', space=sflag, size = 0x8, scoped, tag = 'scoped memory for tpu_custom_call.1']
    #allocation5 [shape = 's32[2]{0}', space=sflag, size = 0x8, scoped, tag = 'scoped memory for tpu_custom_call.1']
    #allocation6 [shape = 'u8[1179648]{0}', space=vmem, size = 0x120000, scoped, tag = 'input window, operand 1']
    #allocation7 [shape = 's32[2]{0}', space=sflag, size = 0x8, scoped, tag = 'scoped memory for tpu_custom_call.1']
    #allocation8 [shape = 'u8[3072]{0}', space=vmem, size = 0xc00, scoped, tag = 'input window, operand 2, single buffered']
    #allocation9 [shape = 'u8[3072]{0}', space=vmem, size = 0xc00, scoped, tag = 'input window, operand 3, single buffered']
    #allocation10 [shape = 's32[1]{0}', space=sflag, size = 0x4, scoped, tag = 'scoped memory for tpu_custom_call.1']
    #allocation11 [shape = 'u8[2359296]{0}', space=vmem, size = 0x240000, scoped, tag = 'input window, operand 4']
    #allocation12 [shape = 'u8[6144]{0}', space=vmem, size = 0x1800, scoped, tag = 'input window, operand 5']
    #allocation13 [shape = 'u8[1179648]{0}', space=vmem, size = 0x120000, scoped, tag = 'output window, operand 0']
    %11 = vsyncpa [#allocation4], 0
    %s12 = scalar_lea.sflag [#allocation4], 1
    %13 = vsyncpa %s12, 0
    %14 = vsyncpa [#allocation7], 0
    %s15 = scalar_lea.sflag [#allocation7], 1
    %16 = vsyncpa %s15, 0
    %17 = vsyncpa [#allocation10], 0
    %18 = vsyncpa [#allocation5], 0
    %s19 = scalar_lea.sflag [#allocation5], 1
    %20 = vsyncpa %s19, 0
    loop: start=0, step=1, limit=10
    $region2: #{tpu_custom_call.1} parent=1 // loop_pre_header
      _
    $region3: #{tpu_custom_call.1} parent=1 // loop_header
      %s22 = sphi 0, %s26
      %p23 = scmp.ge.s32.totalorder %s22, 10
      %s29 = sphi 0, %s41
      %s30 = sphi 0, %s37
      %s31 = sphi 0, %s29
      %s32 = sphi 0, %s30
      %s33 = sphi 0, %s31
      %s34 = sphi 0, %s32
      %s44 = sphi 0, %s46
      %s47 = sphi 0, %s44
      %s48 = sphi 0, %s47
      %s64 = sphi 0, %s48
      %s70 = sphi 0, %s72
      %s73 = sphi 0, %s70
      %s74 = sphi 0, %s73
      %s90 = sphi 0, %s74
      %s94 = sphi 0, %s94
      %s96 = sphi 0, %s94
      %s97 = sphi 0, %s96
      %s111 = sphi 0, %s97
      %s115 = sphi 0, %s115
      %s117 = sphi 0, %s115
      %s118 = sphi 0, %s117
      %s132 = sphi 0, %s118
      %s138 = sphi 0, %s140
      %s141 = sphi 0, %s138
      %s142 = sphi 0, %s141
      %s158 = sphi 0, %s142
      %s164 = sphi 0, %s166
      %s167 = sphi 0, %s164
      %s168 = sphi 0, %s167
      %s184 = sphi 0, %s168
      %s192 = sphi 0, %s194
      %s195 = sphi 0, %s192
      %s196 = sphi 0, %s195
      %s212 = sphi 0, %s196
    $region4: #{tpu_custom_call.1} parent=1 // loop_header_branch
      %25 = sbr.rel (%p23) target = $region8
    $region5: #{tpu_custom_call.1} parent=1 // loop_body
      %s27 = ssub.s32 %s22, 1
      %s28 = ssub.s32 %s22, 2
      %s35 = sadd.s32 1, %s30
      %p36 = scmp.ge.s32.totalorder %s35, 4
      %s37 = scalar_select %p36, 0, %s35
      %s38 = sadd.s32 1, %s29
      %s39 = scalar_select %p36, %s38, %s29
      %p40 = scmp.ge.s32.totalorder %s39, 2
      %s41 = scalar_select %p40, 0, %s39
      %s42 = ssub.s32 %s29, %s41
      %p43 = scmp.eq.s32.totalorder %s42, 0
      %s45 = sadd.s32 %s44, 1
      %s46 = scalar_select %p43, %s44, %s45
      %p49 = pneg %p43
      %p50 = scmp.eq.s32.totalorder %s22, 7
      %p51 = por %p49, %p50
      %p52 = scmp.ne.s32.totalorder %s44, %s47
      %p53 = scmp.eq.s32.totalorder %s22, 0
      %p54 = por %p52, %p53
      %p55 = scmp.ne.s32.totalorder %s44, %s47
      %p56 = scmp.eq.s32.totalorder %s27, 7
      %p57 = por %p55, %p56
      %p58 = scmp.ne.s32.totalorder %s47, %s48
      %p59 = scmp.eq.s32.totalorder %s27, 0
      %p60 = por %p58, %p59
      %p61 = scmp.ne.s32.totalorder %s47, %s48
      %p62 = scmp.eq.s32.totalorder %s28, 7
      %p63 = por %p61, %p62
      %p65 = scmp.ne.s32.totalorder %s48, %s64
      %p66 = scmp.eq.s32.totalorder %s28, 0
      %p67 = por %p65, %p66
      %s68 = ssub.s32 %s29, %s41
      %p69 = scmp.eq.s32.totalorder %s68, 0
      %s71 = sadd.s32 %s70, 1
      %s72 = scalar_select %p69, %s70, %s71
      %p75 = pneg %p69
      %p76 = scmp.eq.s32.totalorder %s22, 7
      %p77 = por %p75, %p76
      %p78 = scmp.ne.s32.totalorder %s70, %s73
      %p79 = scmp.eq.s32.totalorder %s22, 0
      %p80 = por %p78, %p79
      %p81 = scmp.ne.s32.totalorder %s70, %s73
      %p82 = scmp.eq.s32.totalorder %s27, 7
      %p83 = por %p81, %p82
      %p84 = scmp.ne.s32.totalorder %s73, %s74
      %p85 = scmp.eq.s32.totalorder %s27, 0
      %p86 = por %p84, %p85
      %p87 = scmp.ne.s32.totalorder %s73, %s74
      %p88 = scmp.eq.s32.totalorder %s28, 7
      %p89 = por %p87, %p88
      %p91 = scmp.ne.s32.totalorder %s74, %s90
      %p92 = scmp.eq.s32.totalorder %s28, 0
      %p93 = por %p91, %p92
      %s95 = sadd.s32 %s94, 1
      %p98 = scmp.eq.s32.totalorder %s22, 7
      %p99 = scmp.ne.s32.totalorder %s94, %s96
      %p100 = scmp.eq.s32.totalorder %s22, 0
      %p101 = por %p99, %p100
      %p102 = scmp.ne.s32.totalorder %s94, %s96
      %p103 = scmp.eq.s32.totalorder %s27, 7
      %p104 = por %p102, %p103
      %p105 = scmp.ne.s32.totalorder %s96, %s97
      %p106 = scmp.eq.s32.totalorder %s27, 0
      %p107 = por %p105, %p106
      %p108 = scmp.ne.s32.totalorder %s96, %s97
      %p109 = scmp.eq.s32.totalorder %s28, 7
      %p110 = por %p108, %p109
      %p112 = scmp.ne.s32.totalorder %s97, %s111
      %p113 = scmp.eq.s32.totalorder %s28, 0
      %p114 = por %p112, %p113
      %s116 = sadd.s32 %s115, 1
      %p119 = scmp.eq.s32.totalorder %s22, 7
      %p120 = scmp.ne.s32.totalorder %s115, %s117
      %p121 = scmp.eq.s32.totalorder %s22, 0
      %p122 = por %p120, %p121
      %p123 = scmp.ne.s32.totalorder %s115, %s117
      %p124 = scmp.eq.s32.totalorder %s27, 7
      %p125 = por %p123, %p124
      %p126 = scmp.ne.s32.totalorder %s117, %s118
      %p127 = scmp.eq.s32.totalorder %s27, 0
      %p128 = por %p126, %p127
      %p129 = scmp.ne.s32.totalorder %s117, %s118
      %p130 = scmp.eq.s32.totalorder %s28, 7
      %p131 = por %p129, %p130
      %p133 = scmp.ne.s32.totalorder %s118, %s132
      %p134 = scmp.eq.s32.totalorder %s28, 0
      %p135 = por %p133, %p134
      %s136 = ssub.s32 %s30, %s37
      %p137 = scmp.eq.s32.totalorder %s136, 0
      %s139 = sadd.s32 %s138, 1
      %s140 = scalar_select %p137, %s138, %s139
      %p143 = pneg %p137
      %p144 = scmp.eq.s32.totalorder %s22, 7
      %p145 = por %p143, %p144
      %p146 = scmp.ne.s32.totalorder %s138, %s141
      %p147 = scmp.eq.s32.totalorder %s22, 0
      %p148 = por %p146, %p147
      %p149 = scmp.ne.s32.totalorder %s138, %s141
      %p150 = scmp.eq.s32.totalorder %s27, 7
      %p151 = por %p149, %p150
      %p152 = scmp.ne.s32.totalorder %s141, %s142
      %p153 = scmp.eq.s32.totalorder %s27, 0
      %p154 = por %p152, %p153
      %p155 = scmp.ne.s32.totalorder %s141, %s142
      %p156 = scmp.eq.s32.totalorder %s28, 7
      %p157 = por %p155, %p156
      %p159 = scmp.ne.s32.totalorder %s142, %s158
      %p160 = scmp.eq.s32.totalorder %s28, 0
      %p161 = por %p159, %p160
      %s162 = ssub.s32 %s30, %s37
      %p163 = scmp.eq.s32.totalorder %s162, 0
      %s165 = sadd.s32 %s164, 1
      %s166 = scalar_select %p163, %s164, %s165
      %p169 = pneg %p163
      %p170 = scmp.eq.s32.totalorder %s22, 7
      %p171 = por %p169, %p170
      %p172 = scmp.ne.s32.totalorder %s164, %s167
      %p173 = scmp.eq.s32.totalorder %s22, 0
      %p174 = por %p172, %p173
      %p175 = scmp.ne.s32.totalorder %s164, %s167
      %p176 = scmp.eq.s32.totalorder %s27, 7
      %p177 = por %p175, %p176
      %p178 = scmp.ne.s32.totalorder %s167, %s168
      %p179 = scmp.eq.s32.totalorder %s27, 0
      %p180 = por %p178, %p179
      %p181 = scmp.ne.s32.totalorder %s167, %s168
      %p182 = scmp.eq.s32.totalorder %s28, 7
      %p183 = por %p181, %p182
      %p185 = scmp.ne.s32.totalorder %s168, %s184
      %p186 = scmp.eq.s32.totalorder %s28, 0
      %p187 = por %p185, %p186
      %s188 = ssub.s32 %s29, %s41
      %s189 = ssub.s32 %s30, %s37
      %s190 = sor.u32 %s188, %s189
      %p191 = scmp.eq.s32.totalorder %s190, 0
      %s193 = sadd.s32 %s192, 1
      %s194 = scalar_select %p191, %s192, %s193
      %p197 = pneg %p191
      %p198 = scmp.eq.s32.totalorder %s22, 7
      %p199 = por %p197, %p198
      %p200 = scmp.ne.s32.totalorder %s192, %s195
      %p201 = scmp.eq.s32.totalorder %s22, 0
      %p202 = por %p200, %p201
      %p203 = scmp.ne.s32.totalorder %s192, %s195
      %p204 = scmp.eq.s32.totalorder %s27, 7
      %p205 = por %p203, %p204
      %p206 = scmp.ne.s32.totalorder %s195, %s196
      %p207 = scmp.eq.s32.totalorder %s27, 0
      %p208 = por %p206, %p207
      %p209 = scmp.ne.s32.totalorder %s195, %s196
      %p210 = scmp.eq.s32.totalorder %s28, 7
      %p211 = por %p209, %p210
      %p213 = scmp.ne.s32.totalorder %s196, %s212
      %p214 = scmp.eq.s32.totalorder %s28, 0
      %p215 = por %p213, %p214
      %p216 = scmp.le.s32.totalorder 1, %s22
      %p217 = scmp.lt.s32.totalorder %s22, 9
      %p218 = pnand %p216, %p217
      %p219 = pneg %p218
      // Predicated region
      $region9: #{tpu_custom_call.1} parent=5 // pred_check
        _
      $region10: #{tpu_custom_call.1} parent=5 // pred_check_branch
        %221 = sbr.rel (%p218) target = $region12
      $region11: #{tpu_custom_call.1} parent=5 // pred_region
        %s222 = ssub.s32 %s22, 1
        // Predicated region
        $region13: #{tpu_custom_call.1} parent=11 // pred_check
          %p223 = pneg %p107
        $region14: #{tpu_custom_call.1} parent=11 // pred_check_branch
          %225 = sbr.rel (%p223) target = $region16
        $region15: #{tpu_custom_call.1} parent=11 // pred_region
          %s227 = ssub.s32 96, 96
          %228 = vsyncadd [#allocation7], %s227
          %s230 = sshll.u32 [#allocation8], 4
          %s231 = int_to_ptr.vmem [resolvable:$true] %s230
          %233 = dma.hbm_to_vmem [thread:$0]  %s2, 96, %s231, [#allocation7]
        $region16: #{tpu_custom_call.1} parent=11 // pred_fallthru
          _
        // Predicated region
        $region17: #{tpu_custom_call.1} parent=11 // pred_check
          %p234 = pneg %p128
        $region18: #{tpu_custom_call.1} parent=11 // pred_check_branch
          %236 = sbr.rel (%p234) target = $region20
        $region19: #{tpu_custom_call.1} parent=11 // pred_region
          %s238 = ssub.s32 96, 96
          %239 = vsyncadd [#allocation10], %s238
          %s241 = sshll.u32 [#allocation9], 4
          %s242 = int_to_ptr.vmem [resolvable:$true] %s241
          %244 = dma.hbm_to_vmem [thread:$0]  %s3, 96, %s242, [#allocation10]
        $region20: #{tpu_custom_call.1} parent=11 // pred_fallthru
          _
      $region12: #{tpu_custom_call.1} parent=5 // pred_fallthru
        _
      %p245 = scmp.lt.s32.totalorder %s22, 8
      // Predicated region
      $region21: #{tpu_custom_call.1} parent=5 // pred_check
        %p246 = pneg %p245
      $region22: #{tpu_custom_call.1} parent=5 // pred_check_branch
        %248 = sbr.rel (%p246) target = $region24
      $region23: #{tpu_custom_call.1} parent=5 // pred_region
        // Predicated region
        $region25: #{tpu_custom_call.1} parent=23 // pred_check
          %p249 = pneg %p54
        $region26: #{tpu_custom_call.1} parent=23 // pred_check_branch
          %251 = sbr.rel (%p249) target = $region28
        $region27: #{tpu_custom_call.1} parent=23 // pred_region
          %s252 = sand.u32 %s22, 1
          %s253 = scalar_lea.sflag [#allocation4], %s252
          %s254 = sand.u32 %s44, 1
          %s255 = smul.addr %s254, 1152
          %s256 = scalar_lea.vmem [#allocation3], %s255
          %s257 = smul.u32 24, %s29
          %s259 = ssub.s32 18432, 18432
          %260 = vsyncadd %s253, %s259
          %s261 = smul.addr %s257, 6
          %s262 = smul.addr %s261, 128
          %s263 = scalar_lea.hbm %s0, %s262
          %s264 = sshll.u32 %s256, 4
          %s265 = int_to_ptr.vmem [resolvable:$true] %s264
          %270 = dma.hbm_to_vmem [thread:$0]  %s263, 18432, %s265, %s253, 768, 768, 48
        $region28: #{tpu_custom_call.1} parent=23 // pred_fallthru
          _
        // Predicated region
        $region29: #{tpu_custom_call.1} parent=23 // pred_check
          %p271 = pneg %p80
        $region30: #{tpu_custom_call.1} parent=23 // pred_check_branch
          %273 = sbr.rel (%p271) target = $region32
        $region31: #{tpu_custom_call.1} parent=23 // pred_region
          %s274 = sand.u32 %s22, 1
          %s275 = scalar_lea.sflag [#allocation7], %s274
          %s276 = sand.u32 %s70, 1
          %s277 = smul.addr %s276, 1152
          %s278 = scalar_lea.vmem [#allocation6], %s277
          %s279 = smul.u32 24, %s29
          %s281 = ssub.s32 18432, 18432
          %282 = vsyncadd %s275, %s281
          %s283 = smul.addr %s279, 6
          %s284 = smul.addr %s283, 128
          %s285 = scalar_lea.hbm %s1, %s284
          %s286 = sshll.u32 %s278, 4
          %s287 = int_to_ptr.vmem [resolvable:$true] %s286
          %292 = dma.hbm_to_vmem [thread:$0]  %s285, 18432, %s287, %s275, 768, 768, 48
        $region32: #{tpu_custom_call.1} parent=23 // pred_fallthru
          _
        // Predicated region
        $region33: #{tpu_custom_call.1} parent=23 // pred_check
          %p293 = pneg %p148
        $region34: #{tpu_custom_call.1} parent=23 // pred_check_branch
          %295 = sbr.rel (%p293) target = $region36
        $region35: #{tpu_custom_call.1} parent=23 // pred_region
          %s296 = sand.u32 %s22, 1
          %s297 = scalar_lea.sflag [#allocation4], %s296
          %s298 = sand.u32 %s138, 1
          %s299 = smul.addr %s298, 2304
          %s300 = scalar_lea.vmem [#allocation11], %s299
          %s301 = smul.u32 6, %s30
          %s303 = ssub.s32 36864, 36864
          %304 = vsyncadd %s297, %s303
          %s305 = smul.addr %s301, 64
          %s306 = scalar_lea.hbm %s4, %s305
          %s307 = sshll.u32 %s300, 4
          %s308 = int_to_ptr.vmem [resolvable:$true] %s307
          %313 = dma.hbm_to_vmem [thread:$0]  %s306, 36864, %s308, %s297, 1536, 384, 24
        $region36: #{tpu_custom_call.1} parent=23 // pred_fallthru
          _
        // Predicated region
        $region37: #{tpu_custom_call.1} parent=23 // pred_check
          %p314 = pneg %p174
        $region38: #{tpu_custom_call.1} parent=23 // pred_check_branch
          %316 = sbr.rel (%p314) target = $region40
        $region39: #{tpu_custom_call.1} parent=23 // pred_region
          %s317 = sand.u32 %s22, 1
          %s318 = scalar_lea.sflag [#allocation7], %s317
          %s319 = sand.u32 %s164, 1
          %s320 = smul.addr %s319, 6
          %s321 = scalar_lea.vmem [#allocation12], %s320
          %s322 = smul.u32 6, %s30
          %s324 = ssub.s32 96, 96
          %325 = vsyncadd %s318, %s324
          %s326 = smul.addr %s322, 16
          %s327 = scalar_lea.hbm %s5, %s326
          %s329 = sshll.u32 %s321, 4
          %s330 = int_to_ptr.vmem [resolvable:$true] %s329
          %332 = dma.hbm_to_vmem [thread:$0]  %s327, 96, %s330, %s318
        $region40: #{tpu_custom_call.1} parent=23 // pred_fallthru
          _
      $region24: #{tpu_custom_call.1} parent=5 // pred_fallthru
        _
      %p333 = scmp.le.s32.totalorder 1, %s22
      %p334 = scmp.lt.s32.totalorder %s22, 9
      %p335 = pnand %p333, %p334
      %p336 = pneg %p335
      // Predicated region
      $region41: #{tpu_custom_call.1} parent=5 // pred_check
        _
      $region42: #{tpu_custom_call.1} parent=5 // pred_check_branch
        %338 = sbr.rel (%p335) target = $region44
      $region43: #{tpu_custom_call.1} parent=5 // pred_region
        %s339 = ssub.s32 %s22, 1
        %s340 = sand.u32 %s27, 1
        %s341 = scalar_lea.sflag [#allocation4], %s340
        %s342 = sand.u32 %s47, 1
        %s343 = smul.addr %s342, 1152
        %s344 = scalar_lea.vmem [#allocation3], %s343
        // Predicated region
        $region45: #{tpu_custom_call.1} parent=43 // pred_check
          %p345 = pneg %p60
        $region46: #{tpu_custom_call.1} parent=43 // pred_check_branch
          %347 = sbr.rel (%p345) target = $region48
        $region47: #{tpu_custom_call.1} parent=43 // pred_region
          %348 = dma.done %s341, 18432
        $region48: #{tpu_custom_call.1} parent=43 // pred_fallthru
          _
        %s349 = sand.u32 %s27, 1
        %s350 = scalar_lea.sflag [#allocation7], %s349
        %s351 = sand.u32 %s73, 1
        %s352 = smul.addr %s351, 1152
        %s353 = scalar_lea.vmem [#allocation6], %s352
        // Predicated region
        $region49: #{tpu_custom_call.1} parent=43 // pred_check
          %p354 = pneg %p86
        $region50: #{tpu_custom_call.1} parent=43 // pred_check_branch
          %356 = sbr.rel (%p354) target = $region52
        $region51: #{tpu_custom_call.1} parent=43 // pred_region
          %357 = dma.done %s350, 18432
        $region52: #{tpu_custom_call.1} parent=43 // pred_fallthru
          _
        // Predicated region
        $region53: #{tpu_custom_call.1} parent=43 // pred_check
          %p358 = pneg %p107
        $region54: #{tpu_custom_call.1} parent=43 // pred_check_branch
          %360 = sbr.rel (%p358) target = $region56
        $region55: #{tpu_custom_call.1} parent=43 // pred_region
          %361 = dma.done [#allocation7], 96
        $region56: #{tpu_custom_call.1} parent=43 // pred_fallthru
          _
        // Predicated region
        $region57: #{tpu_custom_call.1} parent=43 // pred_check
          %p362 = pneg %p128
        $region58: #{tpu_custom_call.1} parent=43 // pred_check_branch
          %364 = sbr.rel (%p362) target = $region60
        $region59: #{tpu_custom_call.1} parent=43 // pred_region
          %365 = dma.done [#allocation10], 96
        $region60: #{tpu_custom_call.1} parent=43 // pred_fallthru
          _
        %s366 = sand.u32 %s27, 1
        %s367 = scalar_lea.sflag [#allocation4], %s366
        %s368 = sand.u32 %s141, 1
        %s369 = smul.addr %s368, 2304
        %s370 = scalar_lea.vmem [#allocation11], %s369
        // Predicated region
        $region61: #{tpu_custom_call.1} parent=43 // pred_check
          %p371 = pneg %p154
        $region62: #{tpu_custom_call.1} parent=43 // pred_check_branch
          %373 = sbr.rel (%p371) target = $region64
        $region63: #{tpu_custom_call.1} parent=43 // pred_region
          %374 = dma.done %s367, 36864
        $region64: #{tpu_custom_call.1} parent=43 // pred_fallthru
          _
        %s375 = sand.u32 %s27, 1
        %s376 = scalar_lea.sflag [#allocation7], %s375
        %s377 = sand.u32 %s167, 1
        %s378 = smul.addr %s377, 6
        %s379 = scalar_lea.vmem [#allocation12], %s378
        // Predicated region
        $region65: #{tpu_custom_call.1} parent=43 // pred_check
          %p380 = pneg %p180
        $region66: #{tpu_custom_call.1} parent=43 // pred_check_branch
          %382 = sbr.rel (%p380) target = $region68
        $region67: #{tpu_custom_call.1} parent=43 // pred_region
          %383 = dma.done %s376, 96
        $region68: #{tpu_custom_call.1} parent=43 // pred_fallthru
          _
        %s384 = sand.u32 %s27, 1
        %s385 = scalar_lea.sflag [#allocation4], %s384
        %s386 = sand.u32 %s47, 1
        %s387 = smul.addr %s386, 1152
        %s388 = scalar_lea.vmem [#allocation3], %s387
        %p389 = pneg %p60
        %p390 = pneg %p57
        %s391 = sand.u32 %s27, 1
        %s392 = scalar_lea.sflag [#allocation7], %s391
        %s393 = sand.u32 %s73, 1
        %s394 = smul.addr %s393, 1152
        %s395 = scalar_lea.vmem [#allocation6], %s394
        %p396 = pneg %p86
        %p397 = pneg %p83
        %p398 = pneg %p107
        %p399 = pneg %p104
        %p400 = pneg %p128
        %p401 = pneg %p125
        %s402 = sand.u32 %s27, 1
        %s403 = scalar_lea.sflag [#allocation4], %s402
        %s404 = sand.u32 %s141, 1
        %s405 = smul.addr %s404, 2304
        %s406 = scalar_lea.vmem [#allocation11], %s405
        %p407 = pneg %p154
        %p408 = pneg %p151
        %s409 = sand.u32 %s27, 1
        %s410 = scalar_lea.sflag [#allocation7], %s409
        %s411 = sand.u32 %s167, 1
        %s412 = smul.addr %s411, 6
        %s413 = scalar_lea.vmem [#allocation12], %s412
        %p414 = pneg %p180
        %p415 = pneg %p177
        %p416 = pneg %p208
        %p417 = pneg %p205
        %s418 = sand.u32 %s195, 1
        %s419 = scalar_lea.sflag [#allocation5], %s418
        %s420 = sand.u32 %s195, 1
        %s421 = smul.addr %s420, 1152
        %s422 = scalar_lea.vmem [#allocation13], %s421
        %s423 = smul.u32 24, %s31
        %s424 = smul.u32 24, %s31
        %s425 = smul.u32 6, %s32
        %s426 = smul.u32 6, %s32
        %s427 = smul.u32 24, %s31
        %s428 = smul.u32 6, %s32
        %p429 = scmp.eq.s32.totalorder %s32, 0
        // Predicated region
        $region69: #{tpu_custom_call.1} parent=43 // pred_check
          %p430 = pneg %p429
        $region70: #{tpu_custom_call.1} parent=43 // pred_check_branch
          %432 = sbr.rel (%p430) target = $region72
        $region71: #{tpu_custom_call.1} parent=43 // pred_region
          %v433 = vld [vmem:[%s344] sm:$0xff]
          %v434 = vld [vmem:[%s344 + $0x8] sm:$0xff]
          %v435 = vld [vmem:[%s344 + $0x10] sm:$0xff]
          %v436 = vld [vmem:[%s344 + $0x18] sm:$0xff]
          %v437 = vld [vmem:[%s344 + $0x20] sm:$0xff]
          %v438 = vld [vmem:[%s344 + $0x28] sm:$0xff]
          %v439 = vld [vmem:[%s344 + $0x30] sm:$0xff]
          %v440 = vld [vmem:[%s344 + $0x38] sm:$0xff]
          %v441 = vld [vmem:[%s344 + $0x40] sm:$0xff]
          %v442 = vld [vmem:[%s344 + $0x48] sm:$0xff]
          %v443 = vld [vmem:[%s344 + $0x50] sm:$0xff]
          %v444 = vld [vmem:[%s344 + $0x58] sm:$0xff]
          %v445 = vld [vmem:[%s344 + $0x60] sm:$0xff]
          %v446 = vld [vmem:[%s344 + $0x68] sm:$0xff]
          %v447 = vld [vmem:[%s344 + $0x70] sm:$0xff]
          %v448 = vld [vmem:[%s344 + $0x78] sm:$0xff]
          %v449 = vld [vmem:[%s344 + $0x80] sm:$0xff]
          %v450 = vld [vmem:[%s344 + $0x88] sm:$0xff]
          %v451 = vld [vmem:[%s344 + $0x90] sm:$0xff]
          %v452 = vld [vmem:[%s344 + $0x98] sm:$0xff]
          %v453 = vld [vmem:[%s344 + $0xa0] sm:$0xff]
          %v454 = vld [vmem:[%s344 + $0xa8] sm:$0xff]
          %v455 = vld [vmem:[%s344 + $0xb0] sm:$0xff]
          %v456 = vld [vmem:[%s344 + $0xb8] sm:$0xff]
          %v457 = vld [vmem:[%s344 + $0xc0] sm:$0xff]
          %v458 = vld [vmem:[%s344 + $0xc8] sm:$0xff]
          %v459 = vld [vmem:[%s344 + $0xd0] sm:$0xff]
          %v460 = vld [vmem:[%s344 + $0xd8] sm:$0xff]
          %v461 = vld [vmem:[%s344 + $0xe0] sm:$0xff]
          %v462 = vld [vmem:[%s344 + $0xe8] sm:$0xff]
          %v463 = vld [vmem:[%s344 + $0xf0] sm:$0xff]
          %v464 = vld [vmem:[%s344 + $0xf8] sm:$0xff]
          %v465 = vld [vmem:[%s344 + $0x100] sm:$0xff]
          %v466 = vld [vmem:[%s344 + $0x108] sm:$0xff]
          %v467 = vld [vmem:[%s344 + $0x110] sm:$0xff]
          %v468 = vld [vmem:[%s344 + $0x118] sm:$0xff]
          %v469 = vld [vmem:[%s344 + $0x120] sm:$0xff]
          %v470 = vld [vmem:[%s344 + $0x128] sm:$0xff]
          %v471 = vld [vmem:[%s344 + $0x130] sm:$0xff]
          %v472 = vld [vmem:[%s344 + $0x138] sm:$0xff]
          %v473 = vld [vmem:[%s344 + $0x140] sm:$0xff]
          %v474 = vld [vmem:[%s344 + $0x148] sm:$0xff]
          %v475 = vld [vmem:[%s344 + $0x150] sm:$0xff]
          %v476 = vld [vmem:[%s344 + $0x158] sm:$0xff]
          %v477 = vld [vmem:[%s344 + $0x160] sm:$0xff]
          %v478 = vld [vmem:[%s344 + $0x168] sm:$0xff]
          %v479 = vld [vmem:[%s344 + $0x170] sm:$0xff]
          %v480 = vld [vmem:[%s344 + $0x178] sm:$0xff]
          %v481 = vld [vmem:[%s344 + $0x180] sm:$0xff]
          %v482 = vld [vmem:[%s344 + $0x188] sm:$0xff]
          %v483 = vld [vmem:[%s344 + $0x190] sm:$0xff]
          %v484 = vld [vmem:[%s344 + $0x198] sm:$0xff]
          %v485 = vld [vmem:[%s344 + $0x1a0] sm:$0xff]
          %v486 = vld [vmem:[%s344 + $0x1a8] sm:$0xff]
          %v487 = vld [vmem:[%s344 + $0x1b0] sm:$0xff]
          %v488 = vld [vmem:[%s344 + $0x1b8] sm:$0xff]
          %v489 = vld [vmem:[%s344 + $0x1c0] sm:$0xff]
          %v490 = vld [vmem:[%s344 + $0x1c8] sm:$0xff]
          %v491 = vld [vmem:[%s344 + $0x1d0] sm:$0xff]
          %v492 = vld [vmem:[%s344 + $0x1d8] sm:$0xff]
          %v493 = vld [vmem:[%s344 + $0x1e0] sm:$0xff]
          %v494 = vld [vmem:[%s344 + $0x1e8] sm:$0xff]
          %v495 = vld [vmem:[%s344 + $0x1f0] sm:$0xff]
          %v496 = vld [vmem:[%s344 + $0x1f8] sm:$0xff]
          %v497 = vld [vmem:[%s344 + $0x200] sm:$0xff]
          %v498 = vld [vmem:[%s344 + $0x208] sm:$0xff]
          %v499 = vld [vmem:[%s344 + $0x210] sm:$0xff]
          %v500 = vld [vmem:[%s344 + $0x218] sm:$0xff]
          %v501 = vld [vmem:[%s344 + $0x220] sm:$0xff]
          %v502 = vld [vmem:[%s344 + $0x228] sm:$0xff]
          %v503 = vld [vmem:[%s344 + $0x230] sm:$0xff]
          %v504 = vld [vmem:[%s344 + $0x238] sm:$0xff]
          %v505 = vld [vmem:[%s344 + $0x240] sm:$0xff]
          %v506 = vld [vmem:[%s344 + $0x248] sm:$0xff]
          %v507 = vld [vmem:[%s344 + $0x250] sm:$0xff]
          %v508 = vld [vmem:[%s344 + $0x258] sm:$0xff]
          %v509 = vld [vmem:[%s344 + $0x260] sm:$0xff]
          %v510 = vld [vmem:[%s344 + $0x268] sm:$0xff]
          %v511 = vld [vmem:[%s344 + $0x270] sm:$0xff]
          %v512 = vld [vmem:[%s344 + $0x278] sm:$0xff]
          %v513 = vld [vmem:[%s344 + $0x280] sm:$0xff]
          %v514 = vld [vmem:[%s344 + $0x288] sm:$0xff]
          %v515 = vld [vmem:[%s344 + $0x290] sm:$0xff]
          %v516 = vld [vmem:[%s344 + $0x298] sm:$0xff]
          %v517 = vld [vmem:[%s344 + $0x2a0] sm:$0xff]
          %v518 = vld [vmem:[%s344 + $0x2a8] sm:$0xff]
          %v519 = vld [vmem:[%s344 + $0x2b0] sm:$0xff]
          %v520 = vld [vmem:[%s344 + $0x2b8] sm:$0xff]
          %v521 = vld [vmem:[%s344 + $0x2c0] sm:$0xff]
          %v522 = vld [vmem:[%s344 + $0x2c8] sm:$0xff]
          %v523 = vld [vmem:[%s344 + $0x2d0] sm:$0xff]
          %v524 = vld [vmem:[%s344 + $0x2d8] sm:$0xff]
          %v525 = vld [vmem:[%s344 + $0x2e0] sm:$0xff]
          %v526 = vld [vmem:[%s344 + $0x2e8] sm:$0xff]
          %v527 = vld [vmem:[%s344 + $0x2f0] sm:$0xff]
          %v528 = vld [vmem:[%s344 + $0x2f8] sm:$0xff]
          %v529 = vld [vmem:[%s344 + $0x300] sm:$0xff]
          %v530 = vld [vmem:[%s344 + $0x308] sm:$0xff]
          %v531 = vld [vmem:[%s344 + $0x310] sm:$0xff]
          %v532 = vld [vmem:[%s344 + $0x318] sm:$0xff]
          %v533 = vld [vmem:[%s344 + $0x320] sm:$0xff]
          %v534 = vld [vmem:[%s344 + $0x328] sm:$0xff]
          %v535 = vld [vmem:[%s344 + $0x330] sm:$0xff]
          %v536 = vld [vmem:[%s344 + $0x338] sm:$0xff]
          %v537 = vld [vmem:[%s344 + $0x340] sm:$0xff]
          %v538 = vld [vmem:[%s344 + $0x348] sm:$0xff]
          %v539 = vld [vmem:[%s344 + $0x350] sm:$0xff]
          %v540 = vld [vmem:[%s344 + $0x358] sm:$0xff]
          %v541 = vld [vmem:[%s344 + $0x360] sm:$0xff]
          %v542 = vld [vmem:[%s344 + $0x368] sm:$0xff]
          %v543 = vld [vmem:[%s344 + $0x370] sm:$0xff]
          %v544 = vld [vmem:[%s344 + $0x378] sm:$0xff]
          %v545 = vld [vmem:[%s344 + $0x380] sm:$0xff]
          %v546 = vld [vmem:[%s344 + $0x388] sm:$0xff]
          %v547 = vld [vmem:[%s344 + $0x390] sm:$0xff]
          %v548 = vld [vmem:[%s344 + $0x398] sm:$0xff]
          %v549 = vld [vmem:[%s344 + $0x3a0] sm:$0xff]
          %v550 = vld [vmem:[%s344 + $0x3a8] sm:$0xff]
          %v551 = vld [vmem:[%s344 + $0x3b0] sm:$0xff]
          %v552 = vld [vmem:[%s344 + $0x3b8] sm:$0xff]
          %v553 = vld [vmem:[%s344 + $0x3c0] sm:$0xff]
          %v554 = vld [vmem:[%s344 + $0x3c8] sm:$0xff]
          %v555 = vld [vmem:[%s344 + $0x3d0] sm:$0xff]
          %v556 = vld [vmem:[%s344 + $0x3d8] sm:$0xff]
          %v557 = vld [vmem:[%s344 + $0x3e0] sm:$0xff]
          %v558 = vld [vmem:[%s344 + $0x3e8] sm:$0xff]
          %v559 = vld [vmem:[%s344 + $0x3f0] sm:$0xff]
          %v560 = vld [vmem:[%s344 + $0x3f8] sm:$0xff]
          %v561 = vld [vmem:[%s344 + $0x400] sm:$0xff]
          %v562 = vld [vmem:[%s344 + $0x408] sm:$0xff]
          %v563 = vld [vmem:[%s344 + $0x410] sm:$0xff]
          %v564 = vld [vmem:[%s344 + $0x418] sm:$0xff]
          %v565 = vld [vmem:[%s344 + $0x420] sm:$0xff]
          %v566 = vld [vmem:[%s344 + $0x428] sm:$0xff]
          %v567 = vld [vmem:[%s344 + $0x430] sm:$0xff]
          %v568 = vld [vmem:[%s344 + $0x438] sm:$0xff]
          %v569 = vld [vmem:[%s344 + $0x440] sm:$0xff]
          %v570 = vld [vmem:[%s344 + $0x448] sm:$0xff]
          %v571 = vld [vmem:[%s344 + $0x450] sm:$0xff]
          %v572 = vld [vmem:[%s344 + $0x458] sm:$0xff]
          %v573 = vld [vmem:[%s344 + $0x460] sm:$0xff]
          %v574 = vld [vmem:[%s344 + $0x468] sm:$0xff]
          %v575 = vld [vmem:[%s344 + $0x470] sm:$0xff]
          %v576 = vld [vmem:[%s344 + $0x478] sm:$0xff]
          %v577 = vld [vmem:[%s353] sm:$0xff]
          %v578 = vld [vmem:[%s353 + $0x8] sm:$0xff]
          %v579 = vld [vmem:[%s353 + $0x10] sm:$0xff]
          %v580 = vld [vmem:[%s353 + $0x18] sm:$0xff]
          %v581 = vld [vmem:[%s353 + $0x20] sm:$0xff]
          %v582 = vld [vmem:[%s353 + $0x28] sm:$0xff]
          %v583 = vld [vmem:[%s353 + $0x30] sm:$0xff]
          %v584 = vld [vmem:[%s353 + $0x38] sm:$0xff]
          %v585 = vld [vmem:[%s353 + $0x40] sm:$0xff]
          %v586 = vld [vmem:[%s353 + $0x48] sm:$0xff]
          %v587 = vld [vmem:[%s353 + $0x50] sm:$0xff]
          %v588 = vld [vmem:[%s353 + $0x58] sm:$0xff]
          %v589 = vld [vmem:[%s353 + $0x60] sm:$0xff]
          %v590 = vld [vmem:[%s353 + $0x68] sm:$0xff]
          %v591 = vld [vmem:[%s353 + $0x70] sm:$0xff]
          %v592 = vld [vmem:[%s353 + $0x78] sm:$0xff]
          %v593 = vld [vmem:[%s353 + $0x80] sm:$0xff]
          %v594 = vld [vmem:[%s353 + $0x88] sm:$0xff]
          %v595 = vld [vmem:[%s353 + $0x90] sm:$0xff]
          %v596 = vld [vmem:[%s353 + $0x98] sm:$0xff]
          %v597 = vld [vmem:[%s353 + $0xa0] sm:$0xff]
          %v598 = vld [vmem:[%s353 + $0xa8] sm:$0xff]
          %v599 = vld [vmem:[%s353 + $0xb0] sm:$0xff]
          %v600 = vld [vmem:[%s353 + $0xb8] sm:$0xff]
          %v601 = vld [vmem:[%s353 + $0xc0] sm:$0xff]
          %v602 = vld [vmem:[%s353 + $0xc8] sm:$0xff]
          %v603 = vld [vmem:[%s353 + $0xd0] sm:$0xff]
          %v604 = vld [vmem:[%s353 + $0xd8] sm:$0xff]
          %v605 = vld [vmem:[%s353 + $0xe0] sm:$0xff]
          %v606 = vld [vmem:[%s353 + $0xe8] sm:$0xff]
          %v607 = vld [vmem:[%s353 + $0xf0] sm:$0xff]
          %v608 = vld [vmem:[%s353 + $0xf8] sm:$0xff]
          %v609 = vld [vmem:[%s353 + $0x100] sm:$0xff]
          %v610 = vld [vmem:[%s353 + $0x108] sm:$0xff]
          %v611 = vld [vmem:[%s353 + $0x110] sm:$0xff]
          %v612 = vld [vmem:[%s353 + $0x118] sm:$0xff]
          %v613 = vld [vmem:[%s353 + $0x120] sm:$0xff]
          %v614 = vld [vmem:[%s353 + $0x128] sm:$0xff]
          %v615 = vld [vmem:[%s353 + $0x130] sm:$0xff]
          %v616 = vld [vmem:[%s353 + $0x138] sm:$0xff]
          %v617 = vld [vmem:[%s353 + $0x140] sm:$0xff]
          %v618 = vld [vmem:[%s353 + $0x148] sm:$0xff]
          %v619 = vld [vmem:[%s353 + $0x150] sm:$0xff]
          %v620 = vld [vmem:[%s353 + $0x158] sm:$0xff]
          %v621 = vld [vmem:[%s353 + $0x160] sm:$0xff]
          %v622 = vld [vmem:[%s353 + $0x168] sm:$0xff]
          %v623 = vld [vmem:[%s353 + $0x170] sm:$0xff]
          %v624 = vld [vmem:[%s353 + $0x178] sm:$0xff]
          %v625 = vld [vmem:[%s353 + $0x180] sm:$0xff]
          %v626 = vld [vmem:[%s353 + $0x188] sm:$0xff]
          %v627 = vld [vmem:[%s353 + $0x190] sm:$0xff]
          %v628 = vld [vmem:[%s353 + $0x198] sm:$0xff]
          %v629 = vld [vmem:[%s353 + $0x1a0] sm:$0xff]
          %v630 = vld [vmem:[%s353 + $0x1a8] sm:$0xff]
          %v631 = vld [vmem:[%s353 + $0x1b0] sm:$0xff]
          %v632 = vld [vmem:[%s353 + $0x1b8] sm:$0xff]
          %v633 = vld [vmem:[%s353 + $0x1c0] sm:$0xff]
          %v634 = vld [vmem:[%s353 + $0x1c8] sm:$0xff]
          %v635 = vld [vmem:[%s353 + $0x1d0] sm:$0xff]
          %v636 = vld [vmem:[%s353 + $0x1d8] sm:$0xff]
          %v637 = vld [vmem:[%s353 + $0x1e0] sm:$0xff]
          %v638 = vld [vmem:[%s353 + $0x1e8] sm:$0xff]
          %v639 = vld [vmem:[%s353 + $0x1f0] sm:$0xff]
          %v640 = vld [vmem:[%s353 + $0x1f8] sm:$0xff]
          %v641 = vld [vmem:[%s353 + $0x200] sm:$0xff]
          %v642 = vld [vmem:[%s353 + $0x208] sm:$0xff]
          %v643 = vld [vmem:[%s353 + $0x210] sm:$0xff]
          %v644 = vld [vmem:[%s353 + $0x218] sm:$0xff]
          %v645 = vld [vmem:[%s353 + $0x220] sm:$0xff]
          %v646 = vld [vmem:[%s353 + $0x228] sm:$0xff]
          %v647 = vld [vmem:[%s353 + $0x230] sm:$0xff]
          %v648 = vld [vmem:[%s353 + $0x238] sm:$0xff]
          %v649 = vld [vmem:[%s353 + $0x240] sm:$0xff]
          %v650 = vld [vmem:[%s353 + $0x248] sm:$0xff]
          %v651 = vld [vmem:[%s353 + $0x250] sm:$0xff]
          %v652 = vld [vmem:[%s353 + $0x258] sm:$0xff]
          %v653 = vld [vmem:[%s353 + $0x260] sm:$0xff]
          %v654 = vld [vmem:[%s353 + $0x268] sm:$0xff]
          %v655 = vld [vmem:[%s353 + $0x270] sm:$0xff]
          %v656 = vld [vmem:[%s353 + $0x278] sm:$0xff]
          %v657 = vld [vmem:[%s353 + $0x280] sm:$0xff]
          %v658 = vld [vmem:[%s353 + $0x288] sm:$0xff]
          %v659 = vld [vmem:[%s353 + $0x290] sm:$0xff]
          %v660 = vld [vmem:[%s353 + $0x298] sm:$0xff]
          %v661 = vld [vmem:[%s353 + $0x2a0] sm:$0xff]
          %v662 = vld [vmem:[%s353 + $0x2a8] sm:$0xff]
          %v663 = vld [vmem:[%s353 + $0x2b0] sm:$0xff]
          %v664 = vld [vmem:[%s353 + $0x2b8] sm:$0xff]
          %v665 = vld [vmem:[%s353 + $0x2c0] sm:$0xff]
          %v666 = vld [vmem:[%s353 + $0x2c8] sm:$0xff]
          %v667 = vld [vmem:[%s353 + $0x2d0] sm:$0xff]
          %v668 = vld [vmem:[%s353 + $0x2d8] sm:$0xff]
          %v669 = vld [vmem:[%s353 + $0x2e0] sm:$0xff]
          %v670 = vld [vmem:[%s353 + $0x2e8] sm:$0xff]
          %v671 = vld [vmem:[%s353 + $0x2f0] sm:$0xff]
          %v672 = vld [vmem:[%s353 + $0x2f8] sm:$0xff]
          %v673 = vld [vmem:[%s353 + $0x300] sm:$0xff]
          %v674 = vld [vmem:[%s353 + $0x308] sm:$0xff]
          %v675 = vld [vmem:[%s353 + $0x310] sm:$0xff]
          %v676 = vld [vmem:[%s353 + $0x318] sm:$0xff]
          %v677 = vld [vmem:[%s353 + $0x320] sm:$0xff]
          %v678 = vld [vmem:[%s353 + $0x328] sm:$0xff]
          %v679 = vld [vmem:[%s353 + $0x330] sm:$0xff]
          %v680 = vld [vmem:[%s353 + $0x338] sm:$0xff]
          %v681 = vld [vmem:[%s353 + $0x340] sm:$0xff]
          %v682 = vld [vmem:[%s353 + $0x348] sm:$0xff]
          %v683 = vld [vmem:[%s353 + $0x350] sm:$0xff]
          %v684 = vld [vmem:[%s353 + $0x358] sm:$0xff]
          %v685 = vld [vmem:[%s353 + $0x360] sm:$0xff]
          %v686 = vld [vmem:[%s353 + $0x368] sm:$0xff]
          %v687 = vld [vmem:[%s353 + $0x370] sm:$0xff]
          %v688 = vld [vmem:[%s353 + $0x378] sm:$0xff]
          %v689 = vld [vmem:[%s353 + $0x380] sm:$0xff]
          %v690 = vld [vmem:[%s353 + $0x388] sm:$0xff]
          %v691 = vld [vmem:[%s353 + $0x390] sm:$0xff]
          %v692 = vld [vmem:[%s353 + $0x398] sm:$0xff]
          %v693 = vld [vmem:[%s353 + $0x3a0] sm:$0xff]
          %v694 = vld [vmem:[%s353 + $0x3a8] sm:$0xff]
          %v695 = vld [vmem:[%s353 + $0x3b0] sm:$0xff]
          %v696 = vld [vmem:[%s353 + $0x3b8] sm:$0xff]
          %v697 = vld [vmem:[%s353 + $0x3c0] sm:$0xff]
          %v698 = vld [vmem:[%s353 + $0x3c8] sm:$0xff]
          %v699 = vld [vmem:[%s353 + $0x3d0] sm:$0xff]
          %v700 = vld [vmem:[%s353 + $0x3d8] sm:$0xff]
          %v701 = vld [vmem:[%s353 + $0x3e0] sm:$0xff]
          %v702 = vld [vmem:[%s353 + $0x3e8] sm:$0xff]
          %v703 = vld [vmem:[%s353 + $0x3f0] sm:$0xff]
          %v704 = vld [vmem:[%s353 + $0x3f8] sm:$0xff]
          %v705 = vld [vmem:[%s353 + $0x400] sm:$0xff]
          %v706 = vld [vmem:[%s353 + $0x408] sm:$0xff]
          %v707 = vld [vmem:[%s353 + $0x410] sm:$0xff]
          %v708 = vld [vmem:[%s353 + $0x418] sm:$0xff]
          %v709 = vld [vmem:[%s353 + $0x420] sm:$0xff]
          %v710 = vld [vmem:[%s353 + $0x428] sm:$0xff]
          %v711 = vld [vmem:[%s353 + $0x430] sm:$0xff]
          %v712 = vld [vmem:[%s353 + $0x438] sm:$0xff]
          %v713 = vld [vmem:[%s353 + $0x440] sm:$0xff]
          %v714 = vld [vmem:[%s353 + $0x448] sm:$0xff]
          %v715 = vld [vmem:[%s353 + $0x450] sm:$0xff]
          %v716 = vld [vmem:[%s353 + $0x458] sm:$0xff]
          %v717 = vld [vmem:[%s353 + $0x460] sm:$0xff]
          %v718 = vld [vmem:[%s353 + $0x468] sm:$0xff]
          %v719 = vld [vmem:[%s353 + $0x470] sm:$0xff]
          %v720 = vld [vmem:[%s353 + $0x478] sm:$0xff]
          %v721 = vadd.f32 %v433, %v577
          %v722 = vadd.f32 %v434, %v578
          %v723 = vadd.f32 %v435, %v579
          %v724 = vadd.f32 %v436, %v580
          %v725 = vadd.f32 %v437, %v581
          %v726 = vadd.f32 %v438, %v582
          %v727 = vadd.f32 %v439, %v583
          %v728 = vadd.f32 %v440, %v584
          %v729 = vadd.f32 %v441, %v585
          %v730 = vadd.f32 %v442, %v586
          %v731 = vadd.f32 %v443, %v587
          %v732 = vadd.f32 %v444, %v588
          %v733 = vadd.f32 %v445, %v589
          %v734 = vadd.f32 %v446, %v590
          %v735 = vadd.f32 %v447, %v591
          %v736 = vadd.f32 %v448, %v592
          %v737 = vadd.f32 %v449, %v593
          %v738 = vadd.f32 %v450, %v594
          %v739 = vadd.f32 %v451, %v595
          %v740 = vadd.f32 %v452, %v596
          %v741 = vadd.f32 %v453, %v597
          %v742 = vadd.f32 %v454, %v598
          %v743 = vadd.f32 %v455, %v599
          %v744 = vadd.f32 %v456, %v600
          %v745 = vadd.f32 %v457, %v601
          %v746 = vadd.f32 %v458, %v602
          %v747 = vadd.f32 %v459, %v603
          %v748 = vadd.f32 %v460, %v604
          %v749 = vadd.f32 %v461, %v605
          %v750 = vadd.f32 %v462, %v606
          %v751 = vadd.f32 %v463, %v607
          %v752 = vadd.f32 %v464, %v608
          %v753 = vadd.f32 %v465, %v609
          %v754 = vadd.f32 %v466, %v610
          %v755 = vadd.f32 %v467, %v611
          %v756 = vadd.f32 %v468, %v612
          %v757 = vadd.f32 %v469, %v613
          %v758 = vadd.f32 %v470, %v614
          %v759 = vadd.f32 %v471, %v615
          %v760 = vadd.f32 %v472, %v616
          %v761 = vadd.f32 %v473, %v617
          %v762 = vadd.f32 %v474, %v618
          %v763 = vadd.f32 %v475, %v619
          %v764 = vadd.f32 %v476, %v620
          %v765 = vadd.f32 %v477, %v621
          %v766 = vadd.f32 %v478, %v622
          %v767 = vadd.f32 %v479, %v623
          %v768 = vadd.f32 %v480, %v624
          %v769 = vadd.f32 %v481, %v625
          %v770 = vadd.f32 %v482, %v626
          %v771 = vadd.f32 %v483, %v627
          %v772 = vadd.f32 %v484, %v628
          %v773 = vadd.f32 %v485, %v629
          %v774 = vadd.f32 %v486, %v630
          %v775 = vadd.f32 %v487, %v631
          %v776 = vadd.f32 %v488, %v632
          %v777 = vadd.f32 %v489, %v633
          %v778 = vadd.f32 %v490, %v634
          %v779 = vadd.f32 %v491, %v635
          %v780 = vadd.f32 %v492, %v636
          %v781 = vadd.f32 %v493, %v637
          %v782 = vadd.f32 %v494, %v638
          %v783 = vadd.f32 %v495, %v639
          %v784 = vadd.f32 %v496, %v640
          %v785 = vadd.f32 %v497, %v641
          %v786 = vadd.f32 %v498, %v642
          %v787 = vadd.f32 %v499, %v643
          %v788 = vadd.f32 %v500, %v644
          %v789 = vadd.f32 %v501, %v645
          %v790 = vadd.f32 %v502, %v646
          %v791 = vadd.f32 %v503, %v647
          %v792 = vadd.f32 %v504, %v648
          %v793 = vadd.f32 %v505, %v649
          %v794 = vadd.f32 %v506, %v650
          %v795 = vadd.f32 %v507, %v651
          %v796 = vadd.f32 %v508, %v652
          %v797 = vadd.f32 %v509, %v653
          %v798 = vadd.f32 %v510, %v654
          %v799 = vadd.f32 %v511, %v655
          %v800 = vadd.f32 %v512, %v656
          %v801 = vadd.f32 %v513, %v657
          %v802 = vadd.f32 %v514, %v658
          %v803 = vadd.f32 %v515, %v659
          %v804 = vadd.f32 %v516, %v660
          %v805 = vadd.f32 %v517, %v661
          %v806 = vadd.f32 %v518, %v662
          %v807 = vadd.f32 %v519, %v663
          %v808 = vadd.f32 %v520, %v664
          %v809 = vadd.f32 %v521, %v665
          %v810 = vadd.f32 %v522, %v666
          %v811 = vadd.f32 %v523, %v667
          %v812 = vadd.f32 %v524, %v668
          %v813 = vadd.f32 %v525, %v669
          %v814 = vadd.f32 %v526, %v670
          %v815 = vadd.f32 %v527, %v671
          %v816 = vadd.f32 %v528, %v672
          %v817 = vadd.f32 %v529, %v673
          %v818 = vadd.f32 %v530, %v674
          %v819 = vadd.f32 %v531, %v675
          %v820 = vadd.f32 %v532, %v676
          %v821 = vadd.f32 %v533, %v677
          %v822 = vadd.f32 %v534, %v678
          %v823 = vadd.f32 %v535, %v679
          %v824 = vadd.f32 %v536, %v680
          %v825 = vadd.f32 %v537, %v681
          %v826 = vadd.f32 %v538, %v682
          %v827 = vadd.f32 %v539, %v683
          %v828 = vadd.f32 %v540, %v684
          %v829 = vadd.f32 %v541, %v685
          %v830 = vadd.f32 %v542, %v686
          %v831 = vadd.f32 %v543, %v687
          %v832 = vadd.f32 %v544, %v688
          %v833 = vadd.f32 %v545, %v689
          %v834 = vadd.f32 %v546, %v690
          %v835 = vadd.f32 %v547, %v691
          %v836 = vadd.f32 %v548, %v692
          %v837 = vadd.f32 %v549, %v693
          %v838 = vadd.f32 %v550, %v694
          %v839 = vadd.f32 %v551, %v695
          %v840 = vadd.f32 %v552, %v696
          %v841 = vadd.f32 %v553, %v697
          %v842 = vadd.f32 %v554, %v698
          %v843 = vadd.f32 %v555, %v699
          %v844 = vadd.f32 %v556, %v700
          %v845 = vadd.f32 %v557, %v701
          %v846 = vadd.f32 %v558, %v702
          %v847 = vadd.f32 %v559, %v703
          %v848 = vadd.f32 %v560, %v704
          %v849 = vadd.f32 %v561, %v705
          %v850 = vadd.f32 %v562, %v706
          %v851 = vadd.f32 %v563, %v707
          %v852 = vadd.f32 %v564, %v708
          %v853 = vadd.f32 %v565, %v709
          %v854 = vadd.f32 %v566, %v710
          %v855 = vadd.f32 %v567, %v711
          %v856 = vadd.f32 %v568, %v712
          %v857 = vadd.f32 %v569, %v713
          %v858 = vadd.f32 %v570, %v714
          %v859 = vadd.f32 %v571, %v715
          %v860 = vadd.f32 %v572, %v716
          %v861 = vadd.f32 %v573, %v717
          %v862 = vadd.f32 %v574, %v718
          %v863 = vadd.f32 %v575, %v719
          %v864 = vadd.f32 %v576, %v720
          %v865 = vadd.f32 %v721, %v722
          %v866 = vadd.f32 %v865, %v723
          %v867 = vadd.f32 %v866, %v724
          %v868 = vadd.f32 %v867, %v725
          %v869 = vadd.f32 %v868, %v726
          %870 = vadd.xlane.f32.xlu0 %v869
          %v871 = vpop.xlane.xlu0 %870
          %v872 = vadd.f32 %v727, %v728
          %v873 = vadd.f32 %v872, %v729
          %v874 = vadd.f32 %v873, %v730
          %v875 = vadd.f32 %v874, %v731
          %v876 = vadd.f32 %v875, %v732
          %877 = vadd.xlane.f32.xlu0 %v876
          %v878 = vpop.xlane.xlu0 %877
          %v879 = vadd.f32 %v733, %v734
          %v880 = vadd.f32 %v879, %v735
          %v881 = vadd.f32 %v880, %v736
          %v882 = vadd.f32 %v881, %v737
          %v883 = vadd.f32 %v882, %v738
          %884 = vadd.xlane.f32.xlu0 %v883
          %v885 = vpop.xlane.xlu0 %884
          %v886 = vadd.f32 %v739, %v740
          %v887 = vadd.f32 %v886, %v741
          %v888 = vadd.f32 %v887, %v742
          %v889 = vadd.f32 %v888, %v743
          %v890 = vadd.f32 %v889, %v744
          %891 = vadd.xlane.f32.xlu0 %v890
          %v892 = vpop.xlane.xlu0 %891
          %v893 = vadd.f32 %v745, %v746
          %v894 = vadd.f32 %v893, %v747
          %v895 = vadd.f32 %v894, %v748
          %v896 = vadd.f32 %v895, %v749
          %v897 = vadd.f32 %v896, %v750
          %898 = vadd.xlane.f32.xlu0 %v897
          %v899 = vpop.xlane.xlu0 %898
          %v900 = vadd.f32 %v751, %v752
          %v901 = vadd.f32 %v900, %v753
          %v902 = vadd.f32 %v901, %v754
          %v903 = vadd.f32 %v902, %v755
          %v904 = vadd.f32 %v903, %v756
          %905 = vadd.xlane.f32.xlu0 %v904
          %v906 = vpop.xlane.xlu0 %905
          %v907 = vadd.f32 %v757, %v758
          %v908 = vadd.f32 %v907, %v759
          %v909 = vadd.f32 %v908, %v760
          %v910 = vadd.f32 %v909, %v761
          %v911 = vadd.f32 %v910, %v762
          %912 = vadd.xlane.f32.xlu0 %v911
          %v913 = vpop.xlane.xlu0 %912
          %v914 = vadd.f32 %v763, %v764
          %v915 = vadd.f32 %v914, %v765
          %v916 = vadd.f32 %v915, %v766
          %v917 = vadd.f32 %v916, %v767
          %v918 = vadd.f32 %v917, %v768
          %919 = vadd.xlane.f32.xlu0 %v918
          %v920 = vpop.xlane.xlu0 %919
          %v921 = vadd.f32 %v769, %v770
          %v922 = vadd.f32 %v921, %v771
          %v923 = vadd.f32 %v922, %v772
          %v924 = vadd.f32 %v923, %v773
          %v925 = vadd.f32 %v924, %v774
          %926 = vadd.xlane.f32.xlu0 %v925
          %v927 = vpop.xlane.xlu0 %926
          %v928 = vadd.f32 %v775, %v776
          %v929 = vadd.f32 %v928, %v777
          %v930 = vadd.f32 %v929, %v778
          %v931 = vadd.f32 %v930, %v779
          %v932 = vadd.f32 %v931, %v780
          %933 = vadd.xlane.f32.xlu0 %v932
          %v934 = vpop.xlane.xlu0 %933
          %v935 = vadd.f32 %v781, %v782
          %v936 = vadd.f32 %v935, %v783
          %v937 = vadd.f32 %v936, %v784
          %v938 = vadd.f32 %v937, %v785
          %v939 = vadd.f32 %v938, %v786
          %940 = vadd.xlane.f32.xlu0 %v939
          %v941 = vpop.xlane.xlu0 %940
          %v942 = vadd.f32 %v787, %v788
          %v943 = vadd.f32 %v942, %v789
          %v944 = vadd.f32 %v943, %v790
          %v945 = vadd.f32 %v944, %v791
          %v946 = vadd.f32 %v945, %v792
          %947 = vadd.xlane.f32.xlu0 %v946
          %v948 = vpop.xlane.xlu0 %947
          %v949 = vadd.f32 %v793, %v794
          %v950 = vadd.f32 %v949, %v795
          %v951 = vadd.f32 %v950, %v796
          %v952 = vadd.f32 %v951, %v797
          %v953 = vadd.f32 %v952, %v798
          %954 = vadd.xlane.f32.xlu0 %v953
          %v955 = vpop.xlane.xlu0 %954
          %v956 = vadd.f32 %v799, %v800
          %v957 = vadd.f32 %v956, %v801
          %v958 = vadd.f32 %v957, %v802
          %v959 = vadd.f32 %v958, %v803
          %v960 = vadd.f32 %v959, %v804
          %961 = vadd.xlane.f32.xlu0 %v960
          %v962 = vpop.xlane.xlu0 %961
          %v963 = vadd.f32 %v805, %v806
          %v964 = vadd.f32 %v963, %v807
          %v965 = vadd.f32 %v964, %v808
          %v966 = vadd.f32 %v965, %v809
          %v967 = vadd.f32 %v966, %v810
          %968 = vadd.xlane.f32.xlu0 %v967
          %v969 = vpop.xlane.xlu0 %968
          %v970 = vadd.f32 %v811, %v812
          %v971 = vadd.f32 %v970, %v813
          %v972 = vadd.f32 %v971, %v814
          %v973 = vadd.f32 %v972, %v815
          %v974 = vadd.f32 %v973, %v816
          %975 = vadd.xlane.f32.xlu0 %v974
          %v976 = vpop.xlane.xlu0 %975
          %v977 = vadd.f32 %v817, %v818
          %v978 = vadd.f32 %v977, %v819
          %v979 = vadd.f32 %v978, %v820
          %v980 = vadd.f32 %v979, %v821
          %v981 = vadd.f32 %v980, %v822
          %982 = vadd.xlane.f32.xlu0 %v981
          %v983 = vpop.xlane.xlu0 %982
          %v984 = vadd.f32 %v823, %v824
          %v985 = vadd.f32 %v984, %v825
          %v986 = vadd.f32 %v985, %v826
          %v987 = vadd.f32 %v986, %v827
          %v988 = vadd.f32 %v987, %v828
          %989 = vadd.xlane.f32.xlu0 %v988
          %v990 = vpop.xlane.xlu0 %989
          %v991 = vadd.f32 %v829, %v830
          %v992 = vadd.f32 %v991, %v831
          %v993 = vadd.f32 %v992, %v832
          %v994 = vadd.f32 %v993, %v833
          %v995 = vadd.f32 %v994, %v834
          %996 = vadd.xlane.f32.xlu0 %v995
          %v997 = vpop.xlane.xlu0 %996
          %v998 = vadd.f32 %v835, %v836
          %v999 = vadd.f32 %v998, %v837
          %v1000 = vadd.f32 %v999, %v838
          %v1001 = vadd.f32 %v1000, %v839
          %v1002 = vadd.f32 %v1001, %v840
          %1003 = vadd.xlane.f32.xlu0 %v1002
          %v1004 = vpop.xlane.xlu0 %1003
          %v1005 = vadd.f32 %v841, %v842
          %v1006 = vadd.f32 %v1005, %v843
          %v1007 = vadd.f32 %v1006, %v844
          %v1008 = vadd.f32 %v1007, %v845
          %v1009 = vadd.f32 %v1008, %v846
          %1010 = vadd.xlane.f32.xlu0 %v1009
          %v1011 = vpop.xlane.xlu0 %1010
          %v1012 = vadd.f32 %v847, %v848
          %v1013 = vadd.f32 %v1012, %v849
          %v1014 = vadd.f32 %v1013, %v850
          %v1015 = vadd.f32 %v1014, %v851
          %v1016 = vadd.f32 %v1015, %v852
          %1017 = vadd.xlane.f32.xlu0 %v1016
          %v1018 = vpop.xlane.xlu0 %1017
          %v1019 = vadd.f32 %v853, %v854
          %v1020 = vadd.f32 %v1019, %v855
          %v1021 = vadd.f32 %v1020, %v856
          %v1022 = vadd.f32 %v1021, %v857
          %v1023 = vadd.f32 %v1022, %v858
          %1024 = vadd.xlane.f32.xlu0 %v1023
          %v1025 = vpop.xlane.xlu0 %1024
          %v1026 = vadd.f32 %v859, %v860
          %v1027 = vadd.f32 %v1026, %v861
          %v1028 = vadd.f32 %v1027, %v862
          %v1029 = vadd.f32 %v1028, %v863
          %v1030 = vadd.f32 %v1029, %v864
          %1031 = vadd.xlane.f32.xlu0 %v1030
          %v1032 = vpop.xlane.xlu0 %1031
          %v1033 = vrcp.pop 768.0
          %v1034 = vmul.f32 %v871, %v1033
          %v1035 = vmul.f32 %v878, %v1033
          %v1036 = vmul.f32 %v885, %v1033
          %v1037 = vmul.f32 %v892, %v1033
          %v1038 = vmul.f32 %v899, %v1033
          %v1039 = vmul.f32 %v906, %v1033
          %v1040 = vmul.f32 %v913, %v1033
          %v1041 = vmul.f32 %v920, %v1033
          %v1042 = vmul.f32 %v927, %v1033
          %v1043 = vmul.f32 %v934, %v1033
          %v1044 = vmul.f32 %v941, %v1033
          %v1045 = vmul.f32 %v948, %v1033
          %v1046 = vmul.f32 %v955, %v1033
          %v1047 = vmul.f32 %v962, %v1033
          %v1048 = vmul.f32 %v969, %v1033
          %v1049 = vmul.f32 %v976, %v1033
          %v1050 = vmul.f32 %v983, %v1033
          %v1051 = vmul.f32 %v990, %v1033
          %v1052 = vmul.f32 %v997, %v1033
          %v1053 = vmul.f32 %v1004, %v1033
          %v1054 = vmul.f32 %v1011, %v1033
          %v1055 = vmul.f32 %v1018, %v1033
          %v1056 = vmul.f32 %v1025, %v1033
          %v1057 = vmul.f32 %v1032, %v1033
          %v1058 = vsub.f32 %v721, %v1034
          %v1059 = vsub.f32 %v722, %v1034
          %v1060 = vsub.f32 %v723, %v1034
          %v1061 = vsub.f32 %v724, %v1034
          %v1062 = vsub.f32 %v725, %v1034
          %v1063 = vsub.f32 %v726, %v1034
          %v1064 = vsub.f32 %v727, %v1035
          %v1065 = vsub.f32 %v728, %v1035
          %v1066 = vsub.f32 %v729, %v1035
          %v1067 = vsub.f32 %v730, %v1035
          %v1068 = vsub.f32 %v731, %v1035
          %v1069 = vsub.f32 %v732, %v1035
          %v1070 = vsub.f32 %v733, %v1036
          %v1071 = vsub.f32 %v734, %v1036
          %v1072 = vsub.f32 %v735, %v1036
          %v1073 = vsub.f32 %v736, %v1036
          %v1074 = vsub.f32 %v737, %v1036
          %v1075 = vsub.f32 %v738, %v1036
          %v1076 = vsub.f32 %v739, %v1037
          %v1077 = vsub.f32 %v740, %v1037
          %v1078 = vsub.f32 %v741, %v1037
          %v1079 = vsub.f32 %v742, %v1037
          %v1080 = vsub.f32 %v743, %v1037
          %v1081 = vsub.f32 %v744, %v1037
          %v1082 = vsub.f32 %v745, %v1038
          %v1083 = vsub.f32 %v746, %v1038
          %v1084 = vsub.f32 %v747, %v1038
          %v1085 = vsub.f32 %v748, %v1038
          %v1086 = vsub.f32 %v749, %v1038
          %v1087 = vsub.f32 %v750, %v1038
          %v1088 = vsub.f32 %v751, %v1039
          %v1089 = vsub.f32 %v752, %v1039
          %v1090 = vsub.f32 %v753, %v1039
          %v1091 = vsub.f32 %v754, %v1039
          %v1092 = vsub.f32 %v755, %v1039
          %v1093 = vsub.f32 %v756, %v1039
          %v1094 = vsub.f32 %v757, %v1040
          %v1095 = vsub.f32 %v758, %v1040
          %v1096 = vsub.f32 %v759, %v1040
          %v1097 = vsub.f32 %v760, %v1040
          %v1098 = vsub.f32 %v761, %v1040
          %v1099 = vsub.f32 %v762, %v1040
          %v1100 = vsub.f32 %v763, %v1041
          %v1101 = vsub.f32 %v764, %v1041
          %v1102 = vsub.f32 %v765, %v1041
          %v1103 = vsub.f32 %v766, %v1041
          %v1104 = vsub.f32 %v767, %v1041
          %v1105 = vsub.f32 %v768, %v1041
          %v1106 = vsub.f32 %v769, %v1042
          %v1107 = vsub.f32 %v770, %v1042
          %v1108 = vsub.f32 %v771, %v1042
          %v1109 = vsub.f32 %v772, %v1042
          %v1110 = vsub.f32 %v773, %v1042
          %v1111 = vsub.f32 %v774, %v1042
          %v1112 = vsub.f32 %v775, %v1043
          %v1113 = vsub.f32 %v776, %v1043
          %v1114 = vsub.f32 %v777, %v1043
          %v1115 = vsub.f32 %v778, %v1043
          %v1116 = vsub.f32 %v779, %v1043
          %v1117 = vsub.f32 %v780, %v1043
          %v1118 = vsub.f32 %v781, %v1044
          %v1119 = vsub.f32 %v782, %v1044
          %v1120 = vsub.f32 %v783, %v1044
          %v1121 = vsub.f32 %v784, %v1044
          %v1122 = vsub.f32 %v785, %v1044
          %v1123 = vsub.f32 %v786, %v1044
          %v1124 = vsub.f32 %v787, %v1045
          %v1125 = vsub.f32 %v788, %v1045
          %v1126 = vsub.f32 %v789, %v1045
          %v1127 = vsub.f32 %v790, %v1045
          %v1128 = vsub.f32 %v791, %v1045
          %v1129 = vsub.f32 %v792, %v1045
          %v1130 = vsub.f32 %v793, %v1046
          %v1131 = vsub.f32 %v794, %v1046
          %v1132 = vsub.f32 %v795, %v1046
          %v1133 = vsub.f32 %v796, %v1046
          %v1134 = vsub.f32 %v797, %v1046
          %v1135 = vsub.f32 %v798, %v1046
          %v1136 = vsub.f32 %v799, %v1047
          %v1137 = vsub.f32 %v800, %v1047
          %v1138 = vsub.f32 %v801, %v1047
          %v1139 = vsub.f32 %v802, %v1047
          %v1140 = vsub.f32 %v803, %v1047
          %v1141 = vsub.f32 %v804, %v1047
          %v1142 = vsub.f32 %v805, %v1048
          %v1143 = vsub.f32 %v806, %v1048
          %v1144 = vsub.f32 %v807, %v1048
          %v1145 = vsub.f32 %v808, %v1048
          %v1146 = vsub.f32 %v809, %v1048
          %v1147 = vsub.f32 %v810, %v1048
          %v1148 = vsub.f32 %v811, %v1049
          %v1149 = vsub.f32 %v812, %v1049
          %v1150 = vsub.f32 %v813, %v1049
          %v1151 = vsub.f32 %v814, %v1049
          %v1152 = vsub.f32 %v815, %v1049
          %v1153 = vsub.f32 %v816, %v1049
          %v1154 = vsub.f32 %v817, %v1050
          %v1155 = vsub.f32 %v818, %v1050
          %v1156 = vsub.f32 %v819, %v1050
          %v1157 = vsub.f32 %v820, %v1050
          %v1158 = vsub.f32 %v821, %v1050
          %v1159 = vsub.f32 %v822, %v1050
          %v1160 = vsub.f32 %v823, %v1051
          %v1161 = vsub.f32 %v824, %v1051
          %v1162 = vsub.f32 %v825, %v1051
          %v1163 = vsub.f32 %v826, %v1051
          %v1164 = vsub.f32 %v827, %v1051
          %v1165 = vsub.f32 %v828, %v1051
          %v1166 = vsub.f32 %v829, %v1052
          %v1167 = vsub.f32 %v830, %v1052
          %v1168 = vsub.f32 %v831, %v1052
          %v1169 = vsub.f32 %v832, %v1052
          %v1170 = vsub.f32 %v833, %v1052
          %v1171 = vsub.f32 %v834, %v1052
          %v1172 = vsub.f32 %v835, %v1053
          %v1173 = vsub.f32 %v836, %v1053
          %v1174 = vsub.f32 %v837, %v1053
          %v1175 = vsub.f32 %v838, %v1053
          %v1176 = vsub.f32 %v839, %v1053
          %v1177 = vsub.f32 %v840, %v1053
          %v1178 = vsub.f32 %v841, %v1054
          %v1179 = vsub.f32 %v842, %v1054
          %v1180 = vsub.f32 %v843, %v1054
          %v1181 = vsub.f32 %v844, %v1054
          %v1182 = vsub.f32 %v845, %v1054
          %v1183 = vsub.f32 %v846, %v1054
          %v1184 = vsub.f32 %v847, %v1055
          %v1185 = vsub.f32 %v848, %v1055
          %v1186 = vsub.f32 %v849, %v1055
          %v1187 = vsub.f32 %v850, %v1055
          %v1188 = vsub.f32 %v851, %v1055
          %v1189 = vsub.f32 %v852, %v1055
          %v1190 = vsub.f32 %v853, %v1056
          %v1191 = vsub.f32 %v854, %v1056
          %v1192 = vsub.f32 %v855, %v1056
          %v1193 = vsub.f32 %v856, %v1056
          %v1194 = vsub.f32 %v857, %v1056
          %v1195 = vsub.f32 %v858, %v1056
          %v1196 = vsub.f32 %v859, %v1057
          %v1197 = vsub.f32 %v860, %v1057
          %v1198 = vsub.f32 %v861, %v1057
          %v1199 = vsub.f32 %v862, %v1057
          %v1200 = vsub.f32 %v863, %v1057
          %v1201 = vsub.f32 %v864, %v1057
          %v1202 = vmul.f32 %v1058, %v1058
          %v1203 = vmul.f32 %v1059, %v1059
          %v1204 = vmul.f32 %v1060, %v1060
          %v1205 = vmul.f32 %v1061, %v1061
          %v1206 = vmul.f32 %v1062, %v1062
          %v1207 = vmul.f32 %v1063, %v1063
          %v1208 = vmul.f32 %v1064, %v1064
          %v1209 = vmul.f32 %v1065, %v1065
          %v1210 = vmul.f32 %v1066, %v1066
          %v1211 = vmul.f32 %v1067, %v1067
          %v1212 = vmul.f32 %v1068, %v1068
          %v1213 = vmul.f32 %v1069, %v1069
          %v1214 = vmul.f32 %v1070, %v1070
          %v1215 = vmul.f32 %v1071, %v1071
          %v1216 = vmul.f32 %v1072, %v1072
          %v1217 = vmul.f32 %v1073, %v1073
          %v1218 = vmul.f32 %v1074, %v1074
          %v1219 = vmul.f32 %v1075, %v1075
          %v1220 = vmul.f32 %v1076, %v1076
          %v1221 = vmul.f32 %v1077, %v1077
          %v1222 = vmul.f32 %v1078, %v1078
          %v1223 = vmul.f32 %v1079, %v1079
          %v1224 = vmul.f32 %v1080, %v1080
          %v1225 = vmul.f32 %v1081, %v1081
          %v1226 = vmul.f32 %v1082, %v1082
          %v1227 = vmul.f32 %v1083, %v1083
          %v1228 = vmul.f32 %v1084, %v1084
          %v1229 = vmul.f32 %v1085, %v1085
          %v1230 = vmul.f32 %v1086, %v1086
          %v1231 = vmul.f32 %v1087, %v1087
          %v1232 = vmul.f32 %v1088, %v1088
          %v1233 = vmul.f32 %v1089, %v1089
          %v1234 = vmul.f32 %v1090, %v1090
          %v1235 = vmul.f32 %v1091, %v1091
          %v1236 = vmul.f32 %v1092, %v1092
          %v1237 = vmul.f32 %v1093, %v1093
          %v1238 = vmul.f32 %v1094, %v1094
          %v1239 = vmul.f32 %v1095, %v1095
          %v1240 = vmul.f32 %v1096, %v1096
          %v1241 = vmul.f32 %v1097, %v1097
          %v1242 = vmul.f32 %v1098, %v1098
          %v1243 = vmul.f32 %v1099, %v1099
          %v1244 = vmul.f32 %v1100, %v1100
          %v1245 = vmul.f32 %v1101, %v1101
          %v1246 = vmul.f32 %v1102, %v1102
          %v1247 = vmul.f32 %v1103, %v1103
          %v1248 = vmul.f32 %v1104, %v1104
          %v1249 = vmul.f32 %v1105, %v1105
          %v1250 = vmul.f32 %v1106, %v1106
          %v1251 = vmul.f32 %v1107, %v1107
          %v1252 = vmul.f32 %v1108, %v1108
          %v1253 = vmul.f32 %v1109, %v1109
          %v1254 = vmul.f32 %v1110, %v1110
          %v1255 = vmul.f32 %v1111, %v1111
          %v1256 = vmul.f32 %v1112, %v1112
          %v1257 = vmul.f32 %v1113, %v1113
          %v1258 = vmul.f32 %v1114, %v1114
          %v1259 = vmul.f32 %v1115, %v1115
          %v1260 = vmul.f32 %v1116, %v1116
          %v1261 = vmul.f32 %v1117, %v1117
          %v1262 = vmul.f32 %v1118, %v1118
          %v1263 = vmul.f32 %v1119, %v1119
          %v1264 = vmul.f32 %v1120, %v1120
          %v1265 = vmul.f32 %v1121, %v1121
          %v1266 = vmul.f32 %v1122, %v1122
          %v1267 = vmul.f32 %v1123, %v1123
          %v1268 = vmul.f32 %v1124, %v1124
          %v1269 = vmul.f32 %v1125, %v1125
          %v1270 = vmul.f32 %v1126, %v1126
          %v1271 = vmul.f32 %v1127, %v1127
          %v1272 = vmul.f32 %v1128, %v1128
          %v1273 = vmul.f32 %v1129, %v1129
          %v1274 = vmul.f32 %v1130, %v1130
          %v1275 = vmul.f32 %v1131, %v1131
          %v1276 = vmul.f32 %v1132, %v1132
          %v1277 = vmul.f32 %v1133, %v1133
          %v1278 = vmul.f32 %v1134, %v1134
          %v1279 = vmul.f32 %v1135, %v1135
          %v1280 = vmul.f32 %v1136, %v1136
          %v1281 = vmul.f32 %v1137, %v1137
          %v1282 = vmul.f32 %v1138, %v1138
          %v1283 = vmul.f32 %v1139, %v1139
          %v1284 = vmul.f32 %v1140, %v1140
          %v1285 = vmul.f32 %v1141, %v1141
          %v1286 = vmul.f32 %v1142, %v1142
          %v1287 = vmul.f32 %v1143, %v1143
          %v1288 = vmul.f32 %v1144, %v1144
          %v1289 = vmul.f32 %v1145, %v1145
          %v1290 = vmul.f32 %v1146, %v1146
          %v1291 = vmul.f32 %v1147, %v1147
          %v1292 = vmul.f32 %v1148, %v1148
          %v1293 = vmul.f32 %v1149, %v1149
          %v1294 = vmul.f32 %v1150, %v1150
          %v1295 = vmul.f32 %v1151, %v1151
          %v1296 = vmul.f32 %v1152, %v1152
          %v1297 = vmul.f32 %v1153, %v1153
          %v1298 = vmul.f32 %v1154, %v1154
          %v1299 = vmul.f32 %v1155, %v1155
          %v1300 = vmul.f32 %v1156, %v1156
          %v1301 = vmul.f32 %v1157, %v1157
          %v1302 = vmul.f32 %v1158, %v1158
          %v1303 = vmul.f32 %v1159, %v1159
          %v1304 = vmul.f32 %v1160, %v1160
          %v1305 = vmul.f32 %v1161, %v1161
          %v1306 = vmul.f32 %v1162, %v1162
          %v1307 = vmul.f32 %v1163, %v1163
          %v1308 = vmul.f32 %v1164, %v1164
          %v1309 = vmul.f32 %v1165, %v1165
          %v1310 = vmul.f32 %v1166, %v1166
          %v1311 = vmul.f32 %v1167, %v1167
          %v1312 = vmul.f32 %v1168, %v1168
          %v1313 = vmul.f32 %v1169, %v1169
          %v1314 = vmul.f32 %v1170, %v1170
          %v1315 = vmul.f32 %v1171, %v1171
          %v1316 = vmul.f32 %v1172, %v1172
          %v1317 = vmul.f32 %v1173, %v1173
          %v1318 = vmul.f32 %v1174, %v1174
          %v1319 = vmul.f32 %v1175, %v1175
          %v1320 = vmul.f32 %v1176, %v1176
          %v1321 = vmul.f32 %v1177, %v1177
          %v1322 = vmul.f32 %v1178, %v1178
          %v1323 = vmul.f32 %v1179, %v1179
          %v1324 = vmul.f32 %v1180, %v1180
          %v1325 = vmul.f32 %v1181, %v1181
          %v1326 = vmul.f32 %v1182, %v1182
          %v1327 = vmul.f32 %v1183, %v1183
          %v1328 = vmul.f32 %v1184, %v1184
          %v1329 = vmul.f32 %v1185, %v1185
          %v1330 = vmul.f32 %v1186, %v1186
          %v1331 = vmul.f32 %v1187, %v1187
          %v1332 = vmul.f32 %v1188, %v1188
          %v1333 = vmul.f32 %v1189, %v1189
          %v1334 = vmul.f32 %v1190, %v1190
          %v1335 = vmul.f32 %v1191, %v1191
          %v1336 = vmul.f32 %v1192, %v1192
          %v1337 = vmul.f32 %v1193, %v1193
          %v1338 = vmul.f32 %v1194, %v1194
          %v1339 = vmul.f32 %v1195, %v1195
          %v1340 = vmul.f32 %v1196, %v1196
          %v1341 = vmul.f32 %v1197, %v1197
          %v1342 = vmul.f32 %v1198, %v1198
          %v1343 = vmul.f32 %v1199, %v1199
          %v1344 = vmul.f32 %v1200, %v1200
          %v1345 = vmul.f32 %v1201, %v1201
          %v1346 = vadd.f32 %v1202, %v1203
          %v1347 = vadd.f32 %v1346, %v1204
          %v1348 = vadd.f32 %v1347, %v1205
          %v1349 = vadd.f32 %v1348, %v1206
          %v1350 = vadd.f32 %v1349, %v1207
          %1351 = vadd.xlane.f32.xlu0 %v1350
          %v1352 = vpop.xlane.xlu0 %1351
          %v1353 = vadd.f32 %v1208, %v1209
          %v1354 = vadd.f32 %v1353, %v1210
          %v1355 = vadd.f32 %v1354, %v1211
          %v1356 = vadd.f32 %v1355, %v1212
          %v1357 = vadd.f32 %v1356, %v1213
          %1358 = vadd.xlane.f32.xlu0 %v1357
          %v1359 = vpop.xlane.xlu0 %1358
          %v1360 = vadd.f32 %v1214, %v1215
          %v1361 = vadd.f32 %v1360, %v1216
          %v1362 = vadd.f32 %v1361, %v1217
          %v1363 = vadd.f32 %v1362, %v1218
          %v1364 = vadd.f32 %v1363, %v1219
          %1365 = vadd.xlane.f32.xlu0 %v1364
          %v1366 = vpop.xlane.xlu0 %1365
          %v1367 = vadd.f32 %v1220, %v1221
          %v1368 = vadd.f32 %v1367, %v1222
          %v1369 = vadd.f32 %v1368, %v1223
          %v1370 = vadd.f32 %v1369, %v1224
          %v1371 = vadd.f32 %v1370, %v1225
          %1372 = vadd.xlane.f32.xlu0 %v1371
          %v1373 = vpop.xlane.xlu0 %1372
          %v1374 = vadd.f32 %v1226, %v1227
          %v1375 = vadd.f32 %v1374, %v1228
          %v1376 = vadd.f32 %v1375, %v1229
          %v1377 = vadd.f32 %v1376, %v1230
          %v1378 = vadd.f32 %v1377, %v1231
          %1379 = vadd.xlane.f32.xlu0 %v1378
          %v1380 = vpop.xlane.xlu0 %1379
          %v1381 = vadd.f32 %v1232, %v1233
          %v1382 = vadd.f32 %v1381, %v1234
          %v1383 = vadd.f32 %v1382, %v1235
          %v1384 = vadd.f32 %v1383, %v1236
          %v1385 = vadd.f32 %v1384, %v1237
          %1386 = vadd.xlane.f32.xlu0 %v1385
          %v1387 = vpop.xlane.xlu0 %1386
          %v1388 = vadd.f32 %v1238, %v1239
          %v1389 = vadd.f32 %v1388, %v1240
          %v1390 = vadd.f32 %v1389, %v1241
          %v1391 = vadd.f32 %v1390, %v1242
          %v1392 = vadd.f32 %v1391, %v1243
          %1393 = vadd.xlane.f32.xlu0 %v1392
          %v1394 = vpop.xlane.xlu0 %1393
          %v1395 = vadd.f32 %v1244, %v1245
          %v1396 = vadd.f32 %v1395, %v1246
          %v1397 = vadd.f32 %v1396, %v1247
          %v1398 = vadd.f32 %v1397, %v1248
          %v1399 = vadd.f32 %v1398, %v1249
          %1400 = vadd.xlane.f32.xlu0 %v1399
          %v1401 = vpop.xlane.xlu0 %1400
          %v1402 = vadd.f32 %v1250, %v1251
          %v1403 = vadd.f32 %v1402, %v1252
          %v1404 = vadd.f32 %v1403, %v1253
          %v1405 = vadd.f32 %v1404, %v1254
          %v1406 = vadd.f32 %v1405, %v1255
          %1407 = vadd.xlane.f32.xlu0 %v1406
          %v1408 = vpop.xlane.xlu0 %1407
          %v1409 = vadd.f32 %v1256, %v1257
          %v1410 = vadd.f32 %v1409, %v1258
          %v1411 = vadd.f32 %v1410, %v1259
          %v1412 = vadd.f32 %v1411, %v1260
          %v1413 = vadd.f32 %v1412, %v1261
          %1414 = vadd.xlane.f32.xlu0 %v1413
          %v1415 = vpop.xlane.xlu0 %1414
          %v1416 = vadd.f32 %v1262, %v1263
          %v1417 = vadd.f32 %v1416, %v1264
          %v1418 = vadd.f32 %v1417, %v1265
          %v1419 = vadd.f32 %v1418, %v1266
          %v1420 = vadd.f32 %v1419, %v1267
          %1421 = vadd.xlane.f32.xlu0 %v1420
          %v1422 = vpop.xlane.xlu0 %1421
          %v1423 = vadd.f32 %v1268, %v1269
          %v1424 = vadd.f32 %v1423, %v1270
          %v1425 = vadd.f32 %v1424, %v1271
          %v1426 = vadd.f32 %v1425, %v1272
          %v1427 = vadd.f32 %v1426, %v1273
          %1428 = vadd.xlane.f32.xlu0 %v1427
          %v1429 = vpop.xlane.xlu0 %1428
          %v1430 = vadd.f32 %v1274, %v1275
          %v1431 = vadd.f32 %v1430, %v1276
          %v1432 = vadd.f32 %v1431, %v1277
          %v1433 = vadd.f32 %v1432, %v1278
          %v1434 = vadd.f32 %v1433, %v1279
          %1435 = vadd.xlane.f32.xlu0 %v1434
          %v1436 = vpop.xlane.xlu0 %1435
          %v1437 = vadd.f32 %v1280, %v1281
          %v1438 = vadd.f32 %v1437, %v1282
          %v1439 = vadd.f32 %v1438, %v1283
          %v1440 = vadd.f32 %v1439, %v1284
          %v1441 = vadd.f32 %v1440, %v1285
          %1442 = vadd.xlane.f32.xlu0 %v1441
          %v1443 = vpop.xlane.xlu0 %1442
          %v1444 = vadd.f32 %v1286, %v1287
          %v1445 = vadd.f32 %v1444, %v1288
          %v1446 = vadd.f32 %v1445, %v1289
          %v1447 = vadd.f32 %v1446, %v1290
          %v1448 = vadd.f32 %v1447, %v1291
          %1449 = vadd.xlane.f32.xlu0 %v1448
          %v1450 = vpop.xlane.xlu0 %1449
          %v1451 = vadd.f32 %v1292, %v1293
          %v1452 = vadd.f32 %v1451, %v1294
          %v1453 = vadd.f32 %v1452, %v1295
          %v1454 = vadd.f32 %v1453, %v1296
          %v1455 = vadd.f32 %v1454, %v1297
          %1456 = vadd.xlane.f32.xlu0 %v1455
          %v1457 = vpop.xlane.xlu0 %1456
          %v1458 = vadd.f32 %v1298, %v1299
          %v1459 = vadd.f32 %v1458, %v1300
          %v1460 = vadd.f32 %v1459, %v1301
          %v1461 = vadd.f32 %v1460, %v1302
          %v1462 = vadd.f32 %v1461, %v1303
          %1463 = vadd.xlane.f32.xlu0 %v1462
          %v1464 = vpop.xlane.xlu0 %1463
          %v1465 = vadd.f32 %v1304, %v1305
          %v1466 = vadd.f32 %v1465, %v1306
          %v1467 = vadd.f32 %v1466, %v1307
          %v1468 = vadd.f32 %v1467, %v1308
          %v1469 = vadd.f32 %v1468, %v1309
          %1470 = vadd.xlane.f32.xlu0 %v1469
          %v1471 = vpop.xlane.xlu0 %1470
          %v1472 = vadd.f32 %v1310, %v1311
          %v1473 = vadd.f32 %v1472, %v1312
          %v1474 = vadd.f32 %v1473, %v1313
          %v1475 = vadd.f32 %v1474, %v1314
          %v1476 = vadd.f32 %v1475, %v1315
          %1477 = vadd.xlane.f32.xlu0 %v1476
          %v1478 = vpop.xlane.xlu0 %1477
          %v1479 = vadd.f32 %v1316, %v1317
          %v1480 = vadd.f32 %v1479, %v1318
          %v1481 = vadd.f32 %v1480, %v1319
          %v1482 = vadd.f32 %v1481, %v1320
          %v1483 = vadd.f32 %v1482, %v1321
          %1484 = vadd.xlane.f32.xlu0 %v1483
          %v1485 = vpop.xlane.xlu0 %1484
          %v1486 = vadd.f32 %v1322, %v1323
          %v1487 = vadd.f32 %v1486, %v1324
          %v1488 = vadd.f32 %v1487, %v1325
          %v1489 = vadd.f32 %v1488, %v1326
          %v1490 = vadd.f32 %v1489, %v1327
          %1491 = vadd.xlane.f32.xlu0 %v1490
          %v1492 = vpop.xlane.xlu0 %1491
          %v1493 = vadd.f32 %v1328, %v1329
          %v1494 = vadd.f32 %v1493, %v1330
          %v1495 = vadd.f32 %v1494, %v1331
          %v1496 = vadd.f32 %v1495, %v1332
          %v1497 = vadd.f32 %v1496, %v1333
          %1498 = vadd.xlane.f32.xlu0 %v1497
          %v1499 = vpop.xlane.xlu0 %1498
          %v1500 = vadd.f32 %v1334, %v1335
          %v1501 = vadd.f32 %v1500, %v1336
          %v1502 = vadd.f32 %v1501, %v1337
          %v1503 = vadd.f32 %v1502, %v1338
          %v1504 = vadd.f32 %v1503, %v1339
          %1505 = vadd.xlane.f32.xlu0 %v1504
          %v1506 = vpop.xlane.xlu0 %1505
          %v1507 = vadd.f32 %v1340, %v1341
          %v1508 = vadd.f32 %v1507, %v1342
          %v1509 = vadd.f32 %v1508, %v1343
          %v1510 = vadd.f32 %v1509, %v1344
          %v1511 = vadd.f32 %v1510, %v1345
          %1512 = vadd.xlane.f32.xlu0 %v1511
          %v1513 = vpop.xlane.xlu0 %1512
          %v1514 = vmul.f32 %v1352, %v1033
          %v1515 = vmul.f32 %v1359, %v1033
          %v1516 = vmul.f32 %v1366, %v1033
          %v1517 = vmul.f32 %v1373, %v1033
          %v1518 = vmul.f32 %v1380, %v1033
          %v1519 = vmul.f32 %v1387, %v1033
          %v1520 = vmul.f32 %v1394, %v1033
          %v1521 = vmul.f32 %v1401, %v1033
          %v1522 = vmul.f32 %v1408, %v1033
          %v1523 = vmul.f32 %v1415, %v1033
          %v1524 = vmul.f32 %v1422, %v1033
          %v1525 = vmul.f32 %v1429, %v1033
          %v1526 = vmul.f32 %v1436, %v1033
          %v1527 = vmul.f32 %v1443, %v1033
          %v1528 = vmul.f32 %v1450, %v1033
          %v1529 = vmul.f32 %v1457, %v1033
          %v1530 = vmul.f32 %v1464, %v1033
          %v1531 = vmul.f32 %v1471, %v1033
          %v1532 = vmul.f32 %v1478, %v1033
          %v1533 = vmul.f32 %v1485, %v1033
          %v1534 = vmul.f32 %v1492, %v1033
          %v1535 = vmul.f32 %v1499, %v1033
          %v1536 = vmul.f32 %v1506, %v1033
          %v1537 = vmul.f32 %v1513, %v1033
          %v1538 = vadd.f32 %v1514, 1e-12
          %v1539 = vadd.f32 %v1515, 1e-12
          %v1540 = vadd.f32 %v1516, 1e-12
          %v1541 = vadd.f32 %v1517, 1e-12
          %v1542 = vadd.f32 %v1518, 1e-12
          %v1543 = vadd.f32 %v1519, 1e-12
          %v1544 = vadd.f32 %v1520, 1e-12
          %v1545 = vadd.f32 %v1521, 1e-12
          %v1546 = vadd.f32 %v1522, 1e-12
          %v1547 = vadd.f32 %v1523, 1e-12
          %v1548 = vadd.f32 %v1524, 1e-12
          %v1549 = vadd.f32 %v1525, 1e-12
          %v1550 = vadd.f32 %v1526, 1e-12
          %v1551 = vadd.f32 %v1527, 1e-12
          %v1552 = vadd.f32 %v1528, 1e-12
          %v1553 = vadd.f32 %v1529, 1e-12
          %v1554 = vadd.f32 %v1530, 1e-12
          %v1555 = vadd.f32 %v1531, 1e-12
          %v1556 = vadd.f32 %v1532, 1e-12
          %v1557 = vadd.f32 %v1533, 1e-12
          %v1558 = vadd.f32 %v1534, 1e-12
          %v1559 = vadd.f32 %v1535, 1e-12
          %v1560 = vadd.f32 %v1536, 1e-12
          %v1561 = vadd.f32 %v1537, 1e-12
          %v1562 = vrsqrt.pop %v1538
          %v1563 = vrsqrt.pop %v1539
          %v1564 = vrsqrt.pop %v1540
          %v1565 = vrsqrt.pop %v1541
          %v1566 = vrsqrt.pop %v1542
          %v1567 = vrsqrt.pop %v1543
          %v1568 = vrsqrt.pop %v1544
          %v1569 = vrsqrt.pop %v1545
          %v1570 = vrsqrt.pop %v1546
          %v1571 = vrsqrt.pop %v1547
          %v1572 = vrsqrt.pop %v1548
          %v1573 = vrsqrt.pop %v1549
          %v1574 = vrsqrt.pop %v1550
          %v1575 = vrsqrt.pop %v1551
          %v1576 = vrsqrt.pop %v1552
          %v1577 = vrsqrt.pop %v1553
          %v1578 = vrsqrt.pop %v1554
          %v1579 = vrsqrt.pop %v1555
          %v1580 = vrsqrt.pop %v1556
          %v1581 = vrsqrt.pop %v1557
          %v1582 = vrsqrt.pop %v1558
          %v1583 = vrsqrt.pop %v1559
          %v1584 = vrsqrt.pop %v1560
          %v1585 = vrsqrt.pop %v1561
          %v1586 = vmul.f32 %v1058, %v1562
          %v1587 = vmul.f32 %v1059, %v1562
          %v1588 = vmul.f32 %v1060, %v1562
          %v1589 = vmul.f32 %v1061, %v1562
          %v1590 = vmul.f32 %v1062, %v1562
          %v1591 = vmul.f32 %v1063, %v1562
          %v1592 = vmul.f32 %v1064, %v1563
          %v1593 = vmul.f32 %v1065, %v1563
          %v1594 = vmul.f32 %v1066, %v1563
          %v1595 = vmul.f32 %v1067, %v1563
          %v1596 = vmul.f32 %v1068, %v1563
          %v1597 = vmul.f32 %v1069, %v1563
          %v1598 = vmul.f32 %v1070, %v1564
          %v1599 = vmul.f32 %v1071, %v1564
          %v1600 = vmul.f32 %v1072, %v1564
          %v1601 = vmul.f32 %v1073, %v1564
          %v1602 = vmul.f32 %v1074, %v1564
          %v1603 = vmul.f32 %v1075, %v1564
          %v1604 = vmul.f32 %v1076, %v1565
          %v1605 = vmul.f32 %v1077, %v1565
          %v1606 = vmul.f32 %v1078, %v1565
          %v1607 = vmul.f32 %v1079, %v1565
          %v1608 = vmul.f32 %v1080, %v1565
          %v1609 = vmul.f32 %v1081, %v1565
          %v1610 = vmul.f32 %v1082, %v1566
          %v1611 = vmul.f32 %v1083, %v1566
          %v1612 = vmul.f32 %v1084, %v1566
          %v1613 = vmul.f32 %v1085, %v1566
          %v1614 = vmul.f32 %v1086, %v1566
          %v1615 = vmul.f32 %v1087, %v1566
          %v1616 = vmul.f32 %v1088, %v1567
          %v1617 = vmul.f32 %v1089, %v1567
          %v1618 = vmul.f32 %v1090, %v1567
          %v1619 = vmul.f32 %v1091, %v1567
          %v1620 = vmul.f32 %v1092, %v1567
          %v1621 = vmul.f32 %v1093, %v1567
          %v1622 = vmul.f32 %v1094, %v1568
          %v1623 = vmul.f32 %v1095, %v1568
          %v1624 = vmul.f32 %v1096, %v1568
          %v1625 = vmul.f32 %v1097, %v1568
          %v1626 = vmul.f32 %v1098, %v1568
          %v1627 = vmul.f32 %v1099, %v1568
          %v1628 = vmul.f32 %v1100, %v1569
          %v1629 = vmul.f32 %v1101, %v1569
          %v1630 = vmul.f32 %v1102, %v1569
          %v1631 = vmul.f32 %v1103, %v1569
          %v1632 = vmul.f32 %v1104, %v1569
          %v1633 = vmul.f32 %v1105, %v1569
          %v1634 = vmul.f32 %v1106, %v1570
          %v1635 = vmul.f32 %v1107, %v1570
          %v1636 = vmul.f32 %v1108, %v1570
          %v1637 = vmul.f32 %v1109, %v1570
          %v1638 = vmul.f32 %v1110, %v1570
          %v1639 = vmul.f32 %v1111, %v1570
          %v1640 = vmul.f32 %v1112, %v1571
          %v1641 = vmul.f32 %v1113, %v1571
          %v1642 = vmul.f32 %v1114, %v1571
          %v1643 = vmul.f32 %v1115, %v1571
          %v1644 = vmul.f32 %v1116, %v1571
          %v1645 = vmul.f32 %v1117, %v1571
          %v1646 = vmul.f32 %v1118, %v1572
          %v1647 = vmul.f32 %v1119, %v1572
          %v1648 = vmul.f32 %v1120, %v1572
          %v1649 = vmul.f32 %v1121, %v1572
          %v1650 = vmul.f32 %v1122, %v1572
          %v1651 = vmul.f32 %v1123, %v1572
          %v1652 = vmul.f32 %v1124, %v1573
          %v1653 = vmul.f32 %v1125, %v1573
          %v1654 = vmul.f32 %v1126, %v1573
          %v1655 = vmul.f32 %v1127, %v1573
          %v1656 = vmul.f32 %v1128, %v1573
          %v1657 = vmul.f32 %v1129, %v1573
          %v1658 = vmul.f32 %v1130, %v1574
          %v1659 = vmul.f32 %v1131, %v1574
          %v1660 = vmul.f32 %v1132, %v1574
          %v1661 = vmul.f32 %v1133, %v1574
          %v1662 = vmul.f32 %v1134, %v1574
          %v1663 = vmul.f32 %v1135, %v1574
          %v1664 = vmul.f32 %v1136, %v1575
          %v1665 = vmul.f32 %v1137, %v1575
          %v1666 = vmul.f32 %v1138, %v1575
          %v1667 = vmul.f32 %v1139, %v1575
          %v1668 = vmul.f32 %v1140, %v1575
          %v1669 = vmul.f32 %v1141, %v1575
          %v1670 = vmul.f32 %v1142, %v1576
          %v1671 = vmul.f32 %v1143, %v1576
          %v1672 = vmul.f32 %v1144, %v1576
          %v1673 = vmul.f32 %v1145, %v1576
          %v1674 = vmul.f32 %v1146, %v1576
          %v1675 = vmul.f32 %v1147, %v1576
          %v1676 = vmul.f32 %v1148, %v1577
          %v1677 = vmul.f32 %v1149, %v1577
          %v1678 = vmul.f32 %v1150, %v1577
          %v1679 = vmul.f32 %v1151, %v1577
          %v1680 = vmul.f32 %v1152, %v1577
          %v1681 = vmul.f32 %v1153, %v1577
          %v1682 = vmul.f32 %v1154, %v1578
          %v1683 = vmul.f32 %v1155, %v1578
          %v1684 = vmul.f32 %v1156, %v1578
          %v1685 = vmul.f32 %v1157, %v1578
          %v1686 = vmul.f32 %v1158, %v1578
          %v1687 = vmul.f32 %v1159, %v1578
          %v1688 = vmul.f32 %v1160, %v1579
          %v1689 = vmul.f32 %v1161, %v1579
          %v1690 = vmul.f32 %v1162, %v1579
          %v1691 = vmul.f32 %v1163, %v1579
          %v1692 = vmul.f32 %v1164, %v1579
          %v1693 = vmul.f32 %v1165, %v1579
          %v1694 = vmul.f32 %v1166, %v1580
          %v1695 = vmul.f32 %v1167, %v1580
          %v1696 = vmul.f32 %v1168, %v1580
          %v1697 = vmul.f32 %v1169, %v1580
          %v1698 = vmul.f32 %v1170, %v1580
          %v1699 = vmul.f32 %v1171, %v1580
          %v1700 = vmul.f32 %v1172, %v1581
          %v1701 = vmul.f32 %v1173, %v1581
          %v1702 = vmul.f32 %v1174, %v1581
          %v1703 = vmul.f32 %v1175, %v1581
          %v1704 = vmul.f32 %v1176, %v1581
          %v1705 = vmul.f32 %v1177, %v1581
          %v1706 = vmul.f32 %v1178, %v1582
          %v1707 = vmul.f32 %v1179, %v1582
          %v1708 = vmul.f32 %v1180, %v1582
          %v1709 = vmul.f32 %v1181, %v1582
          %v1710 = vmul.f32 %v1182, %v1582
          %v1711 = vmul.f32 %v1183, %v1582
          %v1712 = vmul.f32 %v1184, %v1583
          %v1713 = vmul.f32 %v1185, %v1583
          %v1714 = vmul.f32 %v1186, %v1583
          %v1715 = vmul.f32 %v1187, %v1583
          %v1716 = vmul.f32 %v1188, %v1583
          %v1717 = vmul.f32 %v1189, %v1583
          %v1718 = vmul.f32 %v1190, %v1584
          %v1719 = vmul.f32 %v1191, %v1584
          %v1720 = vmul.f32 %v1192, %v1584
          %v1721 = vmul.f32 %v1193, %v1584
          %v1722 = vmul.f32 %v1194, %v1584
          %v1723 = vmul.f32 %v1195, %v1584
          %v1724 = vmul.f32 %v1196, %v1585
          %v1725 = vmul.f32 %v1197, %v1585
          %v1726 = vmul.f32 %v1198, %v1585
          %v1727 = vmul.f32 %v1199, %v1585
          %v1728 = vmul.f32 %v1200, %v1585
          %v1729 = vmul.f32 %v1201, %v1585
          %v1730 = vld [vmem:[#allocation8] sm:$0x3f]
          %v1732 = vlaneseq
          %v1733 = vshrl.u32 %v1732, 7
          %v1734 = vsub.s32 0, %v1733
          %v1735 = vrot.slane %v1730, %v1734
          %v1736 = vlaneseq
          %v1737 = vshrl.u32 %v1736, 7
          %v1738 = vsub.s32 1, %v1737
          %v1739 = vrot.slane %v1730, %v1738
          %v1740 = vlaneseq
          %v1741 = vshrl.u32 %v1740, 7
          %v1742 = vsub.s32 2, %v1741
          %v1743 = vrot.slane %v1730, %v1742
          %v1744 = vlaneseq
          %v1745 = vshrl.u32 %v1744, 7
          %v1746 = vsub.s32 3, %v1745
          %v1747 = vrot.slane %v1730, %v1746
          %v1748 = vlaneseq
          %v1749 = vshrl.u32 %v1748, 7
          %v1750 = vsub.s32 4, %v1749
          %v1751 = vrot.slane %v1730, %v1750
          %v1752 = vlaneseq
          %v1753 = vshrl.u32 %v1752, 7
          %v1754 = vsub.s32 5, %v1753
          %v1755 = vrot.slane %v1730, %v1754
          %v1762 = vmul.f32 %v1586, %v1735
          %v1763 = vmul.f32 %v1587, %v1739
          %v1764 = vmul.f32 %v1588, %v1743
          %v1765 = vmul.f32 %v1589, %v1747
          %v1766 = vmul.f32 %v1590, %v1751
          %v1767 = vmul.f32 %v1591, %v1755
          %v1768 = vmul.f32 %v1592, %v1735
          %v1769 = vmul.f32 %v1593, %v1739
          %v1770 = vmul.f32 %v1594, %v1743
          %v1771 = vmul.f32 %v1595, %v1747
          %v1772 = vmul.f32 %v1596, %v1751
          %v1773 = vmul.f32 %v1597, %v1755
          %v1774 = vmul.f32 %v1598, %v1735
          %v1775 = vmul.f32 %v1599, %v1739
          %v1776 = vmul.f32 %v1600, %v1743
          %v1777 = vmul.f32 %v1601, %v1747
          %v1778 = vmul.f32 %v1602, %v1751
          %v1779 = vmul.f32 %v1603, %v1755
          %v1780 = vmul.f32 %v1604, %v1735
          %v1781 = vmul.f32 %v1605, %v1739
          %v1782 = vmul.f32 %v1606, %v1743
          %v1783 = vmul.f32 %v1607, %v1747
          %v1784 = vmul.f32 %v1608, %v1751
          %v1785 = vmul.f32 %v1609, %v1755
          %v1786 = vmul.f32 %v1610, %v1735
          %v1787 = vmul.f32 %v1611, %v1739
          %v1788 = vmul.f32 %v1612, %v1743
          %v1789 = vmul.f32 %v1613, %v1747
          %v1790 = vmul.f32 %v1614, %v1751
          %v1791 = vmul.f32 %v1615, %v1755
          %v1792 = vmul.f32 %v1616, %v1735
          %v1793 = vmul.f32 %v1617, %v1739
          %v1794 = vmul.f32 %v1618, %v1743
          %v1795 = vmul.f32 %v1619, %v1747
          %v1796 = vmul.f32 %v1620, %v1751
          %v1797 = vmul.f32 %v1621, %v1755
          %v1798 = vmul.f32 %v1622, %v1735
          %v1799 = vmul.f32 %v1623, %v1739
          %v1800 = vmul.f32 %v1624, %v1743
          %v1801 = vmul.f32 %v1625, %v1747
          %v1802 = vmul.f32 %v1626, %v1751
          %v1803 = vmul.f32 %v1627, %v1755
          %v1804 = vmul.f32 %v1628, %v1735
          %v1805 = vmul.f32 %v1629, %v1739
          %v1806 = vmul.f32 %v1630, %v1743
          %v1807 = vmul.f32 %v1631, %v1747
          %v1808 = vmul.f32 %v1632, %v1751
          %v1809 = vmul.f32 %v1633, %v1755
          %v1810 = vmul.f32 %v1634, %v1735
          %v1811 = vmul.f32 %v1635, %v1739
          %v1812 = vmul.f32 %v1636, %v1743
          %v1813 = vmul.f32 %v1637, %v1747
          %v1814 = vmul.f32 %v1638, %v1751
          %v1815 = vmul.f32 %v1639, %v1755
          %v1816 = vmul.f32 %v1640, %v1735
          %v1817 = vmul.f32 %v1641, %v1739
          %v1818 = vmul.f32 %v1642, %v1743
          %v1819 = vmul.f32 %v1643, %v1747
          %v1820 = vmul.f32 %v1644, %v1751
          %v1821 = vmul.f32 %v1645, %v1755
          %v1822 = vmul.f32 %v1646, %v1735
          %v1823 = vmul.f32 %v1647, %v1739
          %v1824 = vmul.f32 %v1648, %v1743
          %v1825 = vmul.f32 %v1649, %v1747
          %v1826 = vmul.f32 %v1650, %v1751
          %v1827 = vmul.f32 %v1651, %v1755
          %v1828 = vmul.f32 %v1652, %v1735
          %v1829 = vmul.f32 %v1653, %v1739
          %v1830 = vmul.f32 %v1654, %v1743
          %v1831 = vmul.f32 %v1655, %v1747
          %v1832 = vmul.f32 %v1656, %v1751
          %v1833 = vmul.f32 %v1657, %v1755
          %v1834 = vmul.f32 %v1658, %v1735
          %v1835 = vmul.f32 %v1659, %v1739
          %v1836 = vmul.f32 %v1660, %v1743
          %v1837 = vmul.f32 %v1661, %v1747
          %v1838 = vmul.f32 %v1662, %v1751
          %v1839 = vmul.f32 %v1663, %v1755
          %v1840 = vmul.f32 %v1664, %v1735
          %v1841 = vmul.f32 %v1665, %v1739
          %v1842 = vmul.f32 %v1666, %v1743
          %v1843 = vmul.f32 %v1667, %v1747
          %v1844 = vmul.f32 %v1668, %v1751
          %v1845 = vmul.f32 %v1669, %v1755
          %v1846 = vmul.f32 %v1670, %v1735
          %v1847 = vmul.f32 %v1671, %v1739
          %v1848 = vmul.f32 %v1672, %v1743
          %v1849 = vmul.f32 %v1673, %v1747
          %v1850 = vmul.f32 %v1674, %v1751
          %v1851 = vmul.f32 %v1675, %v1755
          %v1852 = vmul.f32 %v1676, %v1735
          %v1853 = vmul.f32 %v1677, %v1739
          %v1854 = vmul.f32 %v1678, %v1743
          %v1855 = vmul.f32 %v1679, %v1747
          %v1856 = vmul.f32 %v1680, %v1751
          %v1857 = vmul.f32 %v1681, %v1755
          %v1858 = vmul.f32 %v1682, %v1735
          %v1859 = vmul.f32 %v1683, %v1739
          %v1860 = vmul.f32 %v1684, %v1743
          %v1861 = vmul.f32 %v1685, %v1747
          %v1862 = vmul.f32 %v1686, %v1751
          %v1863 = vmul.f32 %v1687, %v1755
          %v1864 = vmul.f32 %v1688, %v1735
          %v1865 = vmul.f32 %v1689, %v1739
          %v1866 = vmul.f32 %v1690, %v1743
          %v1867 = vmul.f32 %v1691, %v1747
          %v1868 = vmul.f32 %v1692, %v1751
          %v1869 = vmul.f32 %v1693, %v1755
          %v1870 = vmul.f32 %v1694, %v1735
          %v1871 = vmul.f32 %v1695, %v1739
          %v1872 = vmul.f32 %v1696, %v1743
          %v1873 = vmul.f32 %v1697, %v1747
          %v1874 = vmul.f32 %v1698, %v1751
          %v1875 = vmul.f32 %v1699, %v1755
          %v1876 = vmul.f32 %v1700, %v1735
          %v1877 = vmul.f32 %v1701, %v1739
          %v1878 = vmul.f32 %v1702, %v1743
          %v1879 = vmul.f32 %v1703, %v1747
          %v1880 = vmul.f32 %v1704, %v1751
          %v1881 = vmul.f32 %v1705, %v1755
          %v1882 = vmul.f32 %v1706, %v1735
          %v1883 = vmul.f32 %v1707, %v1739
          %v1884 = vmul.f32 %v1708, %v1743
          %v1885 = vmul.f32 %v1709, %v1747
          %v1886 = vmul.f32 %v1710, %v1751
          %v1887 = vmul.f32 %v1711, %v1755
          %v1888 = vmul.f32 %v1712, %v1735
          %v1889 = vmul.f32 %v1713, %v1739
          %v1890 = vmul.f32 %v1714, %v1743
          %v1891 = vmul.f32 %v1715, %v1747
          %v1892 = vmul.f32 %v1716, %v1751
          %v1893 = vmul.f32 %v1717, %v1755
          %v1894 = vmul.f32 %v1718, %v1735
          %v1895 = vmul.f32 %v1719, %v1739
          %v1896 = vmul.f32 %v1720, %v1743
          %v1897 = vmul.f32 %v1721, %v1747
          %v1898 = vmul.f32 %v1722, %v1751
          %v1899 = vmul.f32 %v1723, %v1755
          %v1900 = vmul.f32 %v1724, %v1735
          %v1901 = vmul.f32 %v1725, %v1739
          %v1902 = vmul.f32 %v1726, %v1743
          %v1903 = vmul.f32 %v1727, %v1747
          %v1904 = vmul.f32 %v1728, %v1751
          %v1905 = vmul.f32 %v1729, %v1755
          %v1906 = vld [vmem:[#allocation9] sm:$0x3f]
          %v1908 = vlaneseq
          %v1909 = vshrl.u32 %v1908, 7
          %v1910 = vsub.s32 0, %v1909
          %v1911 = vrot.slane %v1906, %v1910
          %v1912 = vlaneseq
          %v1913 = vshrl.u32 %v1912, 7
          %v1914 = vsub.s32 1, %v1913
          %v1915 = vrot.slane %v1906, %v1914
          %v1916 = vlaneseq
          %v1917 = vshrl.u32 %v1916, 7
          %v1918 = vsub.s32 2, %v1917
          %v1919 = vrot.slane %v1906, %v1918
          %v1920 = vlaneseq
          %v1921 = vshrl.u32 %v1920, 7
          %v1922 = vsub.s32 3, %v1921
          %v1923 = vrot.slane %v1906, %v1922
          %v1924 = vlaneseq
          %v1925 = vshrl.u32 %v1924, 7
          %v1926 = vsub.s32 4, %v1925
          %v1927 = vrot.slane %v1906, %v1926
          %v1928 = vlaneseq
          %v1929 = vshrl.u32 %v1928, 7
          %v1930 = vsub.s32 5, %v1929
          %v1931 = vrot.slane %v1906, %v1930
          %v1938 = vadd.f32 %v1762, %v1911
          %v1939 = vadd.f32 %v1763, %v1915
          %v1940 = vadd.f32 %v1764, %v1919
          %v1941 = vadd.f32 %v1765, %v1923
          %v1942 = vadd.f32 %v1766, %v1927
          %v1943 = vadd.f32 %v1767, %v1931
          %v1944 = vadd.f32 %v1768, %v1911
          %v1945 = vadd.f32 %v1769, %v1915
          %v1946 = vadd.f32 %v1770, %v1919
          %v1947 = vadd.f32 %v1771, %v1923
          %v1948 = vadd.f32 %v1772, %v1927
          %v1949 = vadd.f32 %v1773, %v1931
          %v1950 = vadd.f32 %v1774, %v1911
          %v1951 = vadd.f32 %v1775, %v1915
          %v1952 = vadd.f32 %v1776, %v1919
          %v1953 = vadd.f32 %v1777, %v1923
          %v1954 = vadd.f32 %v1778, %v1927
          %v1955 = vadd.f32 %v1779, %v1931
          %v1956 = vadd.f32 %v1780, %v1911
          %v1957 = vadd.f32 %v1781, %v1915
          %v1958 = vadd.f32 %v1782, %v1919
          %v1959 = vadd.f32 %v1783, %v1923
          %v1960 = vadd.f32 %v1784, %v1927
          %v1961 = vadd.f32 %v1785, %v1931
          %v1962 = vadd.f32 %v1786, %v1911
          %v1963 = vadd.f32 %v1787, %v1915
          %v1964 = vadd.f32 %v1788, %v1919
          %v1965 = vadd.f32 %v1789, %v1923
          %v1966 = vadd.f32 %v1790, %v1927
          %v1967 = vadd.f32 %v1791, %v1931
          %v1968 = vadd.f32 %v1792, %v1911
          %v1969 = vadd.f32 %v1793, %v1915
          %v1970 = vadd.f32 %v1794, %v1919
          %v1971 = vadd.f32 %v1795, %v1923
          %v1972 = vadd.f32 %v1796, %v1927
          %v1973 = vadd.f32 %v1797, %v1931
          %v1974 = vadd.f32 %v1798, %v1911
          %v1975 = vadd.f32 %v1799, %v1915
          %v1976 = vadd.f32 %v1800, %v1919
          %v1977 = vadd.f32 %v1801, %v1923
          %v1978 = vadd.f32 %v1802, %v1927
          %v1979 = vadd.f32 %v1803, %v1931
          %v1980 = vadd.f32 %v1804, %v1911
          %v1981 = vadd.f32 %v1805, %v1915
          %v1982 = vadd.f32 %v1806, %v1919
          %v1983 = vadd.f32 %v1807, %v1923
          %v1984 = vadd.f32 %v1808, %v1927
          %v1985 = vadd.f32 %v1809, %v1931
          %v1986 = vadd.f32 %v1810, %v1911
          %v1987 = vadd.f32 %v1811, %v1915
          %v1988 = vadd.f32 %v1812, %v1919
          %v1989 = vadd.f32 %v1813, %v1923
          %v1990 = vadd.f32 %v1814, %v1927
          %v1991 = vadd.f32 %v1815, %v1931
          %v1992 = vadd.f32 %v1816, %v1911
          %v1993 = vadd.f32 %v1817, %v1915
          %v1994 = vadd.f32 %v1818, %v1919
          %v1995 = vadd.f32 %v1819, %v1923
          %v1996 = vadd.f32 %v1820, %v1927
          %v1997 = vadd.f32 %v1821, %v1931
          %v1998 = vadd.f32 %v1822, %v1911
          %v1999 = vadd.f32 %v1823, %v1915
          %v2000 = vadd.f32 %v1824, %v1919
          %v2001 = vadd.f32 %v1825, %v1923
          %v2002 = vadd.f32 %v1826, %v1927
          %v2003 = vadd.f32 %v1827, %v1931
          %v2004 = vadd.f32 %v1828, %v1911
          %v2005 = vadd.f32 %v1829, %v1915
          %v2006 = vadd.f32 %v1830, %v1919
          %v2007 = vadd.f32 %v1831, %v1923
          %v2008 = vadd.f32 %v1832, %v1927
          %v2009 = vadd.f32 %v1833, %v1931
          %v2010 = vadd.f32 %v1834, %v1911
          %v2011 = vadd.f32 %v1835, %v1915
          %v2012 = vadd.f32 %v1836, %v1919
          %v2013 = vadd.f32 %v1837, %v1923
          %v2014 = vadd.f32 %v1838, %v1927
          %v2015 = vadd.f32 %v1839, %v1931
          %v2016 = vadd.f32 %v1840, %v1911
          %v2017 = vadd.f32 %v1841, %v1915
          %v2018 = vadd.f32 %v1842, %v1919
          %v2019 = vadd.f32 %v1843, %v1923
          %v2020 = vadd.f32 %v1844, %v1927
          %v2021 = vadd.f32 %v1845, %v1931
          %v2022 = vadd.f32 %v1846, %v1911
          %v2023 = vadd.f32 %v1847, %v1915
          %v2024 = vadd.f32 %v1848, %v1919
          %v2025 = vadd.f32 %v1849, %v1923
          %v2026 = vadd.f32 %v1850, %v1927
          %v2027 = vadd.f32 %v1851, %v1931
          %v2028 = vadd.f32 %v1852, %v1911
          %v2029 = vadd.f32 %v1853, %v1915
          %v2030 = vadd.f32 %v1854, %v1919
          %v2031 = vadd.f32 %v1855, %v1923
          %v2032 = vadd.f32 %v1856, %v1927
          %v2033 = vadd.f32 %v1857, %v1931
          %v2034 = vadd.f32 %v1858, %v1911
          %v2035 = vadd.f32 %v1859, %v1915
          %v2036 = vadd.f32 %v1860, %v1919
          %v2037 = vadd.f32 %v1861, %v1923
          %v2038 = vadd.f32 %v1862, %v1927
          %v2039 = vadd.f32 %v1863, %v1931
          %v2040 = vadd.f32 %v1864, %v1911
          %v2041 = vadd.f32 %v1865, %v1915
          %v2042 = vadd.f32 %v1866, %v1919
          %v2043 = vadd.f32 %v1867, %v1923
          %v2044 = vadd.f32 %v1868, %v1927
          %v2045 = vadd.f32 %v1869, %v1931
          %v2046 = vadd.f32 %v1870, %v1911
          %v2047 = vadd.f32 %v1871, %v1915
          %v2048 = vadd.f32 %v1872, %v1919
          %v2049 = vadd.f32 %v1873, %v1923
          %v2050 = vadd.f32 %v1874, %v1927
          %v2051 = vadd.f32 %v1875, %v1931
          %v2052 = vadd.f32 %v1876, %v1911
          %v2053 = vadd.f32 %v1877, %v1915
          %v2054 = vadd.f32 %v1878, %v1919
          %v2055 = vadd.f32 %v1879, %v1923
          %v2056 = vadd.f32 %v1880, %v1927
          %v2057 = vadd.f32 %v1881, %v1931
          %v2058 = vadd.f32 %v1882, %v1911
          %v2059 = vadd.f32 %v1883, %v1915
          %v2060 = vadd.f32 %v1884, %v1919
          %v2061 = vadd.f32 %v1885, %v1923
          %v2062 = vadd.f32 %v1886, %v1927
          %v2063 = vadd.f32 %v1887, %v1931
          %v2064 = vadd.f32 %v1888, %v1911
          %v2065 = vadd.f32 %v1889, %v1915
          %v2066 = vadd.f32 %v1890, %v1919
          %v2067 = vadd.f32 %v1891, %v1923
          %v2068 = vadd.f32 %v1892, %v1927
          %v2069 = vadd.f32 %v1893, %v1931
          %v2070 = vadd.f32 %v1894, %v1911
          %v2071 = vadd.f32 %v1895, %v1915
          %v2072 = vadd.f32 %v1896, %v1919
          %v2073 = vadd.f32 %v1897, %v1923
          %v2074 = vadd.f32 %v1898, %v1927
          %v2075 = vadd.f32 %v1899, %v1931
          %v2076 = vadd.f32 %v1900, %v1911
          %v2077 = vadd.f32 %v1901, %v1915
          %v2078 = vadd.f32 %v1902, %v1919
          %v2079 = vadd.f32 %v1903, %v1923
          %v2080 = vadd.f32 %v1904, %v1927
          %v2081 = vadd.f32 %v1905, %v1931
          %v2082 = vpack.c.bf16 %v1944, %v1938
          %v2083 = vpack.c.bf16 %v1945, %v1939
          %v2084 = vpack.c.bf16 %v1946, %v1940
          %v2085 = vpack.c.bf16 %v1947, %v1941
          %v2086 = vpack.c.bf16 %v1948, %v1942
          %v2087 = vpack.c.bf16 %v1949, %v1943
          %v2088 = vpack.c.bf16 %v1956, %v1950
          %v2089 = vpack.c.bf16 %v1957, %v1951
          %v2090 = vpack.c.bf16 %v1958, %v1952
          %v2091 = vpack.c.bf16 %v1959, %v1953
          %v2092 = vpack.c.bf16 %v1960, %v1954
          %v2093 = vpack.c.bf16 %v1961, %v1955
          %v2094 = vpack.c.bf16 %v1968, %v1962
          %v2095 = vpack.c.bf16 %v1969, %v1963
          %v2096 = vpack.c.bf16 %v1970, %v1964
          %v2097 = vpack.c.bf16 %v1971, %v1965
          %v2098 = vpack.c.bf16 %v1972, %v1966
          %v2099 = vpack.c.bf16 %v1973, %v1967
          %v2100 = vpack.c.bf16 %v1980, %v1974
          %v2101 = vpack.c.bf16 %v1981, %v1975
          %v2102 = vpack.c.bf16 %v1982, %v1976
          %v2103 = vpack.c.bf16 %v1983, %v1977
          %v2104 = vpack.c.bf16 %v1984, %v1978
          %v2105 = vpack.c.bf16 %v1985, %v1979
          %v2106 = vpack.c.bf16 %v1992, %v1986
          %v2107 = vpack.c.bf16 %v1993, %v1987
          %v2108 = vpack.c.bf16 %v1994, %v1988
          %v2109 = vpack.c.bf16 %v1995, %v1989
          %v2110 = vpack.c.bf16 %v1996, %v1990
          %v2111 = vpack.c.bf16 %v1997, %v1991
          %v2112 = vpack.c.bf16 %v2004, %v1998
          %v2113 = vpack.c.bf16 %v2005, %v1999
          %v2114 = vpack.c.bf16 %v2006, %v2000
          %v2115 = vpack.c.bf16 %v2007, %v2001
          %v2116 = vpack.c.bf16 %v2008, %v2002
          %v2117 = vpack.c.bf16 %v2009, %v2003
          %v2118 = vpack.c.bf16 %v2016, %v2010
          %v2119 = vpack.c.bf16 %v2017, %v2011
          %v2120 = vpack.c.bf16 %v2018, %v2012
          %v2121 = vpack.c.bf16 %v2019, %v2013
          %v2122 = vpack.c.bf16 %v2020, %v2014
          %v2123 = vpack.c.bf16 %v2021, %v2015
          %v2124 = vpack.c.bf16 %v2028, %v2022
          %v2125 = vpack.c.bf16 %v2029, %v2023
          %v2126 = vpack.c.bf16 %v2030, %v2024
          %v2127 = vpack.c.bf16 %v2031, %v2025
          %v2128 = vpack.c.bf16 %v2032, %v2026
          %v2129 = vpack.c.bf16 %v2033, %v2027
          %v2130 = vpack.c.bf16 %v2040, %v2034
          %v2131 = vpack.c.bf16 %v2041, %v2035
          %v2132 = vpack.c.bf16 %v2042, %v2036
          %v2133 = vpack.c.bf16 %v2043, %v2037
          %v2134 = vpack.c.bf16 %v2044, %v2038
          %v2135 = vpack.c.bf16 %v2045, %v2039
          %v2136 = vpack.c.bf16 %v2052, %v2046
          %v2137 = vpack.c.bf16 %v2053, %v2047
          %v2138 = vpack.c.bf16 %v2054, %v2048
          %v2139 = vpack.c.bf16 %v2055, %v2049
          %v2140 = vpack.c.bf16 %v2056, %v2050
          %v2141 = vpack.c.bf16 %v2057, %v2051
          %v2142 = vpack.c.bf16 %v2064, %v2058
          %v2143 = vpack.c.bf16 %v2065, %v2059
          %v2144 = vpack.c.bf16 %v2066, %v2060
          %v2145 = vpack.c.bf16 %v2067, %v2061
          %v2146 = vpack.c.bf16 %v2068, %v2062
          %v2147 = vpack.c.bf16 %v2069, %v2063
          %v2148 = vpack.c.bf16 %v2076, %v2070
          %v2149 = vpack.c.bf16 %v2077, %v2071
          %v2150 = vpack.c.bf16 %v2078, %v2072
          %v2151 = vpack.c.bf16 %v2079, %v2073
          %v2152 = vpack.c.bf16 %v2080, %v2074
          %v2153 = vpack.c.bf16 %v2081, %v2075
          %v2226 = vunpack.c.l.b16 %v2082
          %v2227 = vunpack.c.l.b16 %v2083
          %v2228 = vunpack.c.l.b16 %v2084
          %v2229 = vunpack.c.l.b16 %v2085
          %v2230 = vunpack.c.l.b16 %v2086
          %v2231 = vunpack.c.l.b16 %v2087
          %v2232 = vunpack.c.h.b16 %v2082
          %v2233 = vunpack.c.h.b16 %v2083
          %v2234 = vunpack.c.h.b16 %v2084
          %v2235 = vunpack.c.h.b16 %v2085
          %v2236 = vunpack.c.h.b16 %v2086
          %v2237 = vunpack.c.h.b16 %v2087
          %v2238 = vunpack.c.l.b16 %v2088
          %v2239 = vunpack.c.l.b16 %v2089
          %v2240 = vunpack.c.l.b16 %v2090
          %v2241 = vunpack.c.l.b16 %v2091
          %v2242 = vunpack.c.l.b16 %v2092
          %v2243 = vunpack.c.l.b16 %v2093
          %v2244 = vunpack.c.h.b16 %v2088
          %v2245 = vunpack.c.h.b16 %v2089
          %v2246 = vunpack.c.h.b16 %v2090
          %v2247 = vunpack.c.h.b16 %v2091
          %v2248 = vunpack.c.h.b16 %v2092
          %v2249 = vunpack.c.h.b16 %v2093
          %v2250 = vunpack.c.l.b16 %v2094
          %v2251 = vunpack.c.l.b16 %v2095
          %v2252 = vunpack.c.l.b16 %v2096
          %v2253 = vunpack.c.l.b16 %v2097
          %v2254 = vunpack.c.l.b16 %v2098
          %v2255 = vunpack.c.l.b16 %v2099
          %v2256 = vunpack.c.h.b16 %v2094
          %v2257 = vunpack.c.h.b16 %v2095
          %v2258 = vunpack.c.h.b16 %v2096
          %v2259 = vunpack.c.h.b16 %v2097
          %v2260 = vunpack.c.h.b16 %v2098
          %v2261 = vunpack.c.h.b16 %v2099
          %v2262 = vunpack.c.l.b16 %v2100
          %v2263 = vunpack.c.l.b16 %v2101
          %v2264 = vunpack.c.l.b16 %v2102
          %v2265 = vunpack.c.l.b16 %v2103
          %v2266 = vunpack.c.l.b16 %v2104
          %v2267 = vunpack.c.l.b16 %v2105
          %v2268 = vunpack.c.h.b16 %v2100
          %v2269 = vunpack.c.h.b16 %v2101
          %v2270 = vunpack.c.h.b16 %v2102
          %v2271 = vunpack.c.h.b16 %v2103
          %v2272 = vunpack.c.h.b16 %v2104
          %v2273 = vunpack.c.h.b16 %v2105
          %v2274 = vunpack.c.l.b16 %v2106
          %v2275 = vunpack.c.l.b16 %v2107
          %v2276 = vunpack.c.l.b16 %v2108
          %v2277 = vunpack.c.l.b16 %v2109
          %v2278 = vunpack.c.l.b16 %v2110
          %v2279 = vunpack.c.l.b16 %v2111
          %v2280 = vunpack.c.h.b16 %v2106
          %v2281 = vunpack.c.h.b16 %v2107
          %v2282 = vunpack.c.h.b16 %v2108
          %v2283 = vunpack.c.h.b16 %v2109
          %v2284 = vunpack.c.h.b16 %v2110
          %v2285 = vunpack.c.h.b16 %v2111
          %v2286 = vunpack.c.l.b16 %v2112
          %v2287 = vunpack.c.l.b16 %v2113
          %v2288 = vunpack.c.l.b16 %v2114
          %v2289 = vunpack.c.l.b16 %v2115
          %v2290 = vunpack.c.l.b16 %v2116
          %v2291 = vunpack.c.l.b16 %v2117
          %v2292 = vunpack.c.h.b16 %v2112
          %v2293 = vunpack.c.h.b16 %v2113
          %v2294 = vunpack.c.h.b16 %v2114
          %v2295 = vunpack.c.h.b16 %v2115
          %v2296 = vunpack.c.h.b16 %v2116
          %v2297 = vunpack.c.h.b16 %v2117
          %v2298 = vunpack.c.l.b16 %v2118
          %v2299 = vunpack.c.l.b16 %v2119
          %v2300 = vunpack.c.l.b16 %v2120
          %v2301 = vunpack.c.l.b16 %v2121
          %v2302 = vunpack.c.l.b16 %v2122
          %v2303 = vunpack.c.l.b16 %v2123
          %v2304 = vunpack.c.h.b16 %v2118
          %v2305 = vunpack.c.h.b16 %v2119
          %v2306 = vunpack.c.h.b16 %v2120
          %v2307 = vunpack.c.h.b16 %v2121
          %v2308 = vunpack.c.h.b16 %v2122
          %v2309 = vunpack.c.h.b16 %v2123
          %v2310 = vunpack.c.l.b16 %v2124
          %v2311 = vunpack.c.l.b16 %v2125
          %v2312 = vunpack.c.l.b16 %v2126
          %v2313 = vunpack.c.l.b16 %v2127
          %v2314 = vunpack.c.l.b16 %v2128
          %v2315 = vunpack.c.l.b16 %v2129
          %v2316 = vunpack.c.h.b16 %v2124
          %v2317 = vunpack.c.h.b16 %v2125
          %v2318 = vunpack.c.h.b16 %v2126
          %v2319 = vunpack.c.h.b16 %v2127
          %v2320 = vunpack.c.h.b16 %v2128
          %v2321 = vunpack.c.h.b16 %v2129
          %v2322 = vunpack.c.l.b16 %v2130
          %v2323 = vunpack.c.l.b16 %v2131
          %v2324 = vunpack.c.l.b16 %v2132
          %v2325 = vunpack.c.l.b16 %v2133
          %v2326 = vunpack.c.l.b16 %v2134
          %v2327 = vunpack.c.l.b16 %v2135
          %v2328 = vunpack.c.h.b16 %v2130
          %v2329 = vunpack.c.h.b16 %v2131
          %v2330 = vunpack.c.h.b16 %v2132
          %v2331 = vunpack.c.h.b16 %v2133
          %v2332 = vunpack.c.h.b16 %v2134
          %v2333 = vunpack.c.h.b16 %v2135
          %v2334 = vunpack.c.l.b16 %v2136
          %v2335 = vunpack.c.l.b16 %v2137
          %v2336 = vunpack.c.l.b16 %v2138
          %v2337 = vunpack.c.l.b16 %v2139
          %v2338 = vunpack.c.l.b16 %v2140
          %v2339 = vunpack.c.l.b16 %v2141
          %v2340 = vunpack.c.h.b16 %v2136
          %v2341 = vunpack.c.h.b16 %v2137
          %v2342 = vunpack.c.h.b16 %v2138
          %v2343 = vunpack.c.h.b16 %v2139
          %v2344 = vunpack.c.h.b16 %v2140
          %v2345 = vunpack.c.h.b16 %v2141
          %v2346 = vunpack.c.l.b16 %v2142
          %v2347 = vunpack.c.l.b16 %v2143
          %v2348 = vunpack.c.l.b16 %v2144
          %v2349 = vunpack.c.l.b16 %v2145
          %v2350 = vunpack.c.l.b16 %v2146
          %v2351 = vunpack.c.l.b16 %v2147
          %v2352 = vunpack.c.h.b16 %v2142
          %v2353 = vunpack.c.h.b16 %v2143
          %v2354 = vunpack.c.h.b16 %v2144
          %v2355 = vunpack.c.h.b16 %v2145
          %v2356 = vunpack.c.h.b16 %v2146
          %v2357 = vunpack.c.h.b16 %v2147
          %v2358 = vunpack.c.l.b16 %v2148
          %v2359 = vunpack.c.l.b16 %v2149
          %v2360 = vunpack.c.l.b16 %v2150
          %v2361 = vunpack.c.l.b16 %v2151
          %v2362 = vunpack.c.l.b16 %v2152
          %v2363 = vunpack.c.l.b16 %v2153
          %v2364 = vunpack.c.h.b16 %v2148
          %v2365 = vunpack.c.h.b16 %v2149
          %v2366 = vunpack.c.h.b16 %v2150
          %v2367 = vunpack.c.h.b16 %v2151
          %v2368 = vunpack.c.h.b16 %v2152
          %v2369 = vunpack.c.h.b16 %v2153
          %v2370 = vpack.c.b16 %v2227, %v2226
          %v2371 = vpack.c.b16 %v2229, %v2228
          %v2372 = vpack.c.b16 %v2231, %v2230
          %v2373 = vpack.c.b16 %v2233, %v2232
          %v2374 = vpack.c.b16 %v2235, %v2234
          %v2375 = vpack.c.b16 %v2237, %v2236
          %v2376 = vpack.c.b16 %v2239, %v2238
          %v2377 = vpack.c.b16 %v2241, %v2240
          %v2378 = vpack.c.b16 %v2243, %v2242
          %v2379 = vpack.c.b16 %v2245, %v2244
          %v2380 = vpack.c.b16 %v2247, %v2246
          %v2381 = vpack.c.b16 %v2249, %v2248
          %v2382 = vpack.c.b16 %v2251, %v2250
          %v2383 = vpack.c.b16 %v2253, %v2252
          %v2384 = vpack.c.b16 %v2255, %v2254
          %v2385 = vpack.c.b16 %v2257, %v2256
          %v2386 = vpack.c.b16 %v2259, %v2258
          %v2387 = vpack.c.b16 %v2261, %v2260
          %v2388 = vpack.c.b16 %v2263, %v2262
          %v2389 = vpack.c.b16 %v2265, %v2264
          %v2390 = vpack.c.b16 %v2267, %v2266
          %v2391 = vpack.c.b16 %v2269, %v2268
          %v2392 = vpack.c.b16 %v2271, %v2270
          %v2393 = vpack.c.b16 %v2273, %v2272
          %v2394 = vpack.c.b16 %v2275, %v2274
          %v2395 = vpack.c.b16 %v2277, %v2276
          %v2396 = vpack.c.b16 %v2279, %v2278
          %v2397 = vpack.c.b16 %v2281, %v2280
          %v2398 = vpack.c.b16 %v2283, %v2282
          %v2399 = vpack.c.b16 %v2285, %v2284
          %v2400 = vpack.c.b16 %v2287, %v2286
          %v2401 = vpack.c.b16 %v2289, %v2288
          %v2402 = vpack.c.b16 %v2291, %v2290
          %v2403 = vpack.c.b16 %v2293, %v2292
          %v2404 = vpack.c.b16 %v2295, %v2294
          %v2405 = vpack.c.b16 %v2297, %v2296
          %v2406 = vpack.c.b16 %v2299, %v2298
          %v2407 = vpack.c.b16 %v2301, %v2300
          %v2408 = vpack.c.b16 %v2303, %v2302
          %v2409 = vpack.c.b16 %v2305, %v2304
          %v2410 = vpack.c.b16 %v2307, %v2306
          %v2411 = vpack.c.b16 %v2309, %v2308
          %v2412 = vpack.c.b16 %v2311, %v2310
          %v2413 = vpack.c.b16 %v2313, %v2312
          %v2414 = vpack.c.b16 %v2315, %v2314
          %v2415 = vpack.c.b16 %v2317, %v2316
          %v2416 = vpack.c.b16 %v2319, %v2318
          %v2417 = vpack.c.b16 %v2321, %v2320
          %v2418 = vpack.c.b16 %v2323, %v2322
          %v2419 = vpack.c.b16 %v2325, %v2324
          %v2420 = vpack.c.b16 %v2327, %v2326
          %v2421 = vpack.c.b16 %v2329, %v2328
          %v2422 = vpack.c.b16 %v2331, %v2330
          %v2423 = vpack.c.b16 %v2333, %v2332
          %v2424 = vpack.c.b16 %v2335, %v2334
          %v2425 = vpack.c.b16 %v2337, %v2336
          %v2426 = vpack.c.b16 %v2339, %v2338
          %v2427 = vpack.c.b16 %v2341, %v2340
          %v2428 = vpack.c.b16 %v2343, %v2342
          %v2429 = vpack.c.b16 %v2345, %v2344
          %v2430 = vpack.c.b16 %v2347, %v2346
          %v2431 = vpack.c.b16 %v2349, %v2348
          %v2432 = vpack.c.b16 %v2351, %v2350
          %v2433 = vpack.c.b16 %v2353, %v2352
          %v2434 = vpack.c.b16 %v2355, %v2354
          %v2435 = vpack.c.b16 %v2357, %v2356
          %v2436 = vpack.c.b16 %v2359, %v2358
          %v2437 = vpack.c.b16 %v2361, %v2360
          %v2438 = vpack.c.b16 %v2363, %v2362
          %v2439 = vpack.c.b16 %v2365, %v2364
          %v2440 = vpack.c.b16 %v2367, %v2366
          %v2441 = vpack.c.b16 %v2369, %v2368
          %2514 = vst [vmem:[#allocation2] sm:$0xff] %v2370
          %2515 = vst [vmem:[#allocation2 + $0x8] sm:$0xff] %v2371
          %2516 = vst [vmem:[#allocation2 + $0x10] sm:$0xff] %v2372
          %2517 = vst [vmem:[#allocation2 + $0x18] sm:$0xff] %v2373
          %2518 = vst [vmem:[#allocation2 + $0x20] sm:$0xff] %v2374
          %2519 = vst [vmem:[#allocation2 + $0x28] sm:$0xff] %v2375
          %2520 = vst [vmem:[#allocation2 + $0x30] sm:$0xff] %v2376
          %2521 = vst [vmem:[#allocation2 + $0x38] sm:$0xff] %v2377
          %2522 = vst [vmem:[#allocation2 + $0x40] sm:$0xff] %v2378
          %2523 = vst [vmem:[#allocation2 + $0x48] sm:$0xff] %v2379
          %2524 = vst [vmem:[#allocation2 + $0x50] sm:$0xff] %v2380
          %2525 = vst [vmem:[#allocation2 + $0x58] sm:$0xff] %v2381
          %2526 = vst [vmem:[#allocation2 + $0x60] sm:$0xff] %v2382
          %2527 = vst [vmem:[#allocation2 + $0x68] sm:$0xff] %v2383
          %2528 = vst [vmem:[#allocation2 + $0x70] sm:$0xff] %v2384
          %2529 = vst [vmem:[#allocation2 + $0x78] sm:$0xff] %v2385
          %2530 = vst [vmem:[#allocation2 + $0x80] sm:$0xff] %v2386
          %2531 = vst [vmem:[#allocation2 + $0x88] sm:$0xff] %v2387
          %2532 = vst [vmem:[#allocation2 + $0x90] sm:$0xff] %v2388
          %2533 = vst [vmem:[#allocation2 + $0x98] sm:$0xff] %v2389
          %2534 = vst [vmem:[#allocation2 + $0xa0] sm:$0xff] %v2390
          %2535 = vst [vmem:[#allocation2 + $0xa8] sm:$0xff] %v2391
          %2536 = vst [vmem:[#allocation2 + $0xb0] sm:$0xff] %v2392
          %2537 = vst [vmem:[#allocation2 + $0xb8] sm:$0xff] %v2393
          %2538 = vst [vmem:[#allocation2 + $0xc0] sm:$0xff] %v2394
          %2539 = vst [vmem:[#allocation2 + $0xc8] sm:$0xff] %v2395
          %2540 = vst [vmem:[#allocation2 + $0xd0] sm:$0xff] %v2396
          %2541 = vst [vmem:[#allocation2 + $0xd8] sm:$0xff] %v2397
          %2542 = vst [vmem:[#allocation2 + $0xe0] sm:$0xff] %v2398
          %2543 = vst [vmem:[#allocation2 + $0xe8] sm:$0xff] %v2399
          %2544 = vst [vmem:[#allocation2 + $0xf0] sm:$0xff] %v2400
          %2545 = vst [vmem:[#allocation2 + $0xf8] sm:$0xff] %v2401
          %2546 = vst [vmem:[#allocation2 + $0x100] sm:$0xff] %v2402
          %2547 = vst [vmem:[#allocation2 + $0x108] sm:$0xff] %v2403
          %2548 = vst [vmem:[#allocation2 + $0x110] sm:$0xff] %v2404
          %2549 = vst [vmem:[#allocation2 + $0x118] sm:$0xff] %v2405
          %2550 = vst [vmem:[#allocation2 + $0x120] sm:$0xff] %v2406
          %2551 = vst [vmem:[#allocation2 + $0x128] sm:$0xff] %v2407
          %2552 = vst [vmem:[#allocation2 + $0x130] sm:$0xff] %v2408
          %2553 = vst [vmem:[#allocation2 + $0x138] sm:$0xff] %v2409
          %2554 = vst [vmem:[#allocation2 + $0x140] sm:$0xff] %v2410
          %2555 = vst [vmem:[#allocation2 + $0x148] sm:$0xff] %v2411
          %2556 = vst [vmem:[#allocation2 + $0x150] sm:$0xff] %v2412
          %2557 = vst [vmem:[#allocation2 + $0x158] sm:$0xff] %v2413
          %2558 = vst [vmem:[#allocation2 + $0x160] sm:$0xff] %v2414
          %2559 = vst [vmem:[#allocation2 + $0x168] sm:$0xff] %v2415
          %2560 = vst [vmem:[#allocation2 + $0x170] sm:$0xff] %v2416
          %2561 = vst [vmem:[#allocation2 + $0x178] sm:$0xff] %v2417
          %2562 = vst [vmem:[#allocation2 + $0x180] sm:$0xff] %v2418
          %2563 = vst [vmem:[#allocation2 + $0x188] sm:$0xff] %v2419
          %2564 = vst [vmem:[#allocation2 + $0x190] sm:$0xff] %v2420
          %2565 = vst [vmem:[#allocation2 + $0x198] sm:$0xff] %v2421
          %2566 = vst [vmem:[#allocation2 + $0x1a0] sm:$0xff] %v2422
          %2567 = vst [vmem:[#allocation2 + $0x1a8] sm:$0xff] %v2423
          %2568 = vst [vmem:[#allocation2 + $0x1b0] sm:$0xff] %v2424
          %2569 = vst [vmem:[#allocation2 + $0x1b8] sm:$0xff] %v2425
          %2570 = vst [vmem:[#allocation2 + $0x1c0] sm:$0xff] %v2426
          %2571 = vst [vmem:[#allocation2 + $0x1c8] sm:$0xff] %v2427
          %2572 = vst [vmem:[#allocation2 + $0x1d0] sm:$0xff] %v2428
          %2573 = vst [vmem:[#allocation2 + $0x1d8] sm:$0xff] %v2429
          %2574 = vst [vmem:[#allocation2 + $0x1e0] sm:$0xff] %v2430
          %2575 = vst [vmem:[#allocation2 + $0x1e8] sm:$0xff] %v2431
          %2576 = vst [vmem:[#allocation2 + $0x1f0] sm:$0xff] %v2432
          %2577 = vst [vmem:[#allocation2 + $0x1f8] sm:$0xff] %v2433
          %2578 = vst [vmem:[#allocation2 + $0x200] sm:$0xff] %v2434
          %2579 = vst [vmem:[#allocation2 + $0x208] sm:$0xff] %v2435
          %2580 = vst [vmem:[#allocation2 + $0x210] sm:$0xff] %v2436
          %2581 = vst [vmem:[#allocation2 + $0x218] sm:$0xff] %v2437
          %2582 = vst [vmem:[#allocation2 + $0x220] sm:$0xff] %v2438
          %2583 = vst [vmem:[#allocation2 + $0x228] sm:$0xff] %v2439
          %2584 = vst [vmem:[#allocation2 + $0x230] sm:$0xff] %v2440
          %2585 = vst [vmem:[#allocation2 + $0x238] sm:$0xff] %v2441
        $region72: #{tpu_custom_call.1} parent=43 // pred_fallthru
          _
        %v2586 = vld [vmem:[#allocation2] sm:$0xff]
        %v2587 = vld [vmem:[#allocation2 + $0x8] sm:$0xff]
        %v2588 = vld [vmem:[#allocation2 + $0x10] sm:$0xff]
        %v2589 = vld [vmem:[#allocation2 + $0x18] sm:$0xff]
        %v2590 = vld [vmem:[#allocation2 + $0x20] sm:$0xff]
        %v2591 = vld [vmem:[#allocation2 + $0x28] sm:$0xff]
        %v2592 = vld [vmem:[#allocation2 + $0x30] sm:$0xff]
        %v2593 = vld [vmem:[#allocation2 + $0x38] sm:$0xff]
        %v2594 = vld [vmem:[#allocation2 + $0x40] sm:$0xff]
        %v2595 = vld [vmem:[#allocation2 + $0x48] sm:$0xff]
        %v2596 = vld [vmem:[#allocation2 + $0x50] sm:$0xff]
        %v2597 = vld [vmem:[#allocation2 + $0x58] sm:$0xff]
        %v2598 = vld [vmem:[#allocation2 + $0x60] sm:$0xff]
        %v2599 = vld [vmem:[#allocation2 + $0x68] sm:$0xff]
        %v2600 = vld [vmem:[#allocation2 + $0x70] sm:$0xff]
        %v2601 = vld [vmem:[#allocation2 + $0x78] sm:$0xff]
        %v2602 = vld [vmem:[#allocation2 + $0x80] sm:$0xff]
        %v2603 = vld [vmem:[#allocation2 + $0x88] sm:$0xff]
        %v2604 = vld [vmem:[#allocation2 + $0x90] sm:$0xff]
        %v2605 = vld [vmem:[#allocation2 + $0x98] sm:$0xff]
        %v2606 = vld [vmem:[#allocation2 + $0xa0] sm:$0xff]
        %v2607 = vld [vmem:[#allocation2 + $0xa8] sm:$0xff]
        %v2608 = vld [vmem:[#allocation2 + $0xb0] sm:$0xff]
        %v2609 = vld [vmem:[#allocation2 + $0xb8] sm:$0xff]
        %v2610 = vld [vmem:[#allocation2 + $0xc0] sm:$0xff]
        %v2611 = vld [vmem:[#allocation2 + $0xc8] sm:$0xff]
        %v2612 = vld [vmem:[#allocation2 + $0xd0] sm:$0xff]
        %v2613 = vld [vmem:[#allocation2 + $0xd8] sm:$0xff]
        %v2614 = vld [vmem:[#allocation2 + $0xe0] sm:$0xff]
        %v2615 = vld [vmem:[#allocation2 + $0xe8] sm:$0xff]
        %v2616 = vld [vmem:[#allocation2 + $0xf0] sm:$0xff]
        %v2617 = vld [vmem:[#allocation2 + $0xf8] sm:$0xff]
        %v2618 = vld [vmem:[#allocation2 + $0x100] sm:$0xff]
        %v2619 = vld [vmem:[#allocation2 + $0x108] sm:$0xff]
        %v2620 = vld [vmem:[#allocation2 + $0x110] sm:$0xff]
        %v2621 = vld [vmem:[#allocation2 + $0x118] sm:$0xff]
        %v2622 = vld [vmem:[#allocation2 + $0x120] sm:$0xff]
        %v2623 = vld [vmem:[#allocation2 + $0x128] sm:$0xff]
        %v2624 = vld [vmem:[#allocation2 + $0x130] sm:$0xff]
        %v2625 = vld [vmem:[#allocation2 + $0x138] sm:$0xff]
        %v2626 = vld [vmem:[#allocation2 + $0x140] sm:$0xff]
        %v2627 = vld [vmem:[#allocation2 + $0x148] sm:$0xff]
        %v2628 = vld [vmem:[#allocation2 + $0x150] sm:$0xff]
        %v2629 = vld [vmem:[#allocation2 + $0x158] sm:$0xff]
        %v2630 = vld [vmem:[#allocation2 + $0x160] sm:$0xff]
        %v2631 = vld [vmem:[#allocation2 + $0x168] sm:$0xff]
        %v2632 = vld [vmem:[#allocation2 + $0x170] sm:$0xff]
        %v2633 = vld [vmem:[#allocation2 + $0x178] sm:$0xff]
        %v2634 = vld [vmem:[#allocation2 + $0x180] sm:$0xff]
        %v2635 = vld [vmem:[#allocation2 + $0x188] sm:$0xff]
        %v2636 = vld [vmem:[#allocation2 + $0x190] sm:$0xff]
        %v2637 = vld [vmem:[#allocation2 + $0x198] sm:$0xff]
        %v2638 = vld [vmem:[#allocation2 + $0x1a0] sm:$0xff]
        %v2639 = vld [vmem:[#allocation2 + $0x1a8] sm:$0xff]
        %v2640 = vld [vmem:[#allocation2 + $0x1b0] sm:$0xff]
        %v2641 = vld [vmem:[#allocation2 + $0x1b8] sm:$0xff]
        %v2642 = vld [vmem:[#allocation2 + $0x1c0] sm:$0xff]
        %v2643 = vld [vmem:[#allocation2 + $0x1c8] sm:$0xff]
        %v2644 = vld [vmem:[#allocation2 + $0x1d0] sm:$0xff]
        %v2645 = vld [vmem:[#allocation2 + $0x1d8] sm:$0xff]
        %v2646 = vld [vmem:[#allocation2 + $0x1e0] sm:$0xff]
        %v2647 = vld [vmem:[#allocation2 + $0x1e8] sm:$0xff]
        %v2648 = vld [vmem:[#allocation2 + $0x1f0] sm:$0xff]
        %v2649 = vld [vmem:[#allocation2 + $0x1f8] sm:$0xff]
        %v2650 = vld [vmem:[#allocation2 + $0x200] sm:$0xff]
        %v2651 = vld [vmem:[#allocation2 + $0x208] sm:$0xff]
        %v2652 = vld [vmem:[#allocation2 + $0x210] sm:$0xff]
        %v2653 = vld [vmem:[#allocation2 + $0x218] sm:$0xff]
        %v2654 = vld [vmem:[#allocation2 + $0x220] sm:$0xff]
        %v2655 = vld [vmem:[#allocation2 + $0x228] sm:$0xff]
        %v2656 = vld [vmem:[#allocation2 + $0x230] sm:$0xff]
        %v2657 = vld [vmem:[#allocation2 + $0x238] sm:$0xff]
        %v2658 = vld [vmem:[%s370] sm:$0xff]
        %v2659 = vld [vmem:[%s370 + $0x8] sm:$0xff]
        %v2660 = vld [vmem:[%s370 + $0x10] sm:$0xff]
        %v2661 = vld [vmem:[%s370 + $0x18] sm:$0xff]
        %v2662 = vld [vmem:[%s370 + $0x20] sm:$0xff]
        %v2663 = vld [vmem:[%s370 + $0x28] sm:$0xff]
        %v2664 = vld [vmem:[%s370 + $0x30] sm:$0xff]
        %v2665 = vld [vmem:[%s370 + $0x38] sm:$0xff]
        %v2666 = vld [vmem:[%s370 + $0x40] sm:$0xff]
        %v2667 = vld [vmem:[%s370 + $0x48] sm:$0xff]
        %v2668 = vld [vmem:[%s370 + $0x50] sm:$0xff]
        %v2669 = vld [vmem:[%s370 + $0x58] sm:$0xff]
        %v2670 = vld [vmem:[%s370 + $0x60] sm:$0xff]
        %v2671 = vld [vmem:[%s370 + $0x68] sm:$0xff]
        %v2672 = vld [vmem:[%s370 + $0x70] sm:$0xff]
        %v2673 = vld [vmem:[%s370 + $0x78] sm:$0xff]
        %v2674 = vld [vmem:[%s370 + $0x80] sm:$0xff]
        %v2675 = vld [vmem:[%s370 + $0x88] sm:$0xff]
        %v2676 = vld [vmem:[%s370 + $0x90] sm:$0xff]
        %v2677 = vld [vmem:[%s370 + $0x98] sm:$0xff]
        %v2678 = vld [vmem:[%s370 + $0xa0] sm:$0xff]
        %v2679 = vld [vmem:[%s370 + $0xa8] sm:$0xff]
        %v2680 = vld [vmem:[%s370 + $0xb0] sm:$0xff]
        %v2681 = vld [vmem:[%s370 + $0xb8] sm:$0xff]
        %v2682 = vld [vmem:[%s370 + $0xc0] sm:$0xff]
        %v2683 = vld [vmem:[%s370 + $0xc8] sm:$0xff]
        %v2684 = vld [vmem:[%s370 + $0xd0] sm:$0xff]
        %v2685 = vld [vmem:[%s370 + $0xd8] sm:$0xff]
        %v2686 = vld [vmem:[%s370 + $0xe0] sm:$0xff]
        %v2687 = vld [vmem:[%s370 + $0xe8] sm:$0xff]
        %v2688 = vld [vmem:[%s370 + $0xf0] sm:$0xff]
        %v2689 = vld [vmem:[%s370 + $0xf8] sm:$0xff]
        %v2690 = vld [vmem:[%s370 + $0x100] sm:$0xff]
        %v2691 = vld [vmem:[%s370 + $0x108] sm:$0xff]
        %v2692 = vld [vmem:[%s370 + $0x110] sm:$0xff]
        %v2693 = vld [vmem:[%s370 + $0x118] sm:$0xff]
        %v2694 = vld [vmem:[%s370 + $0x120] sm:$0xff]
        %v2695 = vld [vmem:[%s370 + $0x128] sm:$0xff]
        %v2696 = vld [vmem:[%s370 + $0x130] sm:$0xff]
        %v2697 = vld [vmem:[%s370 + $0x138] sm:$0xff]
        %v2698 = vld [vmem:[%s370 + $0x140] sm:$0xff]
        %v2699 = vld [vmem:[%s370 + $0x148] sm:$0xff]
        %v2700 = vld [vmem:[%s370 + $0x150] sm:$0xff]
        %v2701 = vld [vmem:[%s370 + $0x158] sm:$0xff]
        %v2702 = vld [vmem:[%s370 + $0x160] sm:$0xff]
        %v2703 = vld [vmem:[%s370 + $0x168] sm:$0xff]
        %v2704 = vld [vmem:[%s370 + $0x170] sm:$0xff]
        %v2705 = vld [vmem:[%s370 + $0x178] sm:$0xff]
        %v2706 = vld [vmem:[%s370 + $0x180] sm:$0xff]
        %v2707 = vld [vmem:[%s370 + $0x188] sm:$0xff]
        %v2708 = vld [vmem:[%s370 + $0x190] sm:$0xff]
        %v2709 = vld [vmem:[%s370 + $0x198] sm:$0xff]
        %v2710 = vld [vmem:[%s370 + $0x1a0] sm:$0xff]
        %v2711 = vld [vmem:[%s370 + $0x1a8] sm:$0xff]
        %v2712 = vld [vmem:[%s370 + $0x1b0] sm:$0xff]
        %v2713 = vld [vmem:[%s370 + $0x1b8] sm:$0xff]
        %v2714 = vld [vmem:[%s370 + $0x1c0] sm:$0xff]
        %v2715 = vld [vmem:[%s370 + $0x1c8] sm:$0xff]
        %v2716 = vld [vmem:[%s370 + $0x1d0] sm:$0xff]
        %v2717 = vld [vmem:[%s370 + $0x1d8] sm:$0xff]
        %v2718 = vld [vmem:[%s370 + $0x1e0] sm:$0xff]
        %v2719 = vld [vmem:[%s370 + $0x1e8] sm:$0xff]
        %v2720 = vld [vmem:[%s370 + $0x1f0] sm:$0xff]
        %v2721 = vld [vmem:[%s370 + $0x1f8] sm:$0xff]
        %v2722 = vld [vmem:[%s370 + $0x200] sm:$0xff]
        %v2723 = vld [vmem:[%s370 + $0x208] sm:$0xff]
        %v2724 = vld [vmem:[%s370 + $0x210] sm:$0xff]
        %v2725 = vld [vmem:[%s370 + $0x218] sm:$0xff]
        %v2726 = vld [vmem:[%s370 + $0x220] sm:$0xff]
        %v2727 = vld [vmem:[%s370 + $0x228] sm:$0xff]
        %v2728 = vld [vmem:[%s370 + $0x230] sm:$0xff]
        %v2729 = vld [vmem:[%s370 + $0x238] sm:$0xff]
        %v2730 = vld [vmem:[%s370 + $0x240] sm:$0xff]
        %v2731 = vld [vmem:[%s370 + $0x248] sm:$0xff]
        %v2732 = vld [vmem:[%s370 + $0x250] sm:$0xff]
        %v2733 = vld [vmem:[%s370 + $0x258] sm:$0xff]
        %v2734 = vld [vmem:[%s370 + $0x260] sm:$0xff]
        %v2735 = vld [vmem:[%s370 + $0x268] sm:$0xff]
        %v2736 = vld [vmem:[%s370 + $0x270] sm:$0xff]
        %v2737 = vld [vmem:[%s370 + $0x278] sm:$0xff]
        %v2738 = vld [vmem:[%s370 + $0x280] sm:$0xff]
        %v2739 = vld [vmem:[%s370 + $0x288] sm:$0xff]
        %v2740 = vld [vmem:[%s370 + $0x290] sm:$0xff]
        %v2741 = vld [vmem:[%s370 + $0x298] sm:$0xff]
        %v2742 = vld [vmem:[%s370 + $0x2a0] sm:$0xff]
        %v2743 = vld [vmem:[%s370 + $0x2a8] sm:$0xff]
        %v2744 = vld [vmem:[%s370 + $0x2b0] sm:$0xff]
        %v2745 = vld [vmem:[%s370 + $0x2b8] sm:$0xff]
        %v2746 = vld [vmem:[%s370 + $0x2c0] sm:$0xff]
        %v2747 = vld [vmem:[%s370 + $0x2c8] sm:$0xff]
        %v2748 = vld [vmem:[%s370 + $0x2d0] sm:$0xff]
        %v2749 = vld [vmem:[%s370 + $0x2d8] sm:$0xff]
        %v2750 = vld [vmem:[%s370 + $0x2e0] sm:$0xff]
        %v2751 = vld [vmem:[%s370 + $0x2e8] sm:$0xff]
        %v2752 = vld [vmem:[%s370 + $0x2f0] sm:$0xff]
        %v2753 = vld [vmem:[%s370 + $0x2f8] sm:$0xff]
        %v2754 = vld [vmem:[%s370 + $0x300] sm:$0xff]
        %v2755 = vld [vmem:[%s370 + $0x308] sm:$0xff]
        %v2756 = vld [vmem:[%s370 + $0x310] sm:$0xff]
        %v2757 = vld [vmem:[%s370 + $0x318] sm:$0xff]
        %v2758 = vld [vmem:[%s370 + $0x320] sm:$0xff]
        %v2759 = vld [vmem:[%s370 + $0x328] sm:$0xff]
        %v2760 = vld [vmem:[%s370 + $0x330] sm:$0xff]
        %v2761 = vld [vmem:[%s370 + $0x338] sm:$0xff]
        %v2762 = vld [vmem:[%s370 + $0x340] sm:$0xff]
        %v2763 = vld [vmem:[%s370 + $0x348] sm:$0xff]
        %v2764 = vld [vmem:[%s370 + $0x350] sm:$0xff]
        %v2765 = vld [vmem:[%s370 + $0x358] sm:$0xff]
        %v2766 = vld [vmem:[%s370 + $0x360] sm:$0xff]
        %v2767 = vld [vmem:[%s370 + $0x368] sm:$0xff]
        %v2768 = vld [vmem:[%s370 + $0x370] sm:$0xff]
        %v2769 = vld [vmem:[%s370 + $0x378] sm:$0xff]
        %v2770 = vld [vmem:[%s370 + $0x380] sm:$0xff]
        %v2771 = vld [vmem:[%s370 + $0x388] sm:$0xff]
        %v2772 = vld [vmem:[%s370 + $0x390] sm:$0xff]
        %v2773 = vld [vmem:[%s370 + $0x398] sm:$0xff]
        %v2774 = vld [vmem:[%s370 + $0x3a0] sm:$0xff]
        %v2775 = vld [vmem:[%s370 + $0x3a8] sm:$0xff]
        %v2776 = vld [vmem:[%s370 + $0x3b0] sm:$0xff]
        %v2777 = vld [vmem:[%s370 + $0x3b8] sm:$0xff]
        %v2778 = vld [vmem:[%s370 + $0x3c0] sm:$0xff]
        %v2779 = vld [vmem:[%s370 + $0x3c8] sm:$0xff]
        %v2780 = vld [vmem:[%s370 + $0x3d0] sm:$0xff]
        %v2781 = vld [vmem:[%s370 + $0x3d8] sm:$0xff]
        %v2782 = vld [vmem:[%s370 + $0x3e0] sm:$0xff]
        %v2783 = vld [vmem:[%s370 + $0x3e8] sm:$0xff]
        %v2784 = vld [vmem:[%s370 + $0x3f0] sm:$0xff]
        %v2785 = vld [vmem:[%s370 + $0x3f8] sm:$0xff]
        %v2786 = vld [vmem:[%s370 + $0x400] sm:$0xff]
        %v2787 = vld [vmem:[%s370 + $0x408] sm:$0xff]
        %v2788 = vld [vmem:[%s370 + $0x410] sm:$0xff]
        %v2789 = vld [vmem:[%s370 + $0x418] sm:$0xff]
        %v2790 = vld [vmem:[%s370 + $0x420] sm:$0xff]
        %v2791 = vld [vmem:[%s370 + $0x428] sm:$0xff]
        %v2792 = vld [vmem:[%s370 + $0x430] sm:$0xff]
        %v2793 = vld [vmem:[%s370 + $0x438] sm:$0xff]
        %v2794 = vld [vmem:[%s370 + $0x440] sm:$0xff]
        %v2795 = vld [vmem:[%s370 + $0x448] sm:$0xff]
        %v2796 = vld [vmem:[%s370 + $0x450] sm:$0xff]
        %v2797 = vld [vmem:[%s370 + $0x458] sm:$0xff]
        %v2798 = vld [vmem:[%s370 + $0x460] sm:$0xff]
        %v2799 = vld [vmem:[%s370 + $0x468] sm:$0xff]
        %v2800 = vld [vmem:[%s370 + $0x470] sm:$0xff]
        %v2801 = vld [vmem:[%s370 + $0x478] sm:$0xff]
        %v2802 = vld [vmem:[%s370 + $0x480] sm:$0xff]
        %v2803 = vld [vmem:[%s370 + $0x488] sm:$0xff]
        %v2804 = vld [vmem:[%s370 + $0x490] sm:$0xff]
        %v2805 = vld [vmem:[%s370 + $0x498] sm:$0xff]
        %v2806 = vld [vmem:[%s370 + $0x4a0] sm:$0xff]
        %v2807 = vld [vmem:[%s370 + $0x4a8] sm:$0xff]
        %v2808 = vld [vmem:[%s370 + $0x4b0] sm:$0xff]
        %v2809 = vld [vmem:[%s370 + $0x4b8] sm:$0xff]
        %v2810 = vld [vmem:[%s370 + $0x4c0] sm:$0xff]
        %v2811 = vld [vmem:[%s370 + $0x4c8] sm:$0xff]
        %v2812 = vld [vmem:[%s370 + $0x4d0] sm:$0xff]
        %v2813 = vld [vmem:[%s370 + $0x4d8] sm:$0xff]
        %v2814 = vld [vmem:[%s370 + $0x4e0] sm:$0xff]
        %v2815 = vld [vmem:[%s370 + $0x4e8] sm:$0xff]
        %v2816 = vld [vmem:[%s370 + $0x4f0] sm:$0xff]
        %v2817 = vld [vmem:[%s370 + $0x4f8] sm:$0xff]
        %v2818 = vld [vmem:[%s370 + $0x500] sm:$0xff]
        %v2819 = vld [vmem:[%s370 + $0x508] sm:$0xff]
        %v2820 = vld [vmem:[%s370 + $0x510] sm:$0xff]
        %v2821 = vld [vmem:[%s370 + $0x518] sm:$0xff]
        %v2822 = vld [vmem:[%s370 + $0x520] sm:$0xff]
        %v2823 = vld [vmem:[%s370 + $0x528] sm:$0xff]
        %v2824 = vld [vmem:[%s370 + $0x530] sm:$0xff]
        %v2825 = vld [vmem:[%s370 + $0x538] sm:$0xff]
        %v2826 = vld [vmem:[%s370 + $0x540] sm:$0xff]
        %v2827 = vld [vmem:[%s370 + $0x548] sm:$0xff]
        %v2828 = vld [vmem:[%s370 + $0x550] sm:$0xff]
        %v2829 = vld [vmem:[%s370 + $0x558] sm:$0xff]
        %v2830 = vld [vmem:[%s370 + $0x560] sm:$0xff]
        %v2831 = vld [vmem:[%s370 + $0x568] sm:$0xff]
        %v2832 = vld [vmem:[%s370 + $0x570] sm:$0xff]
        %v2833 = vld [vmem:[%s370 + $0x578] sm:$0xff]
        %v2834 = vld [vmem:[%s370 + $0x580] sm:$0xff]
        %v2835 = vld [vmem:[%s370 + $0x588] sm:$0xff]
        %v2836 = vld [vmem:[%s370 + $0x590] sm:$0xff]
        %v2837 = vld [vmem:[%s370 + $0x598] sm:$0xff]
        %v2838 = vld [vmem:[%s370 + $0x5a0] sm:$0xff]
        %v2839 = vld [vmem:[%s370 + $0x5a8] sm:$0xff]
        %v2840 = vld [vmem:[%s370 + $0x5b0] sm:$0xff]
        %v2841 = vld [vmem:[%s370 + $0x5b8] sm:$0xff]
        %v2842 = vld [vmem:[%s370 + $0x5c0] sm:$0xff]
        %v2843 = vld [vmem:[%s370 + $0x5c8] sm:$0xff]
        %v2844 = vld [vmem:[%s370 + $0x5d0] sm:$0xff]
        %v2845 = vld [vmem:[%s370 + $0x5d8] sm:$0xff]
        %v2846 = vld [vmem:[%s370 + $0x5e0] sm:$0xff]
        %v2847 = vld [vmem:[%s370 + $0x5e8] sm:$0xff]
        %v2848 = vld [vmem:[%s370 + $0x5f0] sm:$0xff]
        %v2849 = vld [vmem:[%s370 + $0x5f8] sm:$0xff]
        %v2850 = vld [vmem:[%s370 + $0x600] sm:$0xff]
        %v2851 = vld [vmem:[%s370 + $0x608] sm:$0xff]
        %v2852 = vld [vmem:[%s370 + $0x610] sm:$0xff]
        %v2853 = vld [vmem:[%s370 + $0x618] sm:$0xff]
        %v2854 = vld [vmem:[%s370 + $0x620] sm:$0xff]
        %v2855 = vld [vmem:[%s370 + $0x628] sm:$0xff]
        %v2856 = vld [vmem:[%s370 + $0x630] sm:$0xff]
        %v2857 = vld [vmem:[%s370 + $0x638] sm:$0xff]
        %v2858 = vld [vmem:[%s370 + $0x640] sm:$0xff]
        %v2859 = vld [vmem:[%s370 + $0x648] sm:$0xff]
        %v2860 = vld [vmem:[%s370 + $0x650] sm:$0xff]
        %v2861 = vld [vmem:[%s370 + $0x658] sm:$0xff]
        %v2862 = vld [vmem:[%s370 + $0x660] sm:$0xff]
        %v2863 = vld [vmem:[%s370 + $0x668] sm:$0xff]
        %v2864 = vld [vmem:[%s370 + $0x670] sm:$0xff]
        %v2865 = vld [vmem:[%s370 + $0x678] sm:$0xff]
        %v2866 = vld [vmem:[%s370 + $0x680] sm:$0xff]
        %v2867 = vld [vmem:[%s370 + $0x688] sm:$0xff]
        %v2868 = vld [vmem:[%s370 + $0x690] sm:$0xff]
        %v2869 = vld [vmem:[%s370 + $0x698] sm:$0xff]
        %v2870 = vld [vmem:[%s370 + $0x6a0] sm:$0xff]
        %v2871 = vld [vmem:[%s370 + $0x6a8] sm:$0xff]
        %v2872 = vld [vmem:[%s370 + $0x6b0] sm:$0xff]
        %v2873 = vld [vmem:[%s370 + $0x6b8] sm:$0xff]
        %v2874 = vld [vmem:[%s370 + $0x6c0] sm:$0xff]
        %v2875 = vld [vmem:[%s370 + $0x6c8] sm:$0xff]
        %v2876 = vld [vmem:[%s370 + $0x6d0] sm:$0xff]
        %v2877 = vld [vmem:[%s370 + $0x6d8] sm:$0xff]
        %v2878 = vld [vmem:[%s370 + $0x6e0] sm:$0xff]
        %v2879 = vld [vmem:[%s370 + $0x6e8] sm:$0xff]
        %v2880 = vld [vmem:[%s370 + $0x6f0] sm:$0xff]
        %v2881 = vld [vmem:[%s370 + $0x6f8] sm:$0xff]
        %v2882 = vld [vmem:[%s370 + $0x700] sm:$0xff]
        %v2883 = vld [vmem:[%s370 + $0x708] sm:$0xff]
        %v2884 = vld [vmem:[%s370 + $0x710] sm:$0xff]
        %v2885 = vld [vmem:[%s370 + $0x718] sm:$0xff]
        %v2886 = vld [vmem:[%s370 + $0x720] sm:$0xff]
        %v2887 = vld [vmem:[%s370 + $0x728] sm:$0xff]
        %v2888 = vld [vmem:[%s370 + $0x730] sm:$0xff]
        %v2889 = vld [vmem:[%s370 + $0x738] sm:$0xff]
        %v2890 = vld [vmem:[%s370 + $0x740] sm:$0xff]
        %v2891 = vld [vmem:[%s370 + $0x748] sm:$0xff]
        %v2892 = vld [vmem:[%s370 + $0x750] sm:$0xff]
        %v2893 = vld [vmem:[%s370 + $0x758] sm:$0xff]
        %v2894 = vld [vmem:[%s370 + $0x760] sm:$0xff]
        %v2895 = vld [vmem:[%s370 + $0x768] sm:$0xff]
        %v2896 = vld [vmem:[%s370 + $0x770] sm:$0xff]
        %v2897 = vld [vmem:[%s370 + $0x778] sm:$0xff]
        %v2898 = vld [vmem:[%s370 + $0x780] sm:$0xff]
        %v2899 = vld [vmem:[%s370 + $0x788] sm:$0xff]
        %v2900 = vld [vmem:[%s370 + $0x790] sm:$0xff]
        %v2901 = vld [vmem:[%s370 + $0x798] sm:$0xff]
        %v2902 = vld [vmem:[%s370 + $0x7a0] sm:$0xff]
        %v2903 = vld [vmem:[%s370 + $0x7a8] sm:$0xff]
        %v2904 = vld [vmem:[%s370 + $0x7b0] sm:$0xff]
        %v2905 = vld [vmem:[%s370 + $0x7b8] sm:$0xff]
        %v2906 = vld [vmem:[%s370 + $0x7c0] sm:$0xff]
        %v2907 = vld [vmem:[%s370 + $0x7c8] sm:$0xff]
        %v2908 = vld [vmem:[%s370 + $0x7d0] sm:$0xff]
        %v2909 = vld [vmem:[%s370 + $0x7d8] sm:$0xff]
        %v2910 = vld [vmem:[%s370 + $0x7e0] sm:$0xff]
        %v2911 = vld [vmem:[%s370 + $0x7e8] sm:$0xff]
        %v2912 = vld [vmem:[%s370 + $0x7f0] sm:$0xff]
        %v2913 = vld [vmem:[%s370 + $0x7f8] sm:$0xff]
        %v2914 = vld [vmem:[%s370 + $0x800] sm:$0xff]
        %v2915 = vld [vmem:[%s370 + $0x808] sm:$0xff]
        %v2916 = vld [vmem:[%s370 + $0x810] sm:$0xff]
        %v2917 = vld [vmem:[%s370 + $0x818] sm:$0xff]
        %v2918 = vld [vmem:[%s370 + $0x820] sm:$0xff]
        %v2919 = vld [vmem:[%s370 + $0x828] sm:$0xff]
        %v2920 = vld [vmem:[%s370 + $0x830] sm:$0xff]
        %v2921 = vld [vmem:[%s370 + $0x838] sm:$0xff]
        %v2922 = vld [vmem:[%s370 + $0x840] sm:$0xff]
        %v2923 = vld [vmem:[%s370 + $0x848] sm:$0xff]
        %v2924 = vld [vmem:[%s370 + $0x850] sm:$0xff]
        %v2925 = vld [vmem:[%s370 + $0x858] sm:$0xff]
        %v2926 = vld [vmem:[%s370 + $0x860] sm:$0xff]
        %v2927 = vld [vmem:[%s370 + $0x868] sm:$0xff]
        %v2928 = vld [vmem:[%s370 + $0x870] sm:$0xff]
        %v2929 = vld [vmem:[%s370 + $0x878] sm:$0xff]
        %v2930 = vld [vmem:[%s370 + $0x880] sm:$0xff]
        %v2931 = vld [vmem:[%s370 + $0x888] sm:$0xff]
        %v2932 = vld [vmem:[%s370 + $0x890] sm:$0xff]
        %v2933 = vld [vmem:[%s370 + $0x898] sm:$0xff]
        %v2934 = vld [vmem:[%s370 + $0x8a0] sm:$0xff]
        %v2935 = vld [vmem:[%s370 + $0x8a8] sm:$0xff]
        %v2936 = vld [vmem:[%s370 + $0x8b0] sm:$0xff]
        %v2937 = vld [vmem:[%s370 + $0x8b8] sm:$0xff]
        %v2938 = vld [vmem:[%s370 + $0x8c0] sm:$0xff]
        %v2939 = vld [vmem:[%s370 + $0x8c8] sm:$0xff]
        %v2940 = vld [vmem:[%s370 + $0x8d0] sm:$0xff]
        %v2941 = vld [vmem:[%s370 + $0x8d8] sm:$0xff]
        %v2942 = vld [vmem:[%s370 + $0x8e0] sm:$0xff]
        %v2943 = vld [vmem:[%s370 + $0x8e8] sm:$0xff]
        %v2944 = vld [vmem:[%s370 + $0x8f0] sm:$0xff]
        %v2945 = vld [vmem:[%s370 + $0x8f8] sm:$0xff]
        %v2946 = vld [vmem:[%s379] sm:$0x3f]
        %v2948 = vlaneseq
        %v2949 = vshrl.u32 %v2948, 7
        %v2950 = vsub.s32 0, %v2949
        %v2951 = vrot.slane %v2946, %v2950
        %v2952 = vlaneseq
        %v2953 = vshrl.u32 %v2952, 7
        %v2954 = vsub.s32 1, %v2953
        %v2955 = vrot.slane %v2946, %v2954
        %v2956 = vlaneseq
        %v2957 = vshrl.u32 %v2956, 7
        %v2958 = vsub.s32 2, %v2957
        %v2959 = vrot.slane %v2946, %v2958
        %v2960 = vlaneseq
        %v2961 = vshrl.u32 %v2960, 7
        %v2962 = vsub.s32 3, %v2961
        %v2963 = vrot.slane %v2946, %v2962
        %v2964 = vlaneseq
        %v2965 = vshrl.u32 %v2964, 7
        %v2966 = vsub.s32 4, %v2965
        %v2967 = vrot.slane %v2946, %v2966
        %v2968 = vlaneseq
        %v2969 = vshrl.u32 %v2968, 7
        %v2970 = vsub.s32 5, %v2969
        %v2971 = vrot.slane %v2946, %v2970
        %v3050 = vunpack.c.l.b16 %v2586
        %v3051 = vunpack.c.h.b16 %v2586
        %v3052 = vunpack.c.l.b16 %v2587
        %v3053 = vunpack.c.h.b16 %v2587
        %v3054 = vunpack.c.l.b16 %v2588
        %v3055 = vunpack.c.h.b16 %v2588
        %v3056 = vunpack.c.l.b16 %v2589
        %v3057 = vunpack.c.h.b16 %v2589
        %v3058 = vunpack.c.l.b16 %v2590
        %v3059 = vunpack.c.h.b16 %v2590
        %v3060 = vunpack.c.l.b16 %v2591
        %v3061 = vunpack.c.h.b16 %v2591
        %v3062 = vunpack.c.l.b16 %v2592
        %v3063 = vunpack.c.h.b16 %v2592
        %v3064 = vunpack.c.l.b16 %v2593
        %v3065 = vunpack.c.h.b16 %v2593
        %v3066 = vunpack.c.l.b16 %v2594
        %v3067 = vunpack.c.h.b16 %v2594
        %v3068 = vunpack.c.l.b16 %v2595
        %v3069 = vunpack.c.h.b16 %v2595
        %v3070 = vunpack.c.l.b16 %v2596
        %v3071 = vunpack.c.h.b16 %v2596
        %v3072 = vunpack.c.l.b16 %v2597
        %v3073 = vunpack.c.h.b16 %v2597
        %v3074 = vunpack.c.l.b16 %v2598
        %v3075 = vunpack.c.h.b16 %v2598
        %v3076 = vunpack.c.l.b16 %v2599
        %v3077 = vunpack.c.h.b16 %v2599
        %v3078 = vunpack.c.l.b16 %v2600
        %v3079 = vunpack.c.h.b16 %v2600
        %v3080 = vunpack.c.l.b16 %v2601
        %v3081 = vunpack.c.h.b16 %v2601
        %v3082 = vunpack.c.l.b16 %v2602
        %v3083 = vunpack.c.h.b16 %v2602
        %v3084 = vunpack.c.l.b16 %v2603
        %v3085 = vunpack.c.h.b16 %v2603
        %v3086 = vunpack.c.l.b16 %v2604
        %v3087 = vunpack.c.h.b16 %v2604
        %v3088 = vunpack.c.l.b16 %v2605
        %v3089 = vunpack.c.h.b16 %v2605
        %v3090 = vunpack.c.l.b16 %v2606
        %v3091 = vunpack.c.h.b16 %v2606
        %v3092 = vunpack.c.l.b16 %v2607
        %v3093 = vunpack.c.h.b16 %v2607
        %v3094 = vunpack.c.l.b16 %v2608
        %v3095 = vunpack.c.h.b16 %v2608
        %v3096 = vunpack.c.l.b16 %v2609
        %v3097 = vunpack.c.h.b16 %v2609
        %v3098 = vunpack.c.l.b16 %v2610
        %v3099 = vunpack.c.h.b16 %v2610
        %v3100 = vunpack.c.l.b16 %v2611
        %v3101 = vunpack.c.h.b16 %v2611
        %v3102 = vunpack.c.l.b16 %v2612
        %v3103 = vunpack.c.h.b16 %v2612
        %v3104 = vunpack.c.l.b16 %v2613
        %v3105 = vunpack.c.h.b16 %v2613
        %v3106 = vunpack.c.l.b16 %v2614
        %v3107 = vunpack.c.h.b16 %v2614
        %v3108 = vunpack.c.l.b16 %v2615
        %v3109 = vunpack.c.h.b16 %v2615
        %v3110 = vunpack.c.l.b16 %v2616
        %v3111 = vunpack.c.h.b16 %v2616
        %v3112 = vunpack.c.l.b16 %v2617
        %v3113 = vunpack.c.h.b16 %v2617
        %v3114 = vunpack.c.l.b16 %v2618
        %v3115 = vunpack.c.h.b16 %v2618
        %v3116 = vunpack.c.l.b16 %v2619
        %v3117 = vunpack.c.h.b16 %v2619
        %v3118 = vunpack.c.l.b16 %v2620
        %v3119 = vunpack.c.h.b16 %v2620
        %v3120 = vunpack.c.l.b16 %v2621
        %v3121 = vunpack.c.h.b16 %v2621
        %v3122 = vunpack.c.l.b16 %v2622
        %v3123 = vunpack.c.h.b16 %v2622
        %v3124 = vunpack.c.l.b16 %v2623
        %v3125 = vunpack.c.h.b16 %v2623
        %v3126 = vunpack.c.l.b16 %v2624
        %v3127 = vunpack.c.h.b16 %v2624
        %v3128 = vunpack.c.l.b16 %v2625
        %v3129 = vunpack.c.h.b16 %v2625
        %v3130 = vunpack.c.l.b16 %v2626
        %v3131 = vunpack.c.h.b16 %v2626
        %v3132 = vunpack.c.l.b16 %v2627
        %v3133 = vunpack.c.h.b16 %v2627
        %v3134 = vunpack.c.l.b16 %v2628
        %v3135 = vunpack.c.h.b16 %v2628
        %v3136 = vunpack.c.l.b16 %v2629
        %v3137 = vunpack.c.h.b16 %v2629
        %v3138 = vunpack.c.l.b16 %v2630
        %v3139 = vunpack.c.h.b16 %v2630
        %v3140 = vunpack.c.l.b16 %v2631
        %v3141 = vunpack.c.h.b16 %v2631
        %v3142 = vunpack.c.l.b16 %v2632
        %v3143 = vunpack.c.h.b16 %v2632
        %v3144 = vunpack.c.l.b16 %v2633
        %v3145 = vunpack.c.h.b16 %v2633
        %v3146 = vunpack.c.l.b16 %v2634
        %v3147 = vunpack.c.h.b16 %v2634
        %v3148 = vunpack.c.l.b16 %v2635
        %v3149 = vunpack.c.h.b16 %v2635
        %v3150 = vunpack.c.l.b16 %v2636
        %v3151 = vunpack.c.h.b16 %v2636
        %v3152 = vunpack.c.l.b16 %v2637
        %v3153 = vunpack.c.h.b16 %v2637
        %v3154 = vunpack.c.l.b16 %v2638
        %v3155 = vunpack.c.h.b16 %v2638
        %v3156 = vunpack.c.l.b16 %v2639
        %v3157 = vunpack.c.h.b16 %v2639
        %v3158 = vunpack.c.l.b16 %v2640
        %v3159 = vunpack.c.h.b16 %v2640
        %v3160 = vunpack.c.l.b16 %v2641
        %v3161 = vunpack.c.h.b16 %v2641
        %v3162 = vunpack.c.l.b16 %v2642
        %v3163 = vunpack.c.h.b16 %v2642
        %v3164 = vunpack.c.l.b16 %v2643
        %v3165 = vunpack.c.h.b16 %v2643
        %v3166 = vunpack.c.l.b16 %v2644
        %v3167 = vunpack.c.h.b16 %v2644
        %v3168 = vunpack.c.l.b16 %v2645
        %v3169 = vunpack.c.h.b16 %v2645
        %v3170 = vunpack.c.l.b16 %v2646
        %v3171 = vunpack.c.h.b16 %v2646
        %v3172 = vunpack.c.l.b16 %v2647
        %v3173 = vunpack.c.h.b16 %v2647
        %v3174 = vunpack.c.l.b16 %v2648
        %v3175 = vunpack.c.h.b16 %v2648
        %v3176 = vunpack.c.l.b16 %v2649
        %v3177 = vunpack.c.h.b16 %v2649
        %v3178 = vunpack.c.l.b16 %v2650
        %v3179 = vunpack.c.h.b16 %v2650
        %v3180 = vunpack.c.l.b16 %v2651
        %v3181 = vunpack.c.h.b16 %v2651
        %v3182 = vunpack.c.l.b16 %v2652
        %v3183 = vunpack.c.h.b16 %v2652
        %v3184 = vunpack.c.l.b16 %v2653
        %v3185 = vunpack.c.h.b16 %v2653
        %v3186 = vunpack.c.l.b16 %v2654
        %v3187 = vunpack.c.h.b16 %v2654
        %v3188 = vunpack.c.l.b16 %v2655
        %v3189 = vunpack.c.h.b16 %v2655
        %v3190 = vunpack.c.l.b16 %v2656
        %v3191 = vunpack.c.h.b16 %v2656
        %v3192 = vunpack.c.l.b16 %v2657
        %v3193 = vunpack.c.h.b16 %v2657
        %v3194 = vpack.c.b16 %v3056, %v3050
        %v3195 = vpack.c.b16 %v3057, %v3051
        %v3196 = vpack.c.b16 %v3058, %v3052
        %v3197 = vpack.c.b16 %v3059, %v3053
        %v3198 = vpack.c.b16 %v3060, %v3054
        %v3199 = vpack.c.b16 %v3061, %v3055
        %v3200 = vpack.c.b16 %v3068, %v3062
        %v3201 = vpack.c.b16 %v3069, %v3063
        %v3202 = vpack.c.b16 %v3070, %v3064
        %v3203 = vpack.c.b16 %v3071, %v3065
        %v3204 = vpack.c.b16 %v3072, %v3066
        %v3205 = vpack.c.b16 %v3073, %v3067
        %v3206 = vpack.c.b16 %v3080, %v3074
        %v3207 = vpack.c.b16 %v3081, %v3075
        %v3208 = vpack.c.b16 %v3082, %v3076
        %v3209 = vpack.c.b16 %v3083, %v3077
        %v3210 = vpack.c.b16 %v3084, %v3078
        %v3211 = vpack.c.b16 %v3085, %v3079
        %v3212 = vpack.c.b16 %v3092, %v3086
        %v3213 = vpack.c.b16 %v3093, %v3087
        %v3214 = vpack.c.b16 %v3094, %v3088
        %v3215 = vpack.c.b16 %v3095, %v3089
        %v3216 = vpack.c.b16 %v3096, %v3090
        %v3217 = vpack.c.b16 %v3097, %v3091
        %v3218 = vpack.c.b16 %v3104, %v3098
        %v3219 = vpack.c.b16 %v3105, %v3099
        %v3220 = vpack.c.b16 %v3106, %v3100
        %v3221 = vpack.c.b16 %v3107, %v3101
        %v3222 = vpack.c.b16 %v3108, %v3102
        %v3223 = vpack.c.b16 %v3109, %v3103
        %v3224 = vpack.c.b16 %v3116, %v3110
        %v3225 = vpack.c.b16 %v3117, %v3111
        %v3226 = vpack.c.b16 %v3118, %v3112
        %v3227 = vpack.c.b16 %v3119, %v3113
        %v3228 = vpack.c.b16 %v3120, %v3114
        %v3229 = vpack.c.b16 %v3121, %v3115
        %v3230 = vpack.c.b16 %v3128, %v3122
        %v3231 = vpack.c.b16 %v3129, %v3123
        %v3232 = vpack.c.b16 %v3130, %v3124
        %v3233 = vpack.c.b16 %v3131, %v3125
        %v3234 = vpack.c.b16 %v3132, %v3126
        %v3235 = vpack.c.b16 %v3133, %v3127
        %v3236 = vpack.c.b16 %v3140, %v3134
        %v3237 = vpack.c.b16 %v3141, %v3135
        %v3238 = vpack.c.b16 %v3142, %v3136
        %v3239 = vpack.c.b16 %v3143, %v3137
        %v3240 = vpack.c.b16 %v3144, %v3138
        %v3241 = vpack.c.b16 %v3145, %v3139
        %v3242 = vpack.c.b16 %v3152, %v3146
        %v3243 = vpack.c.b16 %v3153, %v3147
        %v3244 = vpack.c.b16 %v3154, %v3148
        %v3245 = vpack.c.b16 %v3155, %v3149
        %v3246 = vpack.c.b16 %v3156, %v3150
        %v3247 = vpack.c.b16 %v3157, %v3151
        %v3248 = vpack.c.b16 %v3164, %v3158
        %v3249 = vpack.c.b16 %v3165, %v3159
        %v3250 = vpack.c.b16 %v3166, %v3160
        %v3251 = vpack.c.b16 %v3167, %v3161
        %v3252 = vpack.c.b16 %v3168, %v3162
        %v3253 = vpack.c.b16 %v3169, %v3163
        %v3254 = vpack.c.b16 %v3176, %v3170
        %v3255 = vpack.c.b16 %v3177, %v3171
        %v3256 = vpack.c.b16 %v3178, %v3172
        %v3257 = vpack.c.b16 %v3179, %v3173
        %v3258 = vpack.c.b16 %v3180, %v3174
        %v3259 = vpack.c.b16 %v3181, %v3175
        %v3260 = vpack.c.b16 %v3188, %v3182
        %v3261 = vpack.c.b16 %v3189, %v3183
        %v3262 = vpack.c.b16 %v3190, %v3184
        %v3263 = vpack.c.b16 %v3191, %v3185
        %v3264 = vpack.c.b16 %v3192, %v3186
        %v3265 = vpack.c.b16 %v3193, %v3187
        %v3626 = vunpack.c.l.b16 %v2658
        %v3627 = vunpack.c.h.b16 %v2658
        %v3628 = vunpack.c.l.b16 %v2659
        %v3629 = vunpack.c.h.b16 %v2659
        %v3630 = vunpack.c.l.b16 %v2660
        %v3631 = vunpack.c.h.b16 %v2660
        %v3632 = vunpack.c.l.b16 %v2661
        %v3633 = vunpack.c.h.b16 %v2661
        %v3634 = vunpack.c.l.b16 %v2662
        %v3635 = vunpack.c.h.b16 %v2662
        %v3636 = vunpack.c.l.b16 %v2663
        %v3637 = vunpack.c.h.b16 %v2663
        %v3638 = vunpack.c.l.b16 %v2664
        %v3639 = vunpack.c.h.b16 %v2664
        %v3640 = vunpack.c.l.b16 %v2665
        %v3641 = vunpack.c.h.b16 %v2665
        %v3642 = vunpack.c.l.b16 %v2666
        %v3643 = vunpack.c.h.b16 %v2666
        %v3644 = vunpack.c.l.b16 %v2667
        %v3645 = vunpack.c.h.b16 %v2667
        %v3646 = vunpack.c.l.b16 %v2668
        %v3647 = vunpack.c.h.b16 %v2668
        %v3648 = vunpack.c.l.b16 %v2669
        %v3649 = vunpack.c.h.b16 %v2669
        %v3650 = vunpack.c.l.b16 %v2670
        %v3651 = vunpack.c.h.b16 %v2670
        %v3652 = vunpack.c.l.b16 %v2671
        %v3653 = vunpack.c.h.b16 %v2671
        %v3654 = vunpack.c.l.b16 %v2672
        %v3655 = vunpack.c.h.b16 %v2672
        %v3656 = vunpack.c.l.b16 %v2673
        %v3657 = vunpack.c.h.b16 %v2673
        %v3658 = vunpack.c.l.b16 %v2674
        %v3659 = vunpack.c.h.b16 %v2674
        %v3660 = vunpack.c.l.b16 %v2675
        %v3661 = vunpack.c.h.b16 %v2675
        %v3662 = vunpack.c.l.b16 %v2676
        %v3663 = vunpack.c.h.b16 %v2676
        %v3664 = vunpack.c.l.b16 %v2677
        %v3665 = vunpack.c.h.b16 %v2677
        %v3666 = vunpack.c.l.b16 %v2678
        %v3667 = vunpack.c.h.b16 %v2678
        %v3668 = vunpack.c.l.b16 %v2679
        %v3669 = vunpack.c.h.b16 %v2679
        %v3670 = vunpack.c.l.b16 %v2680
        %v3671 = vunpack.c.h.b16 %v2680
        %v3672 = vunpack.c.l.b16 %v2681
        %v3673 = vunpack.c.h.b16 %v2681
        %v3674 = vunpack.c.l.b16 %v2682
        %v3675 = vunpack.c.h.b16 %v2682
        %v3676 = vunpack.c.l.b16 %v2683
        %v3677 = vunpack.c.h.b16 %v2683
        %v3678 = vunpack.c.l.b16 %v2684
        %v3679 = vunpack.c.h.b16 %v2684
        %v3680 = vunpack.c.l.b16 %v2685
        %v3681 = vunpack.c.h.b16 %v2685
        %v3682 = vunpack.c.l.b16 %v2686
        %v3683 = vunpack.c.h.b16 %v2686
        %v3684 = vunpack.c.l.b16 %v2687
        %v3685 = vunpack.c.h.b16 %v2687
        %v3686 = vunpack.c.l.b16 %v2688
        %v3687 = vunpack.c.h.b16 %v2688
        %v3688 = vunpack.c.l.b16 %v2689
        %v3689 = vunpack.c.h.b16 %v2689
        %v3690 = vunpack.c.l.b16 %v2690
        %v3691 = vunpack.c.h.b16 %v2690
        %v3692 = vunpack.c.l.b16 %v2691
        %v3693 = vunpack.c.h.b16 %v2691
        %v3694 = vunpack.c.l.b16 %v2692
        %v3695 = vunpack.c.h.b16 %v2692
        %v3696 = vunpack.c.l.b16 %v2693
        %v3697 = vunpack.c.h.b16 %v2693
        %v3698 = vunpack.c.l.b16 %v2694
        %v3699 = vunpack.c.h.b16 %v2694
        %v3700 = vunpack.c.l.b16 %v2695
        %v3701 = vunpack.c.h.b16 %v2695
        %v3702 = vunpack.c.l.b16 %v2696
        %v3703 = vunpack.c.h.b16 %v2696
        %v3704 = vunpack.c.l.b16 %v2697
        %v3705 = vunpack.c.h.b16 %v2697
        %v3706 = vunpack.c.l.b16 %v2698
        %v3707 = vunpack.c.h.b16 %v2698
        %v3708 = vunpack.c.l.b16 %v2699
        %v3709 = vunpack.c.h.b16 %v2699
        %v3710 = vunpack.c.l.b16 %v2700
        %v3711 = vunpack.c.h.b16 %v2700
        %v3712 = vunpack.c.l.b16 %v2701
        %v3713 = vunpack.c.h.b16 %v2701
        %v3714 = vunpack.c.l.b16 %v2702
        %v3715 = vunpack.c.h.b16 %v2702
        %v3716 = vunpack.c.l.b16 %v2703
        %v3717 = vunpack.c.h.b16 %v2703
        %v3718 = vunpack.c.l.b16 %v2704
        %v3719 = vunpack.c.h.b16 %v2704
        %v3720 = vunpack.c.l.b16 %v2705
        %v3721 = vunpack.c.h.b16 %v2705
        %v3722 = vunpack.c.l.b16 %v2706
        %v3723 = vunpack.c.h.b16 %v2706
        %v3724 = vunpack.c.l.b16 %v2707
        %v3725 = vunpack.c.h.b16 %v2707
        %v3726 = vunpack.c.l.b16 %v2708
        %v3727 = vunpack.c.h.b16 %v2708
        %v3728 = vunpack.c.l.b16 %v2709
        %v3729 = vunpack.c.h.b16 %v2709
        %v3730 = vunpack.c.l.b16 %v2710
        %v3731 = vunpack.c.h.b16 %v2710
        %v3732 = vunpack.c.l.b16 %v2711
        %v3733 = vunpack.c.h.b16 %v2711
        %v3734 = vunpack.c.l.b16 %v2712
        %v3735 = vunpack.c.h.b16 %v2712
        %v3736 = vunpack.c.l.b16 %v2713
        %v3737 = vunpack.c.h.b16 %v2713
        %v3738 = vunpack.c.l.b16 %v2714
        %v3739 = vunpack.c.h.b16 %v2714
        %v3740 = vunpack.c.l.b16 %v2715
        %v3741 = vunpack.c.h.b16 %v2715
        %v3742 = vunpack.c.l.b16 %v2716
        %v3743 = vunpack.c.h.b16 %v2716
        %v3744 = vunpack.c.l.b16 %v2717
        %v3745 = vunpack.c.h.b16 %v2717
        %v3746 = vunpack.c.l.b16 %v2718
        %v3747 = vunpack.c.h.b16 %v2718
        %v3748 = vunpack.c.l.b16 %v2719
        %v3749 = vunpack.c.h.b16 %v2719
        %v3750 = vunpack.c.l.b16 %v2720
        %v3751 = vunpack.c.h.b16 %v2720
        %v3752 = vunpack.c.l.b16 %v2721
        %v3753 = vunpack.c.h.b16 %v2721
        %v3754 = vunpack.c.l.b16 %v2722
        %v3755 = vunpack.c.h.b16 %v2722
        %v3756 = vunpack.c.l.b16 %v2723
        %v3757 = vunpack.c.h.b16 %v2723
        %v3758 = vunpack.c.l.b16 %v2724
        %v3759 = vunpack.c.h.b16 %v2724
        %v3760 = vunpack.c.l.b16 %v2725
        %v3761 = vunpack.c.h.b16 %v2725
        %v3762 = vunpack.c.l.b16 %v2726
        %v3763 = vunpack.c.h.b16 %v2726
        %v3764 = vunpack.c.l.b16 %v2727
        %v3765 = vunpack.c.h.b16 %v2727
        %v3766 = vunpack.c.l.b16 %v2728
        %v3767 = vunpack.c.h.b16 %v2728
        %v3768 = vunpack.c.l.b16 %v2729
        %v3769 = vunpack.c.h.b16 %v2729
        %v3770 = vunpack.c.l.b16 %v2730
        %v3771 = vunpack.c.h.b16 %v2730
        %v3772 = vunpack.c.l.b16 %v2731
        %v3773 = vunpack.c.h.b16 %v2731
        %v3774 = vunpack.c.l.b16 %v2732
        %v3775 = vunpack.c.h.b16 %v2732
        %v3776 = vunpack.c.l.b16 %v2733
        %v3777 = vunpack.c.h.b16 %v2733
        %v3778 = vunpack.c.l.b16 %v2734
        %v3779 = vunpack.c.h.b16 %v2734
        %v3780 = vunpack.c.l.b16 %v2735
        %v3781 = vunpack.c.h.b16 %v2735
        %v3782 = vunpack.c.l.b16 %v2736
        %v3783 = vunpack.c.h.b16 %v2736
        %v3784 = vunpack.c.l.b16 %v2737
        %v3785 = vunpack.c.h.b16 %v2737
        %v3786 = vunpack.c.l.b16 %v2738
        %v3787 = vunpack.c.h.b16 %v2738
        %v3788 = vunpack.c.l.b16 %v2739
        %v3789 = vunpack.c.h.b16 %v2739
        %v3790 = vunpack.c.l.b16 %v2740
        %v3791 = vunpack.c.h.b16 %v2740
        %v3792 = vunpack.c.l.b16 %v2741
        %v3793 = vunpack.c.h.b16 %v2741
        %v3794 = vunpack.c.l.b16 %v2742
        %v3795 = vunpack.c.h.b16 %v2742
        %v3796 = vunpack.c.l.b16 %v2743
        %v3797 = vunpack.c.h.b16 %v2743
        %v3798 = vunpack.c.l.b16 %v2744
        %v3799 = vunpack.c.h.b16 %v2744
        %v3800 = vunpack.c.l.b16 %v2745
        %v3801 = vunpack.c.h.b16 %v2745
        %v3802 = vunpack.c.l.b16 %v2746
        %v3803 = vunpack.c.h.b16 %v2746
        %v3804 = vunpack.c.l.b16 %v2747
        %v3805 = vunpack.c.h.b16 %v2747
        %v3806 = vunpack.c.l.b16 %v2748
        %v3807 = vunpack.c.h.b16 %v2748
        %v3808 = vunpack.c.l.b16 %v2749
        %v3809 = vunpack.c.h.b16 %v2749
        %v3810 = vunpack.c.l.b16 %v2750
        %v3811 = vunpack.c.h.b16 %v2750
        %v3812 = vunpack.c.l.b16 %v2751
        %v3813 = vunpack.c.h.b16 %v2751
        %v3814 = vunpack.c.l.b16 %v2752
        %v3815 = vunpack.c.h.b16 %v2752
        %v3816 = vunpack.c.l.b16 %v2753
        %v3817 = vunpack.c.h.b16 %v2753
        %v3818 = vunpack.c.l.b16 %v2754
        %v3819 = vunpack.c.h.b16 %v2754
        %v3820 = vunpack.c.l.b16 %v2755
        %v3821 = vunpack.c.h.b16 %v2755
        %v3822 = vunpack.c.l.b16 %v2756
        %v3823 = vunpack.c.h.b16 %v2756
        %v3824 = vunpack.c.l.b16 %v2757
        %v3825 = vunpack.c.h.b16 %v2757
        %v3826 = vunpack.c.l.b16 %v2758
        %v3827 = vunpack.c.h.b16 %v2758
        %v3828 = vunpack.c.l.b16 %v2759
        %v3829 = vunpack.c.h.b16 %v2759
        %v3830 = vunpack.c.l.b16 %v2760
        %v3831 = vunpack.c.h.b16 %v2760
        %v3832 = vunpack.c.l.b16 %v2761
        %v3833 = vunpack.c.h.b16 %v2761
        %v3834 = vunpack.c.l.b16 %v2762
        %v3835 = vunpack.c.h.b16 %v2762
        %v3836 = vunpack.c.l.b16 %v2763
        %v3837 = vunpack.c.h.b16 %v2763
        %v3838 = vunpack.c.l.b16 %v2764
        %v3839 = vunpack.c.h.b16 %v2764
        %v3840 = vunpack.c.l.b16 %v2765
        %v3841 = vunpack.c.h.b16 %v2765
        %v3842 = vunpack.c.l.b16 %v2766
        %v3843 = vunpack.c.h.b16 %v2766
        %v3844 = vunpack.c.l.b16 %v2767
        %v3845 = vunpack.c.h.b16 %v2767
        %v3846 = vunpack.c.l.b16 %v2768
        %v3847 = vunpack.c.h.b16 %v2768
        %v3848 = vunpack.c.l.b16 %v2769
        %v3849 = vunpack.c.h.b16 %v2769
        %v3850 = vunpack.c.l.b16 %v2770
        %v3851 = vunpack.c.h.b16 %v2770
        %v3852 = vunpack.c.l.b16 %v2771
        %v3853 = vunpack.c.h.b16 %v2771
        %v3854 = vunpack.c.l.b16 %v2772
        %v3855 = vunpack.c.h.b16 %v2772
        %v3856 = vunpack.c.l.b16 %v2773
        %v3857 = vunpack.c.h.b16 %v2773
        %v3858 = vunpack.c.l.b16 %v2774
        %v3859 = vunpack.c.h.b16 %v2774
        %v3860 = vunpack.c.l.b16 %v2775
        %v3861 = vunpack.c.h.b16 %v2775
        %v3862 = vunpack.c.l.b16 %v2776
        %v3863 = vunpack.c.h.b16 %v2776
        %v3864 = vunpack.c.l.b16 %v2777
        %v3865 = vunpack.c.h.b16 %v2777
        %v3866 = vunpack.c.l.b16 %v2778
        %v3867 = vunpack.c.h.b16 %v2778
        %v3868 = vunpack.c.l.b16 %v2779
        %v3869 = vunpack.c.h.b16 %v2779
        %v3870 = vunpack.c.l.b16 %v2780
        %v3871 = vunpack.c.h.b16 %v2780
        %v3872 = vunpack.c.l.b16 %v2781
        %v3873 = vunpack.c.h.b16 %v2781
        %v3874 = vunpack.c.l.b16 %v2782
        %v3875 = vunpack.c.h.b16 %v2782
        %v3876 = vunpack.c.l.b16 %v2783
        %v3877 = vunpack.c.h.b16 %v2783
        %v3878 = vunpack.c.l.b16 %v2784
        %v3879 = vunpack.c.h.b16 %v2784
        %v3880 = vunpack.c.l.b16 %v2785
        %v3881 = vunpack.c.h.b16 %v2785
        %v3882 = vunpack.c.l.b16 %v2786
        %v3883 = vunpack.c.h.b16 %v2786
        %v3884 = vunpack.c.l.b16 %v2787
        %v3885 = vunpack.c.h.b16 %v2787
        %v3886 = vunpack.c.l.b16 %v2788
        %v3887 = vunpack.c.h.b16 %v2788
        %v3888 = vunpack.c.l.b16 %v2789
        %v3889 = vunpack.c.h.b16 %v2789
        %v3890 = vunpack.c.l.b16 %v2790
        %v3891 = vunpack.c.h.b16 %v2790
        %v3892 = vunpack.c.l.b16 %v2791
        %v3893 = vunpack.c.h.b16 %v2791
        %v3894 = vunpack.c.l.b16 %v2792
        %v3895 = vunpack.c.h.b16 %v2792
        %v3896 = vunpack.c.l.b16 %v2793
        %v3897 = vunpack.c.h.b16 %v2793
        %v3898 = vunpack.c.l.b16 %v2794
        %v3899 = vunpack.c.h.b16 %v2794
        %v3900 = vunpack.c.l.b16 %v2795
        %v3901 = vunpack.c.h.b16 %v2795
        %v3902 = vunpack.c.l.b16 %v2796
        %v3903 = vunpack.c.h.b16 %v2796
        %v3904 = vunpack.c.l.b16 %v2797
        %v3905 = vunpack.c.h.b16 %v2797
        %v3906 = vunpack.c.l.b16 %v2798
        %v3907 = vunpack.c.h.b16 %v2798
        %v3908 = vunpack.c.l.b16 %v2799
        %v3909 = vunpack.c.h.b16 %v2799
        %v3910 = vunpack.c.l.b16 %v2800
        %v3911 = vunpack.c.h.b16 %v2800
        %v3912 = vunpack.c.l.b16 %v2801
        %v3913 = vunpack.c.h.b16 %v2801
        %v3914 = vunpack.c.l.b16 %v2802
        %v3915 = vunpack.c.h.b16 %v2802
        %v3916 = vunpack.c.l.b16 %v2803
        %v3917 = vunpack.c.h.b16 %v2803
        %v3918 = vunpack.c.l.b16 %v2804
        %v3919 = vunpack.c.h.b16 %v2804
        %v3920 = vunpack.c.l.b16 %v2805
        %v3921 = vunpack.c.h.b16 %v2805
        %v3922 = vunpack.c.l.b16 %v2806
        %v3923 = vunpack.c.h.b16 %v2806
        %v3924 = vunpack.c.l.b16 %v2807
        %v3925 = vunpack.c.h.b16 %v2807
        %v3926 = vunpack.c.l.b16 %v2808
        %v3927 = vunpack.c.h.b16 %v2808
        %v3928 = vunpack.c.l.b16 %v2809
        %v3929 = vunpack.c.h.b16 %v2809
        %v3930 = vunpack.c.l.b16 %v2810
        %v3931 = vunpack.c.h.b16 %v2810
        %v3932 = vunpack.c.l.b16 %v2811
        %v3933 = vunpack.c.h.b16 %v2811
        %v3934 = vunpack.c.l.b16 %v2812
        %v3935 = vunpack.c.h.b16 %v2812
        %v3936 = vunpack.c.l.b16 %v2813
        %v3937 = vunpack.c.h.b16 %v2813
        %v3938 = vunpack.c.l.b16 %v2814
        %v3939 = vunpack.c.h.b16 %v2814
        %v3940 = vunpack.c.l.b16 %v2815
        %v3941 = vunpack.c.h.b16 %v2815
        %v3942 = vunpack.c.l.b16 %v2816
        %v3943 = vunpack.c.h.b16 %v2816
        %v3944 = vunpack.c.l.b16 %v2817
        %v3945 = vunpack.c.h.b16 %v2817
        %v3946 = vunpack.c.l.b16 %v2818
        %v3947 = vunpack.c.h.b16 %v2818
        %v3948 = vunpack.c.l.b16 %v2819
        %v3949 = vunpack.c.h.b16 %v2819
        %v3950 = vunpack.c.l.b16 %v2820
        %v3951 = vunpack.c.h.b16 %v2820
        %v3952 = vunpack.c.l.b16 %v2821
        %v3953 = vunpack.c.h.b16 %v2821
        %v3954 = vunpack.c.l.b16 %v2822
        %v3955 = vunpack.c.h.b16 %v2822
        %v3956 = vunpack.c.l.b16 %v2823
        %v3957 = vunpack.c.h.b16 %v2823
        %v3958 = vunpack.c.l.b16 %v2824
        %v3959 = vunpack.c.h.b16 %v2824
        %v3960 = vunpack.c.l.b16 %v2825
        %v3961 = vunpack.c.h.b16 %v2825
        %v3962 = vunpack.c.l.b16 %v2826
        %v3963 = vunpack.c.h.b16 %v2826
        %v3964 = vunpack.c.l.b16 %v2827
        %v3965 = vunpack.c.h.b16 %v2827
        %v3966 = vunpack.c.l.b16 %v2828
        %v3967 = vunpack.c.h.b16 %v2828
        %v3968 = vunpack.c.l.b16 %v2829
        %v3969 = vunpack.c.h.b16 %v2829
        %v3970 = vunpack.c.l.b16 %v2830
        %v3971 = vunpack.c.h.b16 %v2830
        %v3972 = vunpack.c.l.b16 %v2831
        %v3973 = vunpack.c.h.b16 %v2831
        %v3974 = vunpack.c.l.b16 %v2832
        %v3975 = vunpack.c.h.b16 %v2832
        %v3976 = vunpack.c.l.b16 %v2833
        %v3977 = vunpack.c.h.b16 %v2833
        %v3978 = vunpack.c.l.b16 %v2834
        %v3979 = vunpack.c.h.b16 %v2834
        %v3980 = vunpack.c.l.b16 %v2835
        %v3981 = vunpack.c.h.b16 %v2835
        %v3982 = vunpack.c.l.b16 %v2836
        %v3983 = vunpack.c.h.b16 %v2836
        %v3984 = vunpack.c.l.b16 %v2837
        %v3985 = vunpack.c.h.b16 %v2837
        %v3986 = vunpack.c.l.b16 %v2838
        %v3987 = vunpack.c.h.b16 %v2838
        %v3988 = vunpack.c.l.b16 %v2839
        %v3989 = vunpack.c.h.b16 %v2839
        %v3990 = vunpack.c.l.b16 %v2840
        %v3991 = vunpack.c.h.b16 %v2840
        %v3992 = vunpack.c.l.b16 %v2841
        %v3993 = vunpack.c.h.b16 %v2841
        %v3994 = vunpack.c.l.b16 %v2842
        %v3995 = vunpack.c.h.b16 %v2842
        %v3996 = vunpack.c.l.b16 %v2843
        %v3997 = vunpack.c.h.b16 %v2843
        %v3998 = vunpack.c.l.b16 %v2844
        %v3999 = vunpack.c.h.b16 %v2844
        %v4000 = vunpack.c.l.b16 %v2845
        %v4001 = vunpack.c.h.b16 %v2845
        %v4002 = vunpack.c.l.b16 %v2846
        %v4003 = vunpack.c.h.b16 %v2846
        %v4004 = vunpack.c.l.b16 %v2847
        %v4005 = vunpack.c.h.b16 %v2847
        %v4006 = vunpack.c.l.b16 %v2848
        %v4007 = vunpack.c.h.b16 %v2848
        %v4008 = vunpack.c.l.b16 %v2849
        %v4009 = vunpack.c.h.b16 %v2849
        %v4010 = vunpack.c.l.b16 %v2850
        %v4011 = vunpack.c.h.b16 %v2850
        %v4012 = vunpack.c.l.b16 %v2851
        %v4013 = vunpack.c.h.b16 %v2851
        %v4014 = vunpack.c.l.b16 %v2852
        %v4015 = vunpack.c.h.b16 %v2852
        %v4016 = vunpack.c.l.b16 %v2853
        %v4017 = vunpack.c.h.b16 %v2853
        %v4018 = vunpack.c.l.b16 %v2854
        %v4019 = vunpack.c.h.b16 %v2854
        %v4020 = vunpack.c.l.b16 %v2855
        %v4021 = vunpack.c.h.b16 %v2855
        %v4022 = vunpack.c.l.b16 %v2856
        %v4023 = vunpack.c.h.b16 %v2856
        %v4024 = vunpack.c.l.b16 %v2857
        %v4025 = vunpack.c.h.b16 %v2857
        %v4026 = vunpack.c.l.b16 %v2858
        %v4027 = vunpack.c.h.b16 %v2858
        %v4028 = vunpack.c.l.b16 %v2859
        %v4029 = vunpack.c.h.b16 %v2859
        %v4030 = vunpack.c.l.b16 %v2860
        %v4031 = vunpack.c.h.b16 %v2860
        %v4032 = vunpack.c.l.b16 %v2861
        %v4033 = vunpack.c.h.b16 %v2861
        %v4034 = vunpack.c.l.b16 %v2862
        %v4035 = vunpack.c.h.b16 %v2862
        %v4036 = vunpack.c.l.b16 %v2863
        %v4037 = vunpack.c.h.b16 %v2863
        %v4038 = vunpack.c.l.b16 %v2864
        %v4039 = vunpack.c.h.b16 %v2864
        %v4040 = vunpack.c.l.b16 %v2865
        %v4041 = vunpack.c.h.b16 %v2865
        %v4042 = vunpack.c.l.b16 %v2866
        %v4043 = vunpack.c.h.b16 %v2866
        %v4044 = vunpack.c.l.b16 %v2867
        %v4045 = vunpack.c.h.b16 %v2867
        %v4046 = vunpack.c.l.b16 %v2868
        %v4047 = vunpack.c.h.b16 %v2868
        %v4048 = vunpack.c.l.b16 %v2869
        %v4049 = vunpack.c.h.b16 %v2869
        %v4050 = vunpack.c.l.b16 %v2870
        %v4051 = vunpack.c.h.b16 %v2870
        %v4052 = vunpack.c.l.b16 %v2871
        %v4053 = vunpack.c.h.b16 %v2871
        %v4054 = vunpack.c.l.b16 %v2872
        %v4055 = vunpack.c.h.b16 %v2872
        %v4056 = vunpack.c.l.b16 %v2873
        %v4057 = vunpack.c.h.b16 %v2873
        %v4058 = vunpack.c.l.b16 %v2874
        %v4059 = vunpack.c.h.b16 %v2874
        %v4060 = vunpack.c.l.b16 %v2875
        %v4061 = vunpack.c.h.b16 %v2875
        %v4062 = vunpack.c.l.b16 %v2876
        %v4063 = vunpack.c.h.b16 %v2876
        %v4064 = vunpack.c.l.b16 %v2877
        %v4065 = vunpack.c.h.b16 %v2877
        %v4066 = vunpack.c.l.b16 %v2878
        %v4067 = vunpack.c.h.b16 %v2878
        %v4068 = vunpack.c.l.b16 %v2879
        %v4069 = vunpack.c.h.b16 %v2879
        %v4070 = vunpack.c.l.b16 %v2880
        %v4071 = vunpack.c.h.b16 %v2880
        %v4072 = vunpack.c.l.b16 %v2881
        %v4073 = vunpack.c.h.b16 %v2881
        %v4074 = vunpack.c.l.b16 %v2882
        %v4075 = vunpack.c.h.b16 %v2882
        %v4076 = vunpack.c.l.b16 %v2883
        %v4077 = vunpack.c.h.b16 %v2883
        %v4078 = vunpack.c.l.b16 %v2884
        %v4079 = vunpack.c.h.b16 %v2884
        %v4080 = vunpack.c.l.b16 %v2885
        %v4081 = vunpack.c.h.b16 %v2885
        %v4082 = vunpack.c.l.b16 %v2886
        %v4083 = vunpack.c.h.b16 %v2886
        %v4084 = vunpack.c.l.b16 %v2887
        %v4085 = vunpack.c.h.b16 %v2887
        %v4086 = vunpack.c.l.b16 %v2888
        %v4087 = vunpack.c.h.b16 %v2888
        %v4088 = vunpack.c.l.b16 %v2889
        %v4089 = vunpack.c.h.b16 %v2889
        %v4090 = vunpack.c.l.b16 %v2890
        %v4091 = vunpack.c.h.b16 %v2890
        %v4092 = vunpack.c.l.b16 %v2891
        %v4093 = vunpack.c.h.b16 %v2891
        %v4094 = vunpack.c.l.b16 %v2892
        %v4095 = vunpack.c.h.b16 %v2892
        %v4096 = vunpack.c.l.b16 %v2893
        %v4097 = vunpack.c.h.b16 %v2893
        %v4098 = vunpack.c.l.b16 %v2894
        %v4099 = vunpack.c.h.b16 %v2894
        %v4100 = vunpack.c.l.b16 %v2895
        %v4101 = vunpack.c.h.b16 %v2895
        %v4102 = vunpack.c.l.b16 %v2896
        %v4103 = vunpack.c.h.b16 %v2896
        %v4104 = vunpack.c.l.b16 %v2897
        %v4105 = vunpack.c.h.b16 %v2897
        %v4106 = vunpack.c.l.b16 %v2898
        %v4107 = vunpack.c.h.b16 %v2898
        %v4108 = vunpack.c.l.b16 %v2899
        %v4109 = vunpack.c.h.b16 %v2899
        %v4110 = vunpack.c.l.b16 %v2900
        %v4111 = vunpack.c.h.b16 %v2900
        %v4112 = vunpack.c.l.b16 %v2901
        %v4113 = vunpack.c.h.b16 %v2901
        %v4114 = vunpack.c.l.b16 %v2902
        %v4115 = vunpack.c.h.b16 %v2902
        %v4116 = vunpack.c.l.b16 %v2903
        %v4117 = vunpack.c.h.b16 %v2903
        %v4118 = vunpack.c.l.b16 %v2904
        %v4119 = vunpack.c.h.b16 %v2904
        %v4120 = vunpack.c.l.b16 %v2905
        %v4121 = vunpack.c.h.b16 %v2905
        %v4122 = vunpack.c.l.b16 %v2906
        %v4123 = vunpack.c.h.b16 %v2906
        %v4124 = vunpack.c.l.b16 %v2907
        %v4125 = vunpack.c.h.b16 %v2907
        %v4126 = vunpack.c.l.b16 %v2908
        %v4127 = vunpack.c.h.b16 %v2908
        %v4128 = vunpack.c.l.b16 %v2909
        %v4129 = vunpack.c.h.b16 %v2909
        %v4130 = vunpack.c.l.b16 %v2910
        %v4131 = vunpack.c.h.b16 %v2910
        %v4132 = vunpack.c.l.b16 %v2911
        %v4133 = vunpack.c.h.b16 %v2911
        %v4134 = vunpack.c.l.b16 %v2912
        %v4135 = vunpack.c.h.b16 %v2912
        %v4136 = vunpack.c.l.b16 %v2913
        %v4137 = vunpack.c.h.b16 %v2913
        %v4138 = vunpack.c.l.b16 %v2914
        %v4139 = vunpack.c.h.b16 %v2914
        %v4140 = vunpack.c.l.b16 %v2915
        %v4141 = vunpack.c.h.b16 %v2915
        %v4142 = vunpack.c.l.b16 %v2916
        %v4143 = vunpack.c.h.b16 %v2916
        %v4144 = vunpack.c.l.b16 %v2917
        %v4145 = vunpack.c.h.b16 %v2917
        %v4146 = vunpack.c.l.b16 %v2918
        %v4147 = vunpack.c.h.b16 %v2918
        %v4148 = vunpack.c.l.b16 %v2919
        %v4149 = vunpack.c.h.b16 %v2919
        %v4150 = vunpack.c.l.b16 %v2920
        %v4151 = vunpack.c.h.b16 %v2920
        %v4152 = vunpack.c.l.b16 %v2921
        %v4153 = vunpack.c.h.b16 %v2921
        %v4154 = vunpack.c.l.b16 %v2922
        %v4155 = vunpack.c.h.b16 %v2922
        %v4156 = vunpack.c.l.b16 %v2923
        %v4157 = vunpack.c.h.b16 %v2923
        %v4158 = vunpack.c.l.b16 %v2924
        %v4159 = vunpack.c.h.b16 %v2924
        %v4160 = vunpack.c.l.b16 %v2925
        %v4161 = vunpack.c.h.b16 %v2925
        %v4162 = vunpack.c.l.b16 %v2926
        %v4163 = vunpack.c.h.b16 %v2926
        %v4164 = vunpack.c.l.b16 %v2927
        %v4165 = vunpack.c.h.b16 %v2927
        %v4166 = vunpack.c.l.b16 %v2928
        %v4167 = vunpack.c.h.b16 %v2928
        %v4168 = vunpack.c.l.b16 %v2929
        %v4169 = vunpack.c.h.b16 %v2929
        %v4170 = vunpack.c.l.b16 %v2930
        %v4171 = vunpack.c.h.b16 %v2930
        %v4172 = vunpack.c.l.b16 %v2931
        %v4173 = vunpack.c.h.b16 %v2931
        %v4174 = vunpack.c.l.b16 %v2932
        %v4175 = vunpack.c.h.b16 %v2932
        %v4176 = vunpack.c.l.b16 %v2933
        %v4177 = vunpack.c.h.b16 %v2933
        %v4178 = vunpack.c.l.b16 %v2934
        %v4179 = vunpack.c.h.b16 %v2934
        %v4180 = vunpack.c.l.b16 %v2935
        %v4181 = vunpack.c.h.b16 %v2935
        %v4182 = vunpack.c.l.b16 %v2936
        %v4183 = vunpack.c.h.b16 %v2936
        %v4184 = vunpack.c.l.b16 %v2937
        %v4185 = vunpack.c.h.b16 %v2937
        %v4186 = vunpack.c.l.b16 %v2938
        %v4187 = vunpack.c.h.b16 %v2938
        %v4188 = vunpack.c.l.b16 %v2939
        %v4189 = vunpack.c.h.b16 %v2939
        %v4190 = vunpack.c.l.b16 %v2940
        %v4191 = vunpack.c.h.b16 %v2940
        %v4192 = vunpack.c.l.b16 %v2941
        %v4193 = vunpack.c.h.b16 %v2941
        %v4194 = vunpack.c.l.b16 %v2942
        %v4195 = vunpack.c.h.b16 %v2942
        %v4196 = vunpack.c.l.b16 %v2943
        %v4197 = vunpack.c.h.b16 %v2943
        %v4198 = vunpack.c.l.b16 %v2944
        %v4199 = vunpack.c.h.b16 %v2944
        %v4200 = vunpack.c.l.b16 %v2945
        %v4201 = vunpack.c.h.b16 %v2945
        %v4202 = vpack.c.b16 %v3632, %v3626
        %v4203 = vpack.c.b16 %v3633, %v3627
        %v4204 = vpack.c.b16 %v3634, %v3628
        %v4205 = vpack.c.b16 %v3635, %v3629
        %v4206 = vpack.c.b16 %v3636, %v3630
        %v4207 = vpack.c.b16 %v3637, %v3631
        %v4208 = vpack.c.b16 %v3644, %v3638
        %v4209 = vpack.c.b16 %v3645, %v3639
        %v4210 = vpack.c.b16 %v3646, %v3640
        %v4211 = vpack.c.b16 %v3647, %v3641
        %v4212 = vpack.c.b16 %v3648, %v3642
        %v4213 = vpack.c.b16 %v3649, %v3643
        %v4214 = vpack.c.b16 %v3656, %v3650
        %v4215 = vpack.c.b16 %v3657, %v3651
        %v4216 = vpack.c.b16 %v3658, %v3652
        %v4217 = vpack.c.b16 %v3659, %v3653
        %v4218 = vpack.c.b16 %v3660, %v3654
        %v4219 = vpack.c.b16 %v3661, %v3655
        %v4220 = vpack.c.b16 %v3668, %v3662
        %v4221 = vpack.c.b16 %v3669, %v3663
        %v4222 = vpack.c.b16 %v3670, %v3664
        %v4223 = vpack.c.b16 %v3671, %v3665
        %v4224 = vpack.c.b16 %v3672, %v3666
        %v4225 = vpack.c.b16 %v3673, %v3667
        %v4226 = vpack.c.b16 %v3680, %v3674
        %v4227 = vpack.c.b16 %v3681, %v3675
        %v4228 = vpack.c.b16 %v3682, %v3676
        %v4229 = vpack.c.b16 %v3683, %v3677
        %v4230 = vpack.c.b16 %v3684, %v3678
        %v4231 = vpack.c.b16 %v3685, %v3679
        %v4232 = vpack.c.b16 %v3692, %v3686
        %v4233 = vpack.c.b16 %v3693, %v3687
        %v4234 = vpack.c.b16 %v3694, %v3688
        %v4235 = vpack.c.b16 %v3695, %v3689
        %v4236 = vpack.c.b16 %v3696, %v3690
        %v4237 = vpack.c.b16 %v3697, %v3691
        %v4238 = vpack.c.b16 %v3704, %v3698
        %v4239 = vpack.c.b16 %v3705, %v3699
        %v4240 = vpack.c.b16 %v3706, %v3700
        %v4241 = vpack.c.b16 %v3707, %v3701
        %v4242 = vpack.c.b16 %v3708, %v3702
        %v4243 = vpack.c.b16 %v3709, %v3703
        %v4244 = vpack.c.b16 %v3716, %v3710
        %v4245 = vpack.c.b16 %v3717, %v3711
        %v4246 = vpack.c.b16 %v3718, %v3712
        %v4247 = vpack.c.b16 %v3719, %v3713
        %v4248 = vpack.c.b16 %v3720, %v3714
        %v4249 = vpack.c.b16 %v3721, %v3715
        %v4250 = vpack.c.b16 %v3728, %v3722
        %v4251 = vpack.c.b16 %v3729, %v3723
        %v4252 = vpack.c.b16 %v3730, %v3724
        %v4253 = vpack.c.b16 %v3731, %v3725
        %v4254 = vpack.c.b16 %v3732, %v3726
        %v4255 = vpack.c.b16 %v3733, %v3727
        %v4256 = vpack.c.b16 %v3740, %v3734
        %v4257 = vpack.c.b16 %v3741, %v3735
        %v4258 = vpack.c.b16 %v3742, %v3736
        %v4259 = vpack.c.b16 %v3743, %v3737
        %v4260 = vpack.c.b16 %v3744, %v3738
        %v4261 = vpack.c.b16 %v3745, %v3739
        %v4262 = vpack.c.b16 %v3752, %v3746
        %v4263 = vpack.c.b16 %v3753, %v3747
        %v4264 = vpack.c.b16 %v3754, %v3748
        %v4265 = vpack.c.b16 %v3755, %v3749
        %v4266 = vpack.c.b16 %v3756, %v3750
        %v4267 = vpack.c.b16 %v3757, %v3751
        %v4268 = vpack.c.b16 %v3764, %v3758
        %v4269 = vpack.c.b16 %v3765, %v3759
        %v4270 = vpack.c.b16 %v3766, %v3760
        %v4271 = vpack.c.b16 %v3767, %v3761
        %v4272 = vpack.c.b16 %v3768, %v3762
        %v4273 = vpack.c.b16 %v3769, %v3763
        %v4274 = vpack.c.b16 %v3776, %v3770
        %v4275 = vpack.c.b16 %v3777, %v3771
        %v4276 = vpack.c.b16 %v3778, %v3772
        %v4277 = vpack.c.b16 %v3779, %v3773
        %v4278 = vpack.c.b16 %v3780, %v3774
        %v4279 = vpack.c.b16 %v3781, %v3775
        %v4280 = vpack.c.b16 %v3788, %v3782
        %v4281 = vpack.c.b16 %v3789, %v3783
        %v4282 = vpack.c.b16 %v3790, %v3784
        %v4283 = vpack.c.b16 %v3791, %v3785
        %v4284 = vpack.c.b16 %v3792, %v3786
        %v4285 = vpack.c.b16 %v3793, %v3787
        %v4286 = vpack.c.b16 %v3800, %v3794
        %v4287 = vpack.c.b16 %v3801, %v3795
        %v4288 = vpack.c.b16 %v3802, %v3796
        %v4289 = vpack.c.b16 %v3803, %v3797
        %v4290 = vpack.c.b16 %v3804, %v3798
        %v4291 = vpack.c.b16 %v3805, %v3799
        %v4292 = vpack.c.b16 %v3812, %v3806
        %v4293 = vpack.c.b16 %v3813, %v3807
        %v4294 = vpack.c.b16 %v3814, %v3808
        %v4295 = vpack.c.b16 %v3815, %v3809
        %v4296 = vpack.c.b16 %v3816, %v3810
        %v4297 = vpack.c.b16 %v3817, %v3811
        %v4298 = vpack.c.b16 %v3824, %v3818
        %v4299 = vpack.c.b16 %v3825, %v3819
        %v4300 = vpack.c.b16 %v3826, %v3820
        %v4301 = vpack.c.b16 %v3827, %v3821
        %v4302 = vpack.c.b16 %v3828, %v3822
        %v4303 = vpack.c.b16 %v3829, %v3823
        %v4304 = vpack.c.b16 %v3836, %v3830
        %v4305 = vpack.c.b16 %v3837, %v3831
        %v4306 = vpack.c.b16 %v3838, %v3832
        %v4307 = vpack.c.b16 %v3839, %v3833
        %v4308 = vpack.c.b16 %v3840, %v3834
        %v4309 = vpack.c.b16 %v3841, %v3835
        %v4310 = vpack.c.b16 %v3848, %v3842
        %v4311 = vpack.c.b16 %v3849, %v3843
        %v4312 = vpack.c.b16 %v3850, %v3844
        %v4313 = vpack.c.b16 %v3851, %v3845
        %v4314 = vpack.c.b16 %v3852, %v3846
        %v4315 = vpack.c.b16 %v3853, %v3847
        %v4316 = vpack.c.b16 %v3860, %v3854
        %v4317 = vpack.c.b16 %v3861, %v3855
        %v4318 = vpack.c.b16 %v3862, %v3856
        %v4319 = vpack.c.b16 %v3863, %v3857
        %v4320 = vpack.c.b16 %v3864, %v3858
        %v4321 = vpack.c.b16 %v3865, %v3859
        %v4322 = vpack.c.b16 %v3872, %v3866
        %v4323 = vpack.c.b16 %v3873, %v3867
        %v4324 = vpack.c.b16 %v3874, %v3868
        %v4325 = vpack.c.b16 %v3875, %v3869
        %v4326 = vpack.c.b16 %v3876, %v3870
        %v4327 = vpack.c.b16 %v3877, %v3871
        %v4328 = vpack.c.b16 %v3884, %v3878
        %v4329 = vpack.c.b16 %v3885, %v3879
        %v4330 = vpack.c.b16 %v3886, %v3880
        %v4331 = vpack.c.b16 %v3887, %v3881
        %v4332 = vpack.c.b16 %v3888, %v3882
        %v4333 = vpack.c.b16 %v3889, %v3883
        %v4334 = vpack.c.b16 %v3896, %v3890
        %v4335 = vpack.c.b16 %v3897, %v3891
        %v4336 = vpack.c.b16 %v3898, %v3892
        %v4337 = vpack.c.b16 %v3899, %v3893
        %v4338 = vpack.c.b16 %v3900, %v3894
        %v4339 = vpack.c.b16 %v3901, %v3895
        %v4340 = vpack.c.b16 %v3908, %v3902
        %v4341 = vpack.c.b16 %v3909, %v3903
        %v4342 = vpack.c.b16 %v3910, %v3904
        %v4343 = vpack.c.b16 %v3911, %v3905
        %v4344 = vpack.c.b16 %v3912, %v3906
        %v4345 = vpack.c.b16 %v3913, %v3907
        %v4346 = vpack.c.b16 %v3920, %v3914
        %v4347 = vpack.c.b16 %v3921, %v3915
        %v4348 = vpack.c.b16 %v3922, %v3916
        %v4349 = vpack.c.b16 %v3923, %v3917
        %v4350 = vpack.c.b16 %v3924, %v3918
        %v4351 = vpack.c.b16 %v3925, %v3919
        %v4352 = vpack.c.b16 %v3932, %v3926
        %v4353 = vpack.c.b16 %v3933, %v3927
        %v4354 = vpack.c.b16 %v3934, %v3928
        %v4355 = vpack.c.b16 %v3935, %v3929
        %v4356 = vpack.c.b16 %v3936, %v3930
        %v4357 = vpack.c.b16 %v3937, %v3931
        %v4358 = vpack.c.b16 %v3944, %v3938
        %v4359 = vpack.c.b16 %v3945, %v3939
        %v4360 = vpack.c.b16 %v3946, %v3940
        %v4361 = vpack.c.b16 %v3947, %v3941
        %v4362 = vpack.c.b16 %v3948, %v3942
        %v4363 = vpack.c.b16 %v3949, %v3943
        %v4364 = vpack.c.b16 %v3956, %v3950
        %v4365 = vpack.c.b16 %v3957, %v3951
        %v4366 = vpack.c.b16 %v3958, %v3952
        %v4367 = vpack.c.b16 %v3959, %v3953
        %v4368 = vpack.c.b16 %v3960, %v3954
        %v4369 = vpack.c.b16 %v3961, %v3955
        %v4370 = vpack.c.b16 %v3968, %v3962
        %v4371 = vpack.c.b16 %v3969, %v3963
        %v4372 = vpack.c.b16 %v3970, %v3964
        %v4373 = vpack.c.b16 %v3971, %v3965
        %v4374 = vpack.c.b16 %v3972, %v3966
        %v4375 = vpack.c.b16 %v3973, %v3967
        %v4376 = vpack.c.b16 %v3980, %v3974
        %v4377 = vpack.c.b16 %v3981, %v3975
        %v4378 = vpack.c.b16 %v3982, %v3976
        %v4379 = vpack.c.b16 %v3983, %v3977
        %v4380 = vpack.c.b16 %v3984, %v3978
        %v4381 = vpack.c.b16 %v3985, %v3979
        %v4382 = vpack.c.b16 %v3992, %v3986
        %v4383 = vpack.c.b16 %v3993, %v3987
        %v4384 = vpack.c.b16 %v3994, %v3988
        %v4385 = vpack.c.b16 %v3995, %v3989
        %v4386 = vpack.c.b16 %v3996, %v3990
        %v4387 = vpack.c.b16 %v3997, %v3991
        %v4388 = vpack.c.b16 %v4004, %v3998
        %v4389 = vpack.c.b16 %v4005, %v3999
        %v4390 = vpack.c.b16 %v4006, %v4000
        %v4391 = vpack.c.b16 %v4007, %v4001
        %v4392 = vpack.c.b16 %v4008, %v4002
        %v4393 = vpack.c.b16 %v4009, %v4003
        %v4394 = vpack.c.b16 %v4016, %v4010
        %v4395 = vpack.c.b16 %v4017, %v4011
        %v4396 = vpack.c.b16 %v4018, %v4012
        %v4397 = vpack.c.b16 %v4019, %v4013
        %v4398 = vpack.c.b16 %v4020, %v4014
        %v4399 = vpack.c.b16 %v4021, %v4015
        %v4400 = vpack.c.b16 %v4028, %v4022
        %v4401 = vpack.c.b16 %v4029, %v4023
        %v4402 = vpack.c.b16 %v4030, %v4024
        %v4403 = vpack.c.b16 %v4031, %v4025
        %v4404 = vpack.c.b16 %v4032, %v4026
        %v4405 = vpack.c.b16 %v4033, %v4027
        %v4406 = vpack.c.b16 %v4040, %v4034
        %v4407 = vpack.c.b16 %v4041, %v4035
        %v4408 = vpack.c.b16 %v4042, %v4036
        %v4409 = vpack.c.b16 %v4043, %v4037
        %v4410 = vpack.c.b16 %v4044, %v4038
        %v4411 = vpack.c.b16 %v4045, %v4039
        %v4412 = vpack.c.b16 %v4052, %v4046
        %v4413 = vpack.c.b16 %v4053, %v4047
        %v4414 = vpack.c.b16 %v4054, %v4048
        %v4415 = vpack.c.b16 %v4055, %v4049
        %v4416 = vpack.c.b16 %v4056, %v4050
        %v4417 = vpack.c.b16 %v4057, %v4051
        %v4418 = vpack.c.b16 %v4064, %v4058
        %v4419 = vpack.c.b16 %v4065, %v4059
        %v4420 = vpack.c.b16 %v4066, %v4060
        %v4421 = vpack.c.b16 %v4067, %v4061
        %v4422 = vpack.c.b16 %v4068, %v4062
        %v4423 = vpack.c.b16 %v4069, %v4063
        %v4424 = vpack.c.b16 %v4076, %v4070
        %v4425 = vpack.c.b16 %v4077, %v4071
        %v4426 = vpack.c.b16 %v4078, %v4072
        %v4427 = vpack.c.b16 %v4079, %v4073
        %v4428 = vpack.c.b16 %v4080, %v4074
        %v4429 = vpack.c.b16 %v4081, %v4075
        %v4430 = vpack.c.b16 %v4088, %v4082
        %v4431 = vpack.c.b16 %v4089, %v4083
        %v4432 = vpack.c.b16 %v4090, %v4084
        %v4433 = vpack.c.b16 %v4091, %v4085
        %v4434 = vpack.c.b16 %v4092, %v4086
        %v4435 = vpack.c.b16 %v4093, %v4087
        %v4436 = vpack.c.b16 %v4100, %v4094
        %v4437 = vpack.c.b16 %v4101, %v4095
        %v4438 = vpack.c.b16 %v4102, %v4096
        %v4439 = vpack.c.b16 %v4103, %v4097
        %v4440 = vpack.c.b16 %v4104, %v4098
        %v4441 = vpack.c.b16 %v4105, %v4099
        %v4442 = vpack.c.b16 %v4112, %v4106
        %v4443 = vpack.c.b16 %v4113, %v4107
        %v4444 = vpack.c.b16 %v4114, %v4108
        %v4445 = vpack.c.b16 %v4115, %v4109
        %v4446 = vpack.c.b16 %v4116, %v4110
        %v4447 = vpack.c.b16 %v4117, %v4111
        %v4448 = vpack.c.b16 %v4124, %v4118
        %v4449 = vpack.c.b16 %v4125, %v4119
        %v4450 = vpack.c.b16 %v4126, %v4120
        %v4451 = vpack.c.b16 %v4127, %v4121
        %v4452 = vpack.c.b16 %v4128, %v4122
        %v4453 = vpack.c.b16 %v4129, %v4123
        %v4454 = vpack.c.b16 %v4136, %v4130
        %v4455 = vpack.c.b16 %v4137, %v4131
        %v4456 = vpack.c.b16 %v4138, %v4132
        %v4457 = vpack.c.b16 %v4139, %v4133
        %v4458 = vpack.c.b16 %v4140, %v4134
        %v4459 = vpack.c.b16 %v4141, %v4135
        %v4460 = vpack.c.b16 %v4148, %v4142
        %v4461 = vpack.c.b16 %v4149, %v4143
        %v4462 = vpack.c.b16 %v4150, %v4144
        %v4463 = vpack.c.b16 %v4151, %v4145
        %v4464 = vpack.c.b16 %v4152, %v4146
        %v4465 = vpack.c.b16 %v4153, %v4147
        %v4466 = vpack.c.b16 %v4160, %v4154
        %v4467 = vpack.c.b16 %v4161, %v4155
        %v4468 = vpack.c.b16 %v4162, %v4156
        %v4469 = vpack.c.b16 %v4163, %v4157
        %v4470 = vpack.c.b16 %v4164, %v4158
        %v4471 = vpack.c.b16 %v4165, %v4159
        %v4472 = vpack.c.b16 %v4172, %v4166
        %v4473 = vpack.c.b16 %v4173, %v4167
        %v4474 = vpack.c.b16 %v4174, %v4168
        %v4475 = vpack.c.b16 %v4175, %v4169
        %v4476 = vpack.c.b16 %v4176, %v4170
        %v4477 = vpack.c.b16 %v4177, %v4171
        %v4478 = vpack.c.b16 %v4184, %v4178
        %v4479 = vpack.c.b16 %v4185, %v4179
        %v4480 = vpack.c.b16 %v4186, %v4180
        %v4481 = vpack.c.b16 %v4187, %v4181
        %v4482 = vpack.c.b16 %v4188, %v4182
        %v4483 = vpack.c.b16 %v4189, %v4183
        %v4484 = vpack.c.b16 %v4196, %v4190
        %v4485 = vpack.c.b16 %v4197, %v4191
        %v4486 = vpack.c.b16 %v4198, %v4192
        %v4487 = vpack.c.b16 %v4199, %v4193
        %v4488 = vpack.c.b16 %v4200, %v4194
        %v4489 = vpack.c.b16 %v4201, %v4195
        %4778 = vmatprep.subr.bf16.mxu0 %v4245
        %4779 = vmatpush1.bf16.msra.mxu0 %v4244
        %4780 = vmatprep.subr.bf16.mxu0 %v4239
        %4781 = vmatpush1.bf16.msra.mxu0 %v4238
        %4782 = vmatprep.subr.bf16.mxu0 %v4233
        %4783 = vmatpush1.bf16.msra.mxu0 %v4232
        %4784 = vmatprep.subr.bf16.mxu0 %v4227
        %4785 = vmatpush1.bf16.msra.mxu0 %v4226
        %4786 = vmatprep.subr.bf16.mxu0 %v4221
        %4787 = vmatpush1.bf16.msra.mxu0 %v4220
        %4788 = vmatprep.subr.bf16.mxu0 %v4215
        %4789 = vmatpush1.bf16.msra.mxu0 %v4214
        %4790 = vmatprep.subr.bf16.mxu0 %v4209
        %4791 = vmatpush1.bf16.msra.mxu0 %v4208
        %4792 = vmatprep.subr.bf16.mxu0 %v4203
        %4793 = vmatpush1.bf16.msra.mxu0 %v4202
        %4794 = vmatprep.subr.bf16.mxu0 %v4293
        %4795 = vmatpush2.bf16.msra.mxu0 %v4292
        %4796 = vmatprep.subr.bf16.mxu0 %v4287
        %4797 = vmatpush2.bf16.msra.mxu0 %v4286
        %4798 = vmatprep.subr.bf16.mxu0 %v4281
        %4799 = vmatpush2.bf16.msra.mxu0 %v4280
        %4800 = vmatprep.subr.bf16.mxu0 %v4275
        %4801 = vmatpush2.bf16.msra.mxu0 %v4274
        %4802 = vmatprep.subr.bf16.mxu0 %v4269
        %4803 = vmatpush2.bf16.msra.mxu0 %v4268
        %4804 = vmatprep.subr.bf16.mxu0 %v4263
        %4805 = vmatpush2.bf16.msra.mxu0 %v4262
        %4806 = vmatprep.subr.bf16.mxu0 %v4257
        %4807 = vmatpush2.bf16.msra.mxu0 %v4256
        %4808 = vmatprep.subr.bf16.mxu0 %v4251
        %4809 = vmatpush2.bf16.msra.mxu0 %v4250
        %4810 = vmatprep.mubr.bf16.mxu0 %v3195
        %4811 = vmatmul.mubr.bf16.gmra.mxu0 %v3194
        %v4812 = vpop.f32.mrf.mxu0
        %v4813 = vadd.f32 %v2951, %v4812
        %v4814 = vpop.f32.mrf.mxu0
        %v4815 = vadd.f32 %v2955, %v4814
        %v4816 = vpop.f32.mrf.mxu0
        %v4817 = vadd.f32 %v2951, %v4816
        %v4818 = vpop.f32.mrf.mxu0
        %v4819 = vadd.f32 %v2955, %v4818
        %4820 = vmatprep.mubr.bf16.mxu0 %v3201
        %4821 = vmatmul.mubr.bf16.gmra.mxu0 %v3200
        %v4822 = vpop.f32.mrf.mxu0
        %v4823 = vadd.f32 %v2951, %v4822
        %v4824 = vpop.f32.mrf.mxu0
        %v4825 = vadd.f32 %v2955, %v4824
        %v4826 = vpop.f32.mrf.mxu0
        %v4827 = vadd.f32 %v2951, %v4826
        %v4828 = vpop.f32.mrf.mxu0
        %v4829 = vadd.f32 %v2955, %v4828
        %4830 = vmatprep.mubr.bf16.mxu0 %v3207
        %4831 = vmatmul.mubr.bf16.gmra.mxu0 %v3206
        %v4832 = vpop.f32.mrf.mxu0
        %v4833 = vadd.f32 %v2951, %v4832
        %v4834 = vpop.f32.mrf.mxu0
        %v4835 = vadd.f32 %v2955, %v4834
        %v4836 = vpop.f32.mrf.mxu0
        %v4837 = vadd.f32 %v2951, %v4836
        %v4838 = vpop.f32.mrf.mxu0
        %v4839 = vadd.f32 %v2955, %v4838
        %4840 = vmatprep.mubr.bf16.mxu0 %v3213
        %4841 = vmatmul.mubr.bf16.gmra.mxu0 %v3212
        %v4842 = vpop.f32.mrf.mxu0
        %v4843 = vadd.f32 %v2951, %v4842
        %v4844 = vpop.f32.mrf.mxu0
        %v4845 = vadd.f32 %v2955, %v4844
        %v4846 = vpop.f32.mrf.mxu0
        %v4847 = vadd.f32 %v2951, %v4846
        %v4848 = vpop.f32.mrf.mxu0
        %v4849 = vadd.f32 %v2955, %v4848
        %4850 = vmatprep.mubr.bf16.mxu0 %v3219
        %4851 = vmatmul.mubr.bf16.gmra.mxu0 %v3218
        %v4852 = vpop.f32.mrf.mxu0
        %v4853 = vadd.f32 %v2951, %v4852
        %v4854 = vpop.f32.mrf.mxu0
        %v4855 = vadd.f32 %v2955, %v4854
        %v4856 = vpop.f32.mrf.mxu0
        %v4857 = vadd.f32 %v2951, %v4856
        %v4858 = vpop.f32.mrf.mxu0
        %v4859 = vadd.f32 %v2955, %v4858
        %4860 = vmatprep.mubr.bf16.mxu0 %v3225
        %4861 = vmatmul.mubr.bf16.gmra.mxu0 %v3224
        %v4862 = vpop.f32.mrf.mxu0
        %v4863 = vadd.f32 %v2951, %v4862
        %v4864 = vpop.f32.mrf.mxu0
        %v4865 = vadd.f32 %v2955, %v4864
        %v4866 = vpop.f32.mrf.mxu0
        %v4867 = vadd.f32 %v2951, %v4866
        %v4868 = vpop.f32.mrf.mxu0
        %v4869 = vadd.f32 %v2955, %v4868
        %4870 = vmatprep.mubr.bf16.mxu0 %v3231
        %4871 = vmatmul.mubr.bf16.gmra.mxu0 %v3230
        %v4872 = vpop.f32.mrf.mxu0
        %v4873 = vadd.f32 %v2951, %v4872
        %v4874 = vpop.f32.mrf.mxu0
        %v4875 = vadd.f32 %v2955, %v4874
        %v4876 = vpop.f32.mrf.mxu0
        %v4877 = vadd.f32 %v2951, %v4876
        %v4878 = vpop.f32.mrf.mxu0
        %v4879 = vadd.f32 %v2955, %v4878
        %4880 = vmatprep.mubr.bf16.mxu0 %v3237
        %4881 = vmatmul.mubr.bf16.gmra.mxu0 %v3236
        %v4882 = vpop.f32.mrf.mxu0
        %v4883 = vadd.f32 %v2951, %v4882
        %v4884 = vpop.f32.mrf.mxu0
        %v4885 = vadd.f32 %v2955, %v4884
        %v4886 = vpop.f32.mrf.mxu0
        %v4887 = vadd.f32 %v2951, %v4886
        %v4888 = vpop.f32.mrf.mxu0
        %v4889 = vadd.f32 %v2955, %v4888
        %4890 = vmatprep.mubr.bf16.mxu0 %v3243
        %4891 = vmatmul.mubr.bf16.gmra.mxu0 %v3242
        %v4892 = vpop.f32.mrf.mxu0
        %v4893 = vadd.f32 %v2951, %v4892
        %v4894 = vpop.f32.mrf.mxu0
        %v4895 = vadd.f32 %v2955, %v4894
        %v4896 = vpop.f32.mrf.mxu0
        %v4897 = vadd.f32 %v2951, %v4896
        %v4898 = vpop.f32.mrf.mxu0
        %v4899 = vadd.f32 %v2955, %v4898
        %4900 = vmatprep.mubr.bf16.mxu0 %v3249
        %4901 = vmatmul.mubr.bf16.gmra.mxu0 %v3248
        %v4902 = vpop.f32.mrf.mxu0
        %v4903 = vadd.f32 %v2951, %v4902
        %v4904 = vpop.f32.mrf.mxu0
        %v4905 = vadd.f32 %v2955, %v4904
        %v4906 = vpop.f32.mrf.mxu0
        %v4907 = vadd.f32 %v2951, %v4906
        %v4908 = vpop.f32.mrf.mxu0
        %v4909 = vadd.f32 %v2955, %v4908
        %4910 = vmatprep.mubr.bf16.mxu0 %v3255
        %4911 = vmatmul.mubr.bf16.gmra.mxu0 %v3254
        %v4912 = vpop.f32.mrf.mxu0
        %v4913 = vadd.f32 %v2951, %v4912
        %v4914 = vpop.f32.mrf.mxu0
        %v4915 = vadd.f32 %v2955, %v4914
        %v4916 = vpop.f32.mrf.mxu0
        %v4917 = vadd.f32 %v2951, %v4916
        %v4918 = vpop.f32.mrf.mxu0
        %v4919 = vadd.f32 %v2955, %v4918
        %4920 = vmatprep.mubr.bf16.mxu0 %v3261
        %4921 = vmatmul.mubr.bf16.gmra.mxu0 %v3260
        %v4922 = vpop.f32.mrf.mxu0
        %v4923 = vadd.f32 %v2951, %v4922
        %v4924 = vpop.f32.mrf.mxu0
        %v4925 = vadd.f32 %v2955, %v4924
        %v4926 = vpop.f32.mrf.mxu0
        %v4927 = vadd.f32 %v2951, %v4926
        %v4928 = vpop.f32.mrf.mxu0
        %v4929 = vadd.f32 %v2955, %v4928
        %4930 = vdwg.mxu0
        %4931 = vmatprep.subr.bf16.mxu0 %v4341
        %4932 = vmatpush1.bf16.msra.mxu0 %v4340
        %4933 = vmatprep.subr.bf16.mxu0 %v4335
        %4934 = vmatpush1.bf16.msra.mxu0 %v4334
        %4935 = vmatprep.subr.bf16.mxu0 %v4329
        %4936 = vmatpush1.bf16.msra.mxu0 %v4328
        %4937 = vmatprep.subr.bf16.mxu0 %v4323
        %4938 = vmatpush1.bf16.msra.mxu0 %v4322
        %4939 = vmatprep.subr.bf16.mxu0 %v4317
        %4940 = vmatpush1.bf16.msra.mxu0 %v4316
        %4941 = vmatprep.subr.bf16.mxu0 %v4311
        %4942 = vmatpush1.bf16.msra.mxu0 %v4310
        %4943 = vmatprep.subr.bf16.mxu0 %v4305
        %4944 = vmatpush1.bf16.msra.mxu0 %v4304
        %4945 = vmatprep.subr.bf16.mxu0 %v4299
        %4946 = vmatpush1.bf16.msra.mxu0 %v4298
        %4947 = vmatprep.subr.bf16.mxu0 %v4389
        %4948 = vmatpush2.bf16.msra.mxu0 %v4388
        %4949 = vmatprep.subr.bf16.mxu0 %v4383
        %4950 = vmatpush2.bf16.msra.mxu0 %v4382
        %4951 = vmatprep.subr.bf16.mxu0 %v4377
        %4952 = vmatpush2.bf16.msra.mxu0 %v4376
        %4953 = vmatprep.subr.bf16.mxu0 %v4371
        %4954 = vmatpush2.bf16.msra.mxu0 %v4370
        %4955 = vmatprep.subr.bf16.mxu0 %v4365
        %4956 = vmatpush2.bf16.msra.mxu0 %v4364
        %4957 = vmatprep.subr.bf16.mxu0 %v4359
        %4958 = vmatpush2.bf16.msra.mxu0 %v4358
        %4959 = vmatprep.subr.bf16.mxu0 %v4353
        %4960 = vmatpush2.bf16.msra.mxu0 %v4352
        %4961 = vmatprep.subr.bf16.mxu0 %v4347
        %4962 = vmatpush2.bf16.msra.mxu0 %v4346
        %4963 = vmatprep.mubr.bf16.mxu0 %v3197
        %4964 = vmatmul.mubr.bf16.gmra.mxu0 %v3196
        %v4965 = vpop.f32.mrf.mxu0
        %v4966 = vadd.f32 %v4813, %v4965
        %v4967 = vpop.f32.mrf.mxu0
        %v4968 = vadd.f32 %v4815, %v4967
        %v4969 = vpop.f32.mrf.mxu0
        %v4970 = vadd.f32 %v4817, %v4969
        %v4971 = vpop.f32.mrf.mxu0
        %v4972 = vadd.f32 %v4819, %v4971
        %4973 = vmatprep.mubr.bf16.mxu0 %v3203
        %4974 = vmatmul.mubr.bf16.gmra.mxu0 %v3202
        %v4975 = vpop.f32.mrf.mxu0
        %v4976 = vadd.f32 %v4823, %v4975
        %v4977 = vpop.f32.mrf.mxu0
        %v4978 = vadd.f32 %v4825, %v4977
        %v4979 = vpop.f32.mrf.mxu0
        %v4980 = vadd.f32 %v4827, %v4979
        %v4981 = vpop.f32.mrf.mxu0
        %v4982 = vadd.f32 %v4829, %v4981
        %4983 = vmatprep.mubr.bf16.mxu0 %v3209
        %4984 = vmatmul.mubr.bf16.gmra.mxu0 %v3208
        %v4985 = vpop.f32.mrf.mxu0
        %v4986 = vadd.f32 %v4833, %v4985
        %v4987 = vpop.f32.mrf.mxu0
        %v4988 = vadd.f32 %v4835, %v4987
        %v4989 = vpop.f32.mrf.mxu0
        %v4990 = vadd.f32 %v4837, %v4989
        %v4991 = vpop.f32.mrf.mxu0
        %v4992 = vadd.f32 %v4839, %v4991
        %4993 = vmatprep.mubr.bf16.mxu0 %v3215
        %4994 = vmatmul.mubr.bf16.gmra.mxu0 %v3214
        %v4995 = vpop.f32.mrf.mxu0
        %v4996 = vadd.f32 %v4843, %v4995
        %v4997 = vpop.f32.mrf.mxu0
        %v4998 = vadd.f32 %v4845, %v4997
        %v4999 = vpop.f32.mrf.mxu0
        %v5000 = vadd.f32 %v4847, %v4999
        %v5001 = vpop.f32.mrf.mxu0
        %v5002 = vadd.f32 %v4849, %v5001
        %5003 = vmatprep.mubr.bf16.mxu0 %v3221
        %5004 = vmatmul.mubr.bf16.gmra.mxu0 %v3220
        %v5005 = vpop.f32.mrf.mxu0
        %v5006 = vadd.f32 %v4853, %v5005
        %v5007 = vpop.f32.mrf.mxu0
        %v5008 = vadd.f32 %v4855, %v5007
        %v5009 = vpop.f32.mrf.mxu0
        %v5010 = vadd.f32 %v4857, %v5009
        %v5011 = vpop.f32.mrf.mxu0
        %v5012 = vadd.f32 %v4859, %v5011
        %5013 = vmatprep.mubr.bf16.mxu0 %v3227
        %5014 = vmatmul.mubr.bf16.gmra.mxu0 %v3226
        %v5015 = vpop.f32.mrf.mxu0
        %v5016 = vadd.f32 %v4863, %v5015
        %v5017 = vpop.f32.mrf.mxu0
        %v5018 = vadd.f32 %v4865, %v5017
        %v5019 = vpop.f32.mrf.mxu0
        %v5020 = vadd.f32 %v4867, %v5019
        %v5021 = vpop.f32.mrf.mxu0
        %v5022 = vadd.f32 %v4869, %v5021
        %5023 = vmatprep.mubr.bf16.mxu0 %v3233
        %5024 = vmatmul.mubr.bf16.gmra.mxu0 %v3232
        %v5025 = vpop.f32.mrf.mxu0
        %v5026 = vadd.f32 %v4873, %v5025
        %v5027 = vpop.f32.mrf.mxu0
        %v5028 = vadd.f32 %v4875, %v5027
        %v5029 = vpop.f32.mrf.mxu0
        %v5030 = vadd.f32 %v4877, %v5029
        %v5031 = vpop.f32.mrf.mxu0
        %v5032 = vadd.f32 %v4879, %v5031
        %5033 = vmatprep.mubr.bf16.mxu0 %v3239
        %5034 = vmatmul.mubr.bf16.gmra.mxu0 %v3238
        %v5035 = vpop.f32.mrf.mxu0
        %v5036 = vadd.f32 %v4883, %v5035
        %v5037 = vpop.f32.mrf.mxu0
        %v5038 = vadd.f32 %v4885, %v5037
        %v5039 = vpop.f32.mrf.mxu0
        %v5040 = vadd.f32 %v4887, %v5039
        %v5041 = vpop.f32.mrf.mxu0
        %v5042 = vadd.f32 %v4889, %v5041
        %5043 = vmatprep.mubr.bf16.mxu0 %v3245
        %5044 = vmatmul.mubr.bf16.gmra.mxu0 %v3244
        %v5045 = vpop.f32.mrf.mxu0
        %v5046 = vadd.f32 %v4893, %v5045
        %v5047 = vpop.f32.mrf.mxu0
        %v5048 = vadd.f32 %v4895, %v5047
        %v5049 = vpop.f32.mrf.mxu0
        %v5050 = vadd.f32 %v4897, %v5049
        %v5051 = vpop.f32.mrf.mxu0
        %v5052 = vadd.f32 %v4899, %v5051
        %5053 = vmatprep.mubr.bf16.mxu0 %v3251
        %5054 = vmatmul.mubr.bf16.gmra.mxu0 %v3250
        %v5055 = vpop.f32.mrf.mxu0
        %v5056 = vadd.f32 %v4903, %v5055
        %v5057 = vpop.f32.mrf.mxu0
        %v5058 = vadd.f32 %v4905, %v5057
        %v5059 = vpop.f32.mrf.mxu0
        %v5060 = vadd.f32 %v4907, %v5059
        %v5061 = vpop.f32.mrf.mxu0
        %v5062 = vadd.f32 %v4909, %v5061
        %5063 = vmatprep.mubr.bf16.mxu0 %v3257
        %5064 = vmatmul.mubr.bf16.gmra.mxu0 %v3256
        %v5065 = vpop.f32.mrf.mxu0
        %v5066 = vadd.f32 %v4913, %v5065
        %v5067 = vpop.f32.mrf.mxu0
        %v5068 = vadd.f32 %v4915, %v5067
        %v5069 = vpop.f32.mrf.mxu0
        %v5070 = vadd.f32 %v4917, %v5069
        %v5071 = vpop.f32.mrf.mxu0
        %v5072 = vadd.f32 %v4919, %v5071
        %5073 = vmatprep.mubr.bf16.mxu0 %v3263
        %5074 = vmatmul.mubr.bf16.gmra.mxu0 %v3262
        %v5075 = vpop.f32.mrf.mxu0
        %v5076 = vadd.f32 %v4923, %v5075
        %v5077 = vpop.f32.mrf.mxu0
        %v5078 = vadd.f32 %v4925, %v5077
        %v5079 = vpop.f32.mrf.mxu0
        %v5080 = vadd.f32 %v4927, %v5079
        %v5081 = vpop.f32.mrf.mxu0
        %v5082 = vadd.f32 %v4929, %v5081
        %5083 = vdwg.mxu0
        %5084 = vmatprep.subr.bf16.mxu0 %v4437
        %5085 = vmatpush1.bf16.msra.mxu0 %v4436
        %5086 = vmatprep.subr.bf16.mxu0 %v4431
        %5087 = vmatpush1.bf16.msra.mxu0 %v4430
        %5088 = vmatprep.subr.bf16.mxu0 %v4425
        %5089 = vmatpush1.bf16.msra.mxu0 %v4424
        %5090 = vmatprep.subr.bf16.mxu0 %v4419
        %5091 = vmatpush1.bf16.msra.mxu0 %v4418
        %5092 = vmatprep.subr.bf16.mxu0 %v4413
        %5093 = vmatpush1.bf16.msra.mxu0 %v4412
        %5094 = vmatprep.subr.bf16.mxu0 %v4407
        %5095 = vmatpush1.bf16.msra.mxu0 %v4406
        %5096 = vmatprep.subr.bf16.mxu0 %v4401
        %5097 = vmatpush1.bf16.msra.mxu0 %v4400
        %5098 = vmatprep.subr.bf16.mxu0 %v4395
        %5099 = vmatpush1.bf16.msra.mxu0 %v4394
        %5100 = vmatprep.subr.bf16.mxu0 %v4485
        %5101 = vmatpush2.bf16.msra.mxu0 %v4484
        %5102 = vmatprep.subr.bf16.mxu0 %v4479
        %5103 = vmatpush2.bf16.msra.mxu0 %v4478
        %5104 = vmatprep.subr.bf16.mxu0 %v4473
        %5105 = vmatpush2.bf16.msra.mxu0 %v4472
        %5106 = vmatprep.subr.bf16.mxu0 %v4467
        %5107 = vmatpush2.bf16.msra.mxu0 %v4466
        %5108 = vmatprep.subr.bf16.mxu0 %v4461
        %5109 = vmatpush2.bf16.msra.mxu0 %v4460
        %5110 = vmatprep.subr.bf16.mxu0 %v4455
        %5111 = vmatpush2.bf16.msra.mxu0 %v4454
        %5112 = vmatprep.subr.bf16.mxu0 %v4449
        %5113 = vmatpush2.bf16.msra.mxu0 %v4448
        %5114 = vmatprep.subr.bf16.mxu0 %v4443
        %5115 = vmatpush2.bf16.msra.mxu0 %v4442
        %5116 = vmatprep.mubr.bf16.mxu0 %v3199
        %5117 = vmatmul.mubr.bf16.gmra.mxu0 %v3198
        %v5118 = vpop.f32.mrf.mxu0
        %v5119 = vadd.f32 %v4966, %v5118
        %v5120 = vpop.f32.mrf.mxu0
        %v5121 = vadd.f32 %v4968, %v5120
        %v5122 = vpop.f32.mrf.mxu0
        %v5123 = vadd.f32 %v4970, %v5122
        %v5124 = vpop.f32.mrf.mxu0
        %v5125 = vadd.f32 %v4972, %v5124
        %5126 = vmatprep.mubr.bf16.mxu0 %v3205
        %5127 = vmatmul.mubr.bf16.gmra.mxu0 %v3204
        %v5128 = vpop.f32.mrf.mxu0
        %v5129 = vadd.f32 %v4976, %v5128
        %v5130 = vpop.f32.mrf.mxu0
        %v5131 = vadd.f32 %v4978, %v5130
        %v5132 = vpop.f32.mrf.mxu0
        %v5133 = vadd.f32 %v4980, %v5132
        %v5134 = vpop.f32.mrf.mxu0
        %v5135 = vadd.f32 %v4982, %v5134
        %5136 = vmatprep.mubr.bf16.mxu0 %v3211
        %5137 = vmatmul.mubr.bf16.gmra.mxu0 %v3210
        %v5138 = vpop.f32.mrf.mxu0
        %v5139 = vadd.f32 %v4986, %v5138
        %v5140 = vpop.f32.mrf.mxu0
        %v5141 = vadd.f32 %v4988, %v5140
        %v5142 = vpop.f32.mrf.mxu0
        %v5143 = vadd.f32 %v4990, %v5142
        %v5144 = vpop.f32.mrf.mxu0
        %v5145 = vadd.f32 %v4992, %v5144
        %5146 = vmatprep.mubr.bf16.mxu0 %v3217
        %5147 = vmatmul.mubr.bf16.gmra.mxu0 %v3216
        %v5148 = vpop.f32.mrf.mxu0
        %v5149 = vadd.f32 %v4996, %v5148
        %v5150 = vpop.f32.mrf.mxu0
        %v5151 = vadd.f32 %v4998, %v5150
        %v5152 = vpop.f32.mrf.mxu0
        %v5153 = vadd.f32 %v5000, %v5152
        %v5154 = vpop.f32.mrf.mxu0
        %v5155 = vadd.f32 %v5002, %v5154
        %5156 = vmatprep.mubr.bf16.mxu0 %v3223
        %5157 = vmatmul.mubr.bf16.gmra.mxu0 %v3222
        %v5158 = vpop.f32.mrf.mxu0
        %v5159 = vadd.f32 %v5006, %v5158
        %v5160 = vpop.f32.mrf.mxu0
        %v5161 = vadd.f32 %v5008, %v5160
        %v5162 = vpop.f32.mrf.mxu0
        %v5163 = vadd.f32 %v5010, %v5162
        %v5164 = vpop.f32.mrf.mxu0
        %v5165 = vadd.f32 %v5012, %v5164
        %5166 = vmatprep.mubr.bf16.mxu0 %v3229
        %5167 = vmatmul.mubr.bf16.gmra.mxu0 %v3228
        %v5168 = vpop.f32.mrf.mxu0
        %v5169 = vadd.f32 %v5016, %v5168
        %v5170 = vpop.f32.mrf.mxu0
        %v5171 = vadd.f32 %v5018, %v5170
        %v5172 = vpop.f32.mrf.mxu0
        %v5173 = vadd.f32 %v5020, %v5172
        %v5174 = vpop.f32.mrf.mxu0
        %v5175 = vadd.f32 %v5022, %v5174
        %5176 = vmatprep.mubr.bf16.mxu0 %v3235
        %5177 = vmatmul.mubr.bf16.gmra.mxu0 %v3234
        %v5178 = vpop.f32.mrf.mxu0
        %v5179 = vadd.f32 %v5026, %v5178
        %v5180 = vpop.f32.mrf.mxu0
        %v5181 = vadd.f32 %v5028, %v5180
        %v5182 = vpop.f32.mrf.mxu0
        %v5183 = vadd.f32 %v5030, %v5182
        %v5184 = vpop.f32.mrf.mxu0
        %v5185 = vadd.f32 %v5032, %v5184
        %5186 = vmatprep.mubr.bf16.mxu0 %v3241
        %5187 = vmatmul.mubr.bf16.gmra.mxu0 %v3240
        %v5188 = vpop.f32.mrf.mxu0
        %v5189 = vadd.f32 %v5036, %v5188
        %v5190 = vpop.f32.mrf.mxu0
        %v5191 = vadd.f32 %v5038, %v5190
        %v5192 = vpop.f32.mrf.mxu0
        %v5193 = vadd.f32 %v5040, %v5192
        %v5194 = vpop.f32.mrf.mxu0
        %v5195 = vadd.f32 %v5042, %v5194
        %5196 = vmatprep.mubr.bf16.mxu0 %v3247
        %5197 = vmatmul.mubr.bf16.gmra.mxu0 %v3246
        %v5198 = vpop.f32.mrf.mxu0
        %v5199 = vadd.f32 %v5046, %v5198
        %v5200 = vpop.f32.mrf.mxu0
        %v5201 = vadd.f32 %v5048, %v5200
        %v5202 = vpop.f32.mrf.mxu0
        %v5203 = vadd.f32 %v5050, %v5202
        %v5204 = vpop.f32.mrf.mxu0
        %v5205 = vadd.f32 %v5052, %v5204
        %5206 = vmatprep.mubr.bf16.mxu0 %v3253
        %5207 = vmatmul.mubr.bf16.gmra.mxu0 %v3252
        %v5208 = vpop.f32.mrf.mxu0
        %v5209 = vadd.f32 %v5056, %v5208
        %v5210 = vpop.f32.mrf.mxu0
        %v5211 = vadd.f32 %v5058, %v5210
        %v5212 = vpop.f32.mrf.mxu0
        %v5213 = vadd.f32 %v5060, %v5212
        %v5214 = vpop.f32.mrf.mxu0
        %v5215 = vadd.f32 %v5062, %v5214
        %5216 = vmatprep.mubr.bf16.mxu0 %v3259
        %5217 = vmatmul.mubr.bf16.gmra.mxu0 %v3258
        %v5218 = vpop.f32.mrf.mxu0
        %v5219 = vadd.f32 %v5066, %v5218
        %v5220 = vpop.f32.mrf.mxu0
        %v5221 = vadd.f32 %v5068, %v5220
        %v5222 = vpop.f32.mrf.mxu0
        %v5223 = vadd.f32 %v5070, %v5222
        %v5224 = vpop.f32.mrf.mxu0
        %v5225 = vadd.f32 %v5072, %v5224
        %5226 = vmatprep.mubr.bf16.mxu0 %v3265
        %5227 = vmatmul.mubr.bf16.gmra.mxu0 %v3264
        %v5228 = vpop.f32.mrf.mxu0
        %v5229 = vadd.f32 %v5076, %v5228
        %v5230 = vpop.f32.mrf.mxu0
        %v5231 = vadd.f32 %v5078, %v5230
        %v5232 = vpop.f32.mrf.mxu0
        %v5233 = vadd.f32 %v5080, %v5232
        %v5234 = vpop.f32.mrf.mxu0
        %v5235 = vadd.f32 %v5082, %v5234
        %5236 = vdwg.mxu0
        %5237 = vmatprep.subr.bf16.mxu0 %v4247
        %5238 = vmatpush1.bf16.msra.mxu0 %v4246
        %5239 = vmatprep.subr.bf16.mxu0 %v4241
        %5240 = vmatpush1.bf16.msra.mxu0 %v4240
        %5241 = vmatprep.subr.bf16.mxu0 %v4235
        %5242 = vmatpush1.bf16.msra.mxu0 %v4234
        %5243 = vmatprep.subr.bf16.mxu0 %v4229
        %5244 = vmatpush1.bf16.msra.mxu0 %v4228
        %5245 = vmatprep.subr.bf16.mxu0 %v4223
        %5246 = vmatpush1.bf16.msra.mxu0 %v4222
        %5247 = vmatprep.subr.bf16.mxu0 %v4217
        %5248 = vmatpush1.bf16.msra.mxu0 %v4216
        %5249 = vmatprep.subr.bf16.mxu0 %v4211
        %5250 = vmatpush1.bf16.msra.mxu0 %v4210
        %5251 = vmatprep.subr.bf16.mxu0 %v4205
        %5252 = vmatpush1.bf16.msra.mxu0 %v4204
        %5253 = vmatprep.subr.bf16.mxu0 %v4295
        %5254 = vmatpush2.bf16.msra.mxu0 %v4294
        %5255 = vmatprep.subr.bf16.mxu0 %v4289
        %5256 = vmatpush2.bf16.msra.mxu0 %v4288
        %5257 = vmatprep.subr.bf16.mxu0 %v4283
        %5258 = vmatpush2.bf16.msra.mxu0 %v4282
        %5259 = vmatprep.subr.bf16.mxu0 %v4277
        %5260 = vmatpush2.bf16.msra.mxu0 %v4276
        %5261 = vmatprep.subr.bf16.mxu0 %v4271
        %5262 = vmatpush2.bf16.msra.mxu0 %v4270
        %5263 = vmatprep.subr.bf16.mxu0 %v4265
        %5264 = vmatpush2.bf16.msra.mxu0 %v4264
        %5265 = vmatprep.subr.bf16.mxu0 %v4259
        %5266 = vmatpush2.bf16.msra.mxu0 %v4258
        %5267 = vmatprep.subr.bf16.mxu0 %v4253
        %5268 = vmatpush2.bf16.msra.mxu0 %v4252
        %5269 = vmatprep.mubr.bf16.mxu0 %v3195
        %5270 = vmatmul.mubr.bf16.gmra.mxu0 %v3194
        %v5271 = vpop.f32.mrf.mxu0
        %v5272 = vadd.f32 %v2959, %v5271
        %v5273 = vpop.f32.mrf.mxu0
        %v5274 = vadd.f32 %v2963, %v5273
        %v5275 = vpop.f32.mrf.mxu0
        %v5276 = vadd.f32 %v2959, %v5275
        %v5277 = vpop.f32.mrf.mxu0
        %v5278 = vadd.f32 %v2963, %v5277
        %5279 = vmatprep.mubr.bf16.mxu0 %v3201
        %5280 = vmatmul.mubr.bf16.gmra.mxu0 %v3200
        %v5281 = vpop.f32.mrf.mxu0
        %v5282 = vadd.f32 %v2959, %v5281
        %v5283 = vpop.f32.mrf.mxu0
        %v5284 = vadd.f32 %v2963, %v5283
        %v5285 = vpop.f32.mrf.mxu0
        %v5286 = vadd.f32 %v2959, %v5285
        %v5287 = vpop.f32.mrf.mxu0
        %v5288 = vadd.f32 %v2963, %v5287
        %5289 = vmatprep.mubr.bf16.mxu0 %v3207
        %5290 = vmatmul.mubr.bf16.gmra.mxu0 %v3206
        %v5291 = vpop.f32.mrf.mxu0
        %v5292 = vadd.f32 %v2959, %v5291
        %v5293 = vpop.f32.mrf.mxu0
        %v5294 = vadd.f32 %v2963, %v5293
        %v5295 = vpop.f32.mrf.mxu0
        %v5296 = vadd.f32 %v2959, %v5295
        %v5297 = vpop.f32.mrf.mxu0
        %v5298 = vadd.f32 %v2963, %v5297
        %5299 = vmatprep.mubr.bf16.mxu0 %v3213
        %5300 = vmatmul.mubr.bf16.gmra.mxu0 %v3212
        %v5301 = vpop.f32.mrf.mxu0
        %v5302 = vadd.f32 %v2959, %v5301
        %v5303 = vpop.f32.mrf.mxu0
        %v5304 = vadd.f32 %v2963, %v5303
        %v5305 = vpop.f32.mrf.mxu0
        %v5306 = vadd.f32 %v2959, %v5305
        %v5307 = vpop.f32.mrf.mxu0
        %v5308 = vadd.f32 %v2963, %v5307
        %5309 = vmatprep.mubr.bf16.mxu0 %v3219
        %5310 = vmatmul.mubr.bf16.gmra.mxu0 %v3218
        %v5311 = vpop.f32.mrf.mxu0
        %v5312 = vadd.f32 %v2959, %v5311
        %v5313 = vpop.f32.mrf.mxu0
        %v5314 = vadd.f32 %v2963, %v5313
        %v5315 = vpop.f32.mrf.mxu0
        %v5316 = vadd.f32 %v2959, %v5315
        %v5317 = vpop.f32.mrf.mxu0
        %v5318 = vadd.f32 %v2963, %v5317
        %5319 = vmatprep.mubr.bf16.mxu0 %v3225
        %5320 = vmatmul.mubr.bf16.gmra.mxu0 %v3224
        %v5321 = vpop.f32.mrf.mxu0
        %v5322 = vadd.f32 %v2959, %v5321
        %v5323 = vpop.f32.mrf.mxu0
        %v5324 = vadd.f32 %v2963, %v5323
        %v5325 = vpop.f32.mrf.mxu0
        %v5326 = vadd.f32 %v2959, %v5325
        %v5327 = vpop.f32.mrf.mxu0
        %v5328 = vadd.f32 %v2963, %v5327
        %5329 = vmatprep.mubr.bf16.mxu0 %v3231
        %5330 = vmatmul.mubr.bf16.gmra.mxu0 %v3230
        %v5331 = vpop.f32.mrf.mxu0
        %v5332 = vadd.f32 %v2959, %v5331
        %v5333 = vpop.f32.mrf.mxu0
        %v5334 = vadd.f32 %v2963, %v5333
        %v5335 = vpop.f32.mrf.mxu0
        %v5336 = vadd.f32 %v2959, %v5335
        %v5337 = vpop.f32.mrf.mxu0
        %v5338 = vadd.f32 %v2963, %v5337
        %5339 = vmatprep.mubr.bf16.mxu0 %v3237
        %5340 = vmatmul.mubr.bf16.gmra.mxu0 %v3236
        %v5341 = vpop.f32.mrf.mxu0
        %v5342 = vadd.f32 %v2959, %v5341
        %v5343 = vpop.f32.mrf.mxu0
        %v5344 = vadd.f32 %v2963, %v5343
        %v5345 = vpop.f32.mrf.mxu0
        %v5346 = vadd.f32 %v2959, %v5345
        %v5347 = vpop.f32.mrf.mxu0
        %v5348 = vadd.f32 %v2963, %v5347
        %5349 = vmatprep.mubr.bf16.mxu0 %v3243
        %5350 = vmatmul.mubr.bf16.gmra.mxu0 %v3242
        %v5351 = vpop.f32.mrf.mxu0
        %v5352 = vadd.f32 %v2959, %v5351
        %v5353 = vpop.f32.mrf.mxu0
        %v5354 = vadd.f32 %v2963, %v5353
        %v5355 = vpop.f32.mrf.mxu0
        %v5356 = vadd.f32 %v2959, %v5355
        %v5357 = vpop.f32.mrf.mxu0
        %v5358 = vadd.f32 %v2963, %v5357
        %5359 = vmatprep.mubr.bf16.mxu0 %v3249
        %5360 = vmatmul.mubr.bf16.gmra.mxu0 %v3248
        %v5361 = vpop.f32.mrf.mxu0
        %v5362 = vadd.f32 %v2959, %v5361
        %v5363 = vpop.f32.mrf.mxu0
        %v5364 = vadd.f32 %v2963, %v5363
        %v5365 = vpop.f32.mrf.mxu0
        %v5366 = vadd.f32 %v2959, %v5365
        %v5367 = vpop.f32.mrf.mxu0
        %v5368 = vadd.f32 %v2963, %v5367
        %5369 = vmatprep.mubr.bf16.mxu0 %v3255
        %5370 = vmatmul.mubr.bf16.gmra.mxu0 %v3254
        %v5371 = vpop.f32.mrf.mxu0
        %v5372 = vadd.f32 %v2959, %v5371
        %v5373 = vpop.f32.mrf.mxu0
        %v5374 = vadd.f32 %v2963, %v5373
        %v5375 = vpop.f32.mrf.mxu0
        %v5376 = vadd.f32 %v2959, %v5375
        %v5377 = vpop.f32.mrf.mxu0
        %v5378 = vadd.f32 %v2963, %v5377
        %5379 = vmatprep.mubr.bf16.mxu0 %v3261
        %5380 = vmatmul.mubr.bf16.gmra.mxu0 %v3260
        %v5381 = vpop.f32.mrf.mxu0
        %v5382 = vadd.f32 %v2959, %v5381
        %v5383 = vpop.f32.mrf.mxu0
        %v5384 = vadd.f32 %v2963, %v5383
        %v5385 = vpop.f32.mrf.mxu0
        %v5386 = vadd.f32 %v2959, %v5385
        %v5387 = vpop.f32.mrf.mxu0
        %v5388 = vadd.f32 %v2963, %v5387
        %5389 = vdwg.mxu0
        %5390 = vmatprep.subr.bf16.mxu0 %v4343
        %5391 = vmatpush1.bf16.msra.mxu0 %v4342
        %5392 = vmatprep.subr.bf16.mxu0 %v4337
        %5393 = vmatpush1.bf16.msra.mxu0 %v4336
        %5394 = vmatprep.subr.bf16.mxu0 %v4331
        %5395 = vmatpush1.bf16.msra.mxu0 %v4330
        %5396 = vmatprep.subr.bf16.mxu0 %v4325
        %5397 = vmatpush1.bf16.msra.mxu0 %v4324
        %5398 = vmatprep.subr.bf16.mxu0 %v4319
        %5399 = vmatpush1.bf16.msra.mxu0 %v4318
        %5400 = vmatprep.subr.bf16.mxu0 %v4313
        %5401 = vmatpush1.bf16.msra.mxu0 %v4312
        %5402 = vmatprep.subr.bf16.mxu0 %v4307
        %5403 = vmatpush1.bf16.msra.mxu0 %v4306
        %5404 = vmatprep.subr.bf16.mxu0 %v4301
        %5405 = vmatpush1.bf16.msra.mxu0 %v4300
        %5406 = vmatprep.subr.bf16.mxu0 %v4391
        %5407 = vmatpush2.bf16.msra.mxu0 %v4390
        %5408 = vmatprep.subr.bf16.mxu0 %v4385
        %5409 = vmatpush2.bf16.msra.mxu0 %v4384
        %5410 = vmatprep.subr.bf16.mxu0 %v4379
        %5411 = vmatpush2.bf16.msra.mxu0 %v4378
        %5412 = vmatprep.subr.bf16.mxu0 %v4373
        %5413 = vmatpush2.bf16.msra.mxu0 %v4372
        %5414 = vmatprep.subr.bf16.mxu0 %v4367
        %5415 = vmatpush2.bf16.msra.mxu0 %v4366
        %5416 = vmatprep.subr.bf16.mxu0 %v4361
        %5417 = vmatpush2.bf16.msra.mxu0 %v4360
        %5418 = vmatprep.subr.bf16.mxu0 %v4355
        %5419 = vmatpush2.bf16.msra.mxu0 %v4354
        %5420 = vmatprep.subr.bf16.mxu0 %v4349
        %5421 = vmatpush2.bf16.msra.mxu0 %v4348
        %5422 = vmatprep.mubr.bf16.mxu0 %v3197
        %5423 = vmatmul.mubr.bf16.gmra.mxu0 %v3196
        %v5424 = vpop.f32.mrf.mxu0
        %v5425 = vadd.f32 %v5272, %v5424
        %v5426 = vpop.f32.mrf.mxu0
        %v5427 = vadd.f32 %v5274, %v5426
        %v5428 = vpop.f32.mrf.mxu0
        %v5429 = vadd.f32 %v5276, %v5428
        %v5430 = vpop.f32.mrf.mxu0
        %v5431 = vadd.f32 %v5278, %v5430
        %5432 = vmatprep.mubr.bf16.mxu0 %v3203
        %5433 = vmatmul.mubr.bf16.gmra.mxu0 %v3202
        %v5434 = vpop.f32.mrf.mxu0
        %v5435 = vadd.f32 %v5282, %v5434
        %v5436 = vpop.f32.mrf.mxu0
        %v5437 = vadd.f32 %v5284, %v5436
        %v5438 = vpop.f32.mrf.mxu0
        %v5439 = vadd.f32 %v5286, %v5438
        %v5440 = vpop.f32.mrf.mxu0
        %v5441 = vadd.f32 %v5288, %v5440
        %5442 = vmatprep.mubr.bf16.mxu0 %v3209
        %5443 = vmatmul.mubr.bf16.gmra.mxu0 %v3208
        %v5444 = vpop.f32.mrf.mxu0
        %v5445 = vadd.f32 %v5292, %v5444
        %v5446 = vpop.f32.mrf.mxu0
        %v5447 = vadd.f32 %v5294, %v5446
        %v5448 = vpop.f32.mrf.mxu0
        %v5449 = vadd.f32 %v5296, %v5448
        %v5450 = vpop.f32.mrf.mxu0
        %v5451 = vadd.f32 %v5298, %v5450
        %5452 = vmatprep.mubr.bf16.mxu0 %v3215
        %5453 = vmatmul.mubr.bf16.gmra.mxu0 %v3214
        %v5454 = vpop.f32.mrf.mxu0
        %v5455 = vadd.f32 %v5302, %v5454
        %v5456 = vpop.f32.mrf.mxu0
        %v5457 = vadd.f32 %v5304, %v5456
        %v5458 = vpop.f32.mrf.mxu0
        %v5459 = vadd.f32 %v5306, %v5458
        %v5460 = vpop.f32.mrf.mxu0
        %v5461 = vadd.f32 %v5308, %v5460
        %5462 = vmatprep.mubr.bf16.mxu0 %v3221
        %5463 = vmatmul.mubr.bf16.gmra.mxu0 %v3220
        %v5464 = vpop.f32.mrf.mxu0
        %v5465 = vadd.f32 %v5312, %v5464
        %v5466 = vpop.f32.mrf.mxu0
        %v5467 = vadd.f32 %v5314, %v5466
        %v5468 = vpop.f32.mrf.mxu0
        %v5469 = vadd.f32 %v5316, %v5468
        %v5470 = vpop.f32.mrf.mxu0
        %v5471 = vadd.f32 %v5318, %v5470
        %5472 = vmatprep.mubr.bf16.mxu0 %v3227
        %5473 = vmatmul.mubr.bf16.gmra.mxu0 %v3226
        %v5474 = vpop.f32.mrf.mxu0
        %v5475 = vadd.f32 %v5322, %v5474
        %v5476 = vpop.f32.mrf.mxu0
        %v5477 = vadd.f32 %v5324, %v5476
        %v5478 = vpop.f32.mrf.mxu0
        %v5479 = vadd.f32 %v5326, %v5478
        %v5480 = vpop.f32.mrf.mxu0
        %v5481 = vadd.f32 %v5328, %v5480
        %5482 = vmatprep.mubr.bf16.mxu0 %v3233
        %5483 = vmatmul.mubr.bf16.gmra.mxu0 %v3232
        %v5484 = vpop.f32.mrf.mxu0
        %v5485 = vadd.f32 %v5332, %v5484
        %v5486 = vpop.f32.mrf.mxu0
        %v5487 = vadd.f32 %v5334, %v5486
        %v5488 = vpop.f32.mrf.mxu0
        %v5489 = vadd.f32 %v5336, %v5488
        %v5490 = vpop.f32.mrf.mxu0
        %v5491 = vadd.f32 %v5338, %v5490
        %5492 = vmatprep.mubr.bf16.mxu0 %v3239
        %5493 = vmatmul.mubr.bf16.gmra.mxu0 %v3238
        %v5494 = vpop.f32.mrf.mxu0
        %v5495 = vadd.f32 %v5342, %v5494
        %v5496 = vpop.f32.mrf.mxu0
        %v5497 = vadd.f32 %v5344, %v5496
        %v5498 = vpop.f32.mrf.mxu0
        %v5499 = vadd.f32 %v5346, %v5498
        %v5500 = vpop.f32.mrf.mxu0
        %v5501 = vadd.f32 %v5348, %v5500
        %5502 = vmatprep.mubr.bf16.mxu0 %v3245
        %5503 = vmatmul.mubr.bf16.gmra.mxu0 %v3244
        %v5504 = vpop.f32.mrf.mxu0
        %v5505 = vadd.f32 %v5352, %v5504
        %v5506 = vpop.f32.mrf.mxu0
        %v5507 = vadd.f32 %v5354, %v5506
        %v5508 = vpop.f32.mrf.mxu0
        %v5509 = vadd.f32 %v5356, %v5508
        %v5510 = vpop.f32.mrf.mxu0
        %v5511 = vadd.f32 %v5358, %v5510
        %5512 = vmatprep.mubr.bf16.mxu0 %v3251
        %5513 = vmatmul.mubr.bf16.gmra.mxu0 %v3250
        %v5514 = vpop.f32.mrf.mxu0
        %v5515 = vadd.f32 %v5362, %v5514
        %v5516 = vpop.f32.mrf.mxu0
        %v5517 = vadd.f32 %v5364, %v5516
        %v5518 = vpop.f32.mrf.mxu0
        %v5519 = vadd.f32 %v5366, %v5518
        %v5520 = vpop.f32.mrf.mxu0
        %v5521 = vadd.f32 %v5368, %v5520
        %5522 = vmatprep.mubr.bf16.mxu0 %v3257
        %5523 = vmatmul.mubr.bf16.gmra.mxu0 %v3256
        %v5524 = vpop.f32.mrf.mxu0
        %v5525 = vadd.f32 %v5372, %v5524
        %v5526 = vpop.f32.mrf.mxu0
        %v5527 = vadd.f32 %v5374, %v5526
        %v5528 = vpop.f32.mrf.mxu0
        %v5529 = vadd.f32 %v5376, %v5528
        %v5530 = vpop.f32.mrf.mxu0
        %v5531 = vadd.f32 %v5378, %v5530
        %5532 = vmatprep.mubr.bf16.mxu0 %v3263
        %5533 = vmatmul.mubr.bf16.gmra.mxu0 %v3262
        %v5534 = vpop.f32.mrf.mxu0
        %v5535 = vadd.f32 %v5382, %v5534
        %v5536 = vpop.f32.mrf.mxu0
        %v5537 = vadd.f32 %v5384, %v5536
        %v5538 = vpop.f32.mrf.mxu0
        %v5539 = vadd.f32 %v5386, %v5538
        %v5540 = vpop.f32.mrf.mxu0
        %v5541 = vadd.f32 %v5388, %v5540
        %5542 = vdwg.mxu0
        %5543 = vmatprep.subr.bf16.mxu0 %v4439
        %5544 = vmatpush1.bf16.msra.mxu0 %v4438
        %5545 = vmatprep.subr.bf16.mxu0 %v4433
        %5546 = vmatpush1.bf16.msra.mxu0 %v4432
        %5547 = vmatprep.subr.bf16.mxu0 %v4427
        %5548 = vmatpush1.bf16.msra.mxu0 %v4426
        %5549 = vmatprep.subr.bf16.mxu0 %v4421
        %5550 = vmatpush1.bf16.msra.mxu0 %v4420
        %5551 = vmatprep.subr.bf16.mxu0 %v4415
        %5552 = vmatpush1.bf16.msra.mxu0 %v4414
        %5553 = vmatprep.subr.bf16.mxu0 %v4409
        %5554 = vmatpush1.bf16.msra.mxu0 %v4408
        %5555 = vmatprep.subr.bf16.mxu0 %v4403
        %5556 = vmatpush1.bf16.msra.mxu0 %v4402
        %5557 = vmatprep.subr.bf16.mxu0 %v4397
        %5558 = vmatpush1.bf16.msra.mxu0 %v4396
        %5559 = vmatprep.subr.bf16.mxu0 %v4487
        %5560 = vmatpush2.bf16.msra.mxu0 %v4486
        %5561 = vmatprep.subr.bf16.mxu0 %v4481
        %5562 = vmatpush2.bf16.msra.mxu0 %v4480
        %5563 = vmatprep.subr.bf16.mxu0 %v4475
        %5564 = vmatpush2.bf16.msra.mxu0 %v4474
        %5565 = vmatprep.subr.bf16.mxu0 %v4469
        %5566 = vmatpush2.bf16.msra.mxu0 %v4468
        %5567 = vmatprep.subr.bf16.mxu0 %v4463
        %5568 = vmatpush2.bf16.msra.mxu0 %v4462
        %5569 = vmatprep.subr.bf16.mxu0 %v4457
        %5570 = vmatpush2.bf16.msra.mxu0 %v4456
        %5571 = vmatprep.subr.bf16.mxu0 %v4451
        %5572 = vmatpush2.bf16.msra.mxu0 %v4450
        %5573 = vmatprep.subr.bf16.mxu0 %v4445
        %5574 = vmatpush2.bf16.msra.mxu0 %v4444
        %5575 = vmatprep.mubr.bf16.mxu0 %v3199
        %5576 = vmatmul.mubr.bf16.gmra.mxu0 %v3198
        %v5577 = vpop.f32.mrf.mxu0
        %v5578 = vadd.f32 %v5425, %v5577
        %v5579 = vpop.f32.mrf.mxu0
        %v5580 = vadd.f32 %v5427, %v5579
        %v5581 = vpop.f32.mrf.mxu0
        %v5582 = vadd.f32 %v5429, %v5581
        %v5583 = vpop.f32.mrf.mxu0
        %v5584 = vadd.f32 %v5431, %v5583
        %5585 = vmatprep.mubr.bf16.mxu0 %v3205
        %5586 = vmatmul.mubr.bf16.gmra.mxu0 %v3204
        %v5587 = vpop.f32.mrf.mxu0
        %v5588 = vadd.f32 %v5435, %v5587
        %v5589 = vpop.f32.mrf.mxu0
        %v5590 = vadd.f32 %v5437, %v5589
        %v5591 = vpop.f32.mrf.mxu0
        %v5592 = vadd.f32 %v5439, %v5591
        %v5593 = vpop.f32.mrf.mxu0
        %v5594 = vadd.f32 %v5441, %v5593
        %5595 = vmatprep.mubr.bf16.mxu0 %v3211
        %5596 = vmatmul.mubr.bf16.gmra.mxu0 %v3210
        %v5597 = vpop.f32.mrf.mxu0
        %v5598 = vadd.f32 %v5445, %v5597
        %v5599 = vpop.f32.mrf.mxu0
        %v5600 = vadd.f32 %v5447, %v5599
        %v5601 = vpop.f32.mrf.mxu0
        %v5602 = vadd.f32 %v5449, %v5601
        %v5603 = vpop.f32.mrf.mxu0
        %v5604 = vadd.f32 %v5451, %v5603
        %5605 = vmatprep.mubr.bf16.mxu0 %v3217
        %5606 = vmatmul.mubr.bf16.gmra.mxu0 %v3216
        %v5607 = vpop.f32.mrf.mxu0
        %v5608 = vadd.f32 %v5455, %v5607
        %v5609 = vpop.f32.mrf.mxu0
        %v5610 = vadd.f32 %v5457, %v5609
        %v5611 = vpop.f32.mrf.mxu0
        %v5612 = vadd.f32 %v5459, %v5611
        %v5613 = vpop.f32.mrf.mxu0
        %v5614 = vadd.f32 %v5461, %v5613
        %5615 = vmatprep.mubr.bf16.mxu0 %v3223
        %5616 = vmatmul.mubr.bf16.gmra.mxu0 %v3222
        %v5617 = vpop.f32.mrf.mxu0
        %v5618 = vadd.f32 %v5465, %v5617
        %v5619 = vpop.f32.mrf.mxu0
        %v5620 = vadd.f32 %v5467, %v5619
        %v5621 = vpop.f32.mrf.mxu0
        %v5622 = vadd.f32 %v5469, %v5621
        %v5623 = vpop.f32.mrf.mxu0
        %v5624 = vadd.f32 %v5471, %v5623
        %5625 = vmatprep.mubr.bf16.mxu0 %v3229
        %5626 = vmatmul.mubr.bf16.gmra.mxu0 %v3228
        %v5627 = vpop.f32.mrf.mxu0
        %v5628 = vadd.f32 %v5475, %v5627
        %v5629 = vpop.f32.mrf.mxu0
        %v5630 = vadd.f32 %v5477, %v5629
        %v5631 = vpop.f32.mrf.mxu0
        %v5632 = vadd.f32 %v5479, %v5631
        %v5633 = vpop.f32.mrf.mxu0
        %v5634 = vadd.f32 %v5481, %v5633
        %5635 = vmatprep.mubr.bf16.mxu0 %v3235
        %5636 = vmatmul.mubr.bf16.gmra.mxu0 %v3234
        %v5637 = vpop.f32.mrf.mxu0
        %v5638 = vadd.f32 %v5485, %v5637
        %v5639 = vpop.f32.mrf.mxu0
        %v5640 = vadd.f32 %v5487, %v5639
        %v5641 = vpop.f32.mrf.mxu0
        %v5642 = vadd.f32 %v5489, %v5641
        %v5643 = vpop.f32.mrf.mxu0
        %v5644 = vadd.f32 %v5491, %v5643
        %5645 = vmatprep.mubr.bf16.mxu0 %v3241
        %5646 = vmatmul.mubr.bf16.gmra.mxu0 %v3240
        %v5647 = vpop.f32.mrf.mxu0
        %v5648 = vadd.f32 %v5495, %v5647
        %v5649 = vpop.f32.mrf.mxu0
        %v5650 = vadd.f32 %v5497, %v5649
        %v5651 = vpop.f32.mrf.mxu0
        %v5652 = vadd.f32 %v5499, %v5651
        %v5653 = vpop.f32.mrf.mxu0
        %v5654 = vadd.f32 %v5501, %v5653
        %5655 = vmatprep.mubr.bf16.mxu0 %v3247
        %5656 = vmatmul.mubr.bf16.gmra.mxu0 %v3246
        %v5657 = vpop.f32.mrf.mxu0
        %v5658 = vadd.f32 %v5505, %v5657
        %v5659 = vpop.f32.mrf.mxu0
        %v5660 = vadd.f32 %v5507, %v5659
        %v5661 = vpop.f32.mrf.mxu0
        %v5662 = vadd.f32 %v5509, %v5661
        %v5663 = vpop.f32.mrf.mxu0
        %v5664 = vadd.f32 %v5511, %v5663
        %5665 = vmatprep.mubr.bf16.mxu0 %v3253
        %5666 = vmatmul.mubr.bf16.gmra.mxu0 %v3252
        %v5667 = vpop.f32.mrf.mxu0
        %v5668 = vadd.f32 %v5515, %v5667
        %v5669 = vpop.f32.mrf.mxu0
        %v5670 = vadd.f32 %v5517, %v5669
        %v5671 = vpop.f32.mrf.mxu0
        %v5672 = vadd.f32 %v5519, %v5671
        %v5673 = vpop.f32.mrf.mxu0
        %v5674 = vadd.f32 %v5521, %v5673
        %5675 = vmatprep.mubr.bf16.mxu0 %v3259
        %5676 = vmatmul.mubr.bf16.gmra.mxu0 %v3258
        %v5677 = vpop.f32.mrf.mxu0
        %v5678 = vadd.f32 %v5525, %v5677
        %v5679 = vpop.f32.mrf.mxu0
        %v5680 = vadd.f32 %v5527, %v5679
        %v5681 = vpop.f32.mrf.mxu0
        %v5682 = vadd.f32 %v5529, %v5681
        %v5683 = vpop.f32.mrf.mxu0
        %v5684 = vadd.f32 %v5531, %v5683
        %5685 = vmatprep.mubr.bf16.mxu0 %v3265
        %5686 = vmatmul.mubr.bf16.gmra.mxu0 %v3264
        %v5687 = vpop.f32.mrf.mxu0
        %v5688 = vadd.f32 %v5535, %v5687
        %v5689 = vpop.f32.mrf.mxu0
        %v5690 = vadd.f32 %v5537, %v5689
        %v5691 = vpop.f32.mrf.mxu0
        %v5692 = vadd.f32 %v5539, %v5691
        %v5693 = vpop.f32.mrf.mxu0
        %v5694 = vadd.f32 %v5541, %v5693
        %5695 = vdwg.mxu0
        %5696 = vmatprep.subr.bf16.mxu0 %v4249
        %5697 = vmatpush1.bf16.msra.mxu0 %v4248
        %5698 = vmatprep.subr.bf16.mxu0 %v4243
        %5699 = vmatpush1.bf16.msra.mxu0 %v4242
        %5700 = vmatprep.subr.bf16.mxu0 %v4237
        %5701 = vmatpush1.bf16.msra.mxu0 %v4236
        %5702 = vmatprep.subr.bf16.mxu0 %v4231
        %5703 = vmatpush1.bf16.msra.mxu0 %v4230
        %5704 = vmatprep.subr.bf16.mxu0 %v4225
        %5705 = vmatpush1.bf16.msra.mxu0 %v4224
        %5706 = vmatprep.subr.bf16.mxu0 %v4219
        %5707 = vmatpush1.bf16.msra.mxu0 %v4218
        %5708 = vmatprep.subr.bf16.mxu0 %v4213
        %5709 = vmatpush1.bf16.msra.mxu0 %v4212
        %5710 = vmatprep.subr.bf16.mxu0 %v4207
        %5711 = vmatpush1.bf16.msra.mxu0 %v4206
        %5712 = vmatprep.subr.bf16.mxu0 %v4297
        %5713 = vmatpush2.bf16.msra.mxu0 %v4296
        %5714 = vmatprep.subr.bf16.mxu0 %v4291
        %5715 = vmatpush2.bf16.msra.mxu0 %v4290
        %5716 = vmatprep.subr.bf16.mxu0 %v4285
        %5717 = vmatpush2.bf16.msra.mxu0 %v4284
        %5718 = vmatprep.subr.bf16.mxu0 %v4279
        %5719 = vmatpush2.bf16.msra.mxu0 %v4278
        %5720 = vmatprep.subr.bf16.mxu0 %v4273
        %5721 = vmatpush2.bf16.msra.mxu0 %v4272
        %5722 = vmatprep.subr.bf16.mxu0 %v4267
        %5723 = vmatpush2.bf16.msra.mxu0 %v4266
        %5724 = vmatprep.subr.bf16.mxu0 %v4261
        %5725 = vmatpush2.bf16.msra.mxu0 %v4260
        %5726 = vmatprep.subr.bf16.mxu0 %v4255
        %5727 = vmatpush2.bf16.msra.mxu0 %v4254
        %5728 = vmatprep.mubr.bf16.mxu0 %v3195
        %5729 = vmatmul.mubr.bf16.gmra.mxu0 %v3194
        %v5730 = vpop.f32.mrf.mxu0
        %v5731 = vadd.f32 %v2967, %v5730
        %v5732 = vpop.f32.mrf.mxu0
        %v5733 = vadd.f32 %v2971, %v5732
        %v5734 = vpop.f32.mrf.mxu0
        %v5735 = vadd.f32 %v2967, %v5734
        %v5736 = vpop.f32.mrf.mxu0
        %v5737 = vadd.f32 %v2971, %v5736
        %5738 = vmatprep.mubr.bf16.mxu0 %v3201
        %5739 = vmatmul.mubr.bf16.gmra.mxu0 %v3200
        %v5740 = vpop.f32.mrf.mxu0
        %v5741 = vadd.f32 %v2967, %v5740
        %v5742 = vpop.f32.mrf.mxu0
        %v5743 = vadd.f32 %v2971, %v5742
        %v5744 = vpop.f32.mrf.mxu0
        %v5745 = vadd.f32 %v2967, %v5744
        %v5746 = vpop.f32.mrf.mxu0
        %v5747 = vadd.f32 %v2971, %v5746
        %5748 = vmatprep.mubr.bf16.mxu0 %v3207
        %5749 = vmatmul.mubr.bf16.gmra.mxu0 %v3206
        %v5750 = vpop.f32.mrf.mxu0
        %v5751 = vadd.f32 %v2967, %v5750
        %v5752 = vpop.f32.mrf.mxu0
        %v5753 = vadd.f32 %v2971, %v5752
        %v5754 = vpop.f32.mrf.mxu0
        %v5755 = vadd.f32 %v2967, %v5754
        %v5756 = vpop.f32.mrf.mxu0
        %v5757 = vadd.f32 %v2971, %v5756
        %5758 = vmatprep.mubr.bf16.mxu0 %v3213
        %5759 = vmatmul.mubr.bf16.gmra.mxu0 %v3212
        %v5760 = vpop.f32.mrf.mxu0
        %v5761 = vadd.f32 %v2967, %v5760
        %v5762 = vpop.f32.mrf.mxu0
        %v5763 = vadd.f32 %v2971, %v5762
        %v5764 = vpop.f32.mrf.mxu0
        %v5765 = vadd.f32 %v2967, %v5764
        %v5766 = vpop.f32.mrf.mxu0
        %v5767 = vadd.f32 %v2971, %v5766
        %5768 = vmatprep.mubr.bf16.mxu0 %v3219
        %5769 = vmatmul.mubr.bf16.gmra.mxu0 %v3218
        %v5770 = vpop.f32.mrf.mxu0
        %v5771 = vadd.f32 %v2967, %v5770
        %v5772 = vpop.f32.mrf.mxu0
        %v5773 = vadd.f32 %v2971, %v5772
        %v5774 = vpop.f32.mrf.mxu0
        %v5775 = vadd.f32 %v2967, %v5774
        %v5776 = vpop.f32.mrf.mxu0
        %v5777 = vadd.f32 %v2971, %v5776
        %5778 = vmatprep.mubr.bf16.mxu0 %v3225
        %5779 = vmatmul.mubr.bf16.gmra.mxu0 %v3224
        %v5780 = vpop.f32.mrf.mxu0
        %v5781 = vadd.f32 %v2967, %v5780
        %v5782 = vpop.f32.mrf.mxu0
        %v5783 = vadd.f32 %v2971, %v5782
        %v5784 = vpop.f32.mrf.mxu0
        %v5785 = vadd.f32 %v2967, %v5784
        %v5786 = vpop.f32.mrf.mxu0
        %v5787 = vadd.f32 %v2971, %v5786
        %5788 = vmatprep.mubr.bf16.mxu0 %v3231
        %5789 = vmatmul.mubr.bf16.gmra.mxu0 %v3230
        %v5790 = vpop.f32.mrf.mxu0
        %v5791 = vadd.f32 %v2967, %v5790
        %v5792 = vpop.f32.mrf.mxu0
        %v5793 = vadd.f32 %v2971, %v5792
        %v5794 = vpop.f32.mrf.mxu0
        %v5795 = vadd.f32 %v2967, %v5794
        %v5796 = vpop.f32.mrf.mxu0
        %v5797 = vadd.f32 %v2971, %v5796
        %5798 = vmatprep.mubr.bf16.mxu0 %v3237
        %5799 = vmatmul.mubr.bf16.gmra.mxu0 %v3236
        %v5800 = vpop.f32.mrf.mxu0
        %v5801 = vadd.f32 %v2967, %v5800
        %v5802 = vpop.f32.mrf.mxu0
        %v5803 = vadd.f32 %v2971, %v5802
        %v5804 = vpop.f32.mrf.mxu0
        %v5805 = vadd.f32 %v2967, %v5804
        %v5806 = vpop.f32.mrf.mxu0
        %v5807 = vadd.f32 %v2971, %v5806
        %5808 = vmatprep.mubr.bf16.mxu0 %v3243
        %5809 = vmatmul.mubr.bf16.gmra.mxu0 %v3242
        %v5810 = vpop.f32.mrf.mxu0
        %v5811 = vadd.f32 %v2967, %v5810
        %v5812 = vpop.f32.mrf.mxu0
        %v5813 = vadd.f32 %v2971, %v5812
        %v5814 = vpop.f32.mrf.mxu0
        %v5815 = vadd.f32 %v2967, %v5814
        %v5816 = vpop.f32.mrf.mxu0
        %v5817 = vadd.f32 %v2971, %v5816
        %5818 = vmatprep.mubr.bf16.mxu0 %v3249
        %5819 = vmatmul.mubr.bf16.gmra.mxu0 %v3248
        %v5820 = vpop.f32.mrf.mxu0
        %v5821 = vadd.f32 %v2967, %v5820
        %v5822 = vpop.f32.mrf.mxu0
        %v5823 = vadd.f32 %v2971, %v5822
        %v5824 = vpop.f32.mrf.mxu0
        %v5825 = vadd.f32 %v2967, %v5824
        %v5826 = vpop.f32.mrf.mxu0
        %v5827 = vadd.f32 %v2971, %v5826
        %5828 = vmatprep.mubr.bf16.mxu0 %v3255
        %5829 = vmatmul.mubr.bf16.gmra.mxu0 %v3254
        %v5830 = vpop.f32.mrf.mxu0
        %v5831 = vadd.f32 %v2967, %v5830
        %v5832 = vpop.f32.mrf.mxu0
        %v5833 = vadd.f32 %v2971, %v5832
        %v5834 = vpop.f32.mrf.mxu0
        %v5835 = vadd.f32 %v2967, %v5834
        %v5836 = vpop.f32.mrf.mxu0
        %v5837 = vadd.f32 %v2971, %v5836
        %5838 = vmatprep.mubr.bf16.mxu0 %v3261
        %5839 = vmatmul.mubr.bf16.gmra.mxu0 %v3260
        %v5840 = vpop.f32.mrf.mxu0
        %v5841 = vadd.f32 %v2967, %v5840
        %v5842 = vpop.f32.mrf.mxu0
        %v5843 = vadd.f32 %v2971, %v5842
        %v5844 = vpop.f32.mrf.mxu0
        %v5845 = vadd.f32 %v2967, %v5844
        %v5846 = vpop.f32.mrf.mxu0
        %v5847 = vadd.f32 %v2971, %v5846
        %5848 = vdwg.mxu0
        %5849 = vmatprep.subr.bf16.mxu0 %v4345
        %5850 = vmatpush1.bf16.msra.mxu0 %v4344
        %5851 = vmatprep.subr.bf16.mxu0 %v4339
        %5852 = vmatpush1.bf16.msra.mxu0 %v4338
        %5853 = vmatprep.subr.bf16.mxu0 %v4333
        %5854 = vmatpush1.bf16.msra.mxu0 %v4332
        %5855 = vmatprep.subr.bf16.mxu0 %v4327
        %5856 = vmatpush1.bf16.msra.mxu0 %v4326
        %5857 = vmatprep.subr.bf16.mxu0 %v4321
        %5858 = vmatpush1.bf16.msra.mxu0 %v4320
        %5859 = vmatprep.subr.bf16.mxu0 %v4315
        %5860 = vmatpush1.bf16.msra.mxu0 %v4314
        %5861 = vmatprep.subr.bf16.mxu0 %v4309
        %5862 = vmatpush1.bf16.msra.mxu0 %v4308
        %5863 = vmatprep.subr.bf16.mxu0 %v4303
        %5864 = vmatpush1.bf16.msra.mxu0 %v4302
        %5865 = vmatprep.subr.bf16.mxu0 %v4393
        %5866 = vmatpush2.bf16.msra.mxu0 %v4392
        %5867 = vmatprep.subr.bf16.mxu0 %v4387
        %5868 = vmatpush2.bf16.msra.mxu0 %v4386
        %5869 = vmatprep.subr.bf16.mxu0 %v4381
        %5870 = vmatpush2.bf16.msra.mxu0 %v4380
        %5871 = vmatprep.subr.bf16.mxu0 %v4375
        %5872 = vmatpush2.bf16.msra.mxu0 %v4374
        %5873 = vmatprep.subr.bf16.mxu0 %v4369
        %5874 = vmatpush2.bf16.msra.mxu0 %v4368
        %5875 = vmatprep.subr.bf16.mxu0 %v4363
        %5876 = vmatpush2.bf16.msra.mxu0 %v4362
        %5877 = vmatprep.subr.bf16.mxu0 %v4357
        %5878 = vmatpush2.bf16.msra.mxu0 %v4356
        %5879 = vmatprep.subr.bf16.mxu0 %v4351
        %5880 = vmatpush2.bf16.msra.mxu0 %v4350
        %5881 = vmatprep.mubr.bf16.mxu0 %v3197
        %5882 = vmatmul.mubr.bf16.gmra.mxu0 %v3196
        %v5883 = vpop.f32.mrf.mxu0
        %v5884 = vadd.f32 %v5731, %v5883
        %v5885 = vpop.f32.mrf.mxu0
        %v5886 = vadd.f32 %v5733, %v5885
        %v5887 = vpop.f32.mrf.mxu0
        %v5888 = vadd.f32 %v5735, %v5887
        %v5889 = vpop.f32.mrf.mxu0
        %v5890 = vadd.f32 %v5737, %v5889
        %5891 = vmatprep.mubr.bf16.mxu0 %v3203
        %5892 = vmatmul.mubr.bf16.gmra.mxu0 %v3202
        %v5893 = vpop.f32.mrf.mxu0
        %v5894 = vadd.f32 %v5741, %v5893
        %v5895 = vpop.f32.mrf.mxu0
        %v5896 = vadd.f32 %v5743, %v5895
        %v5897 = vpop.f32.mrf.mxu0
        %v5898 = vadd.f32 %v5745, %v5897
        %v5899 = vpop.f32.mrf.mxu0
        %v5900 = vadd.f32 %v5747, %v5899
        %5901 = vmatprep.mubr.bf16.mxu0 %v3209
        %5902 = vmatmul.mubr.bf16.gmra.mxu0 %v3208
        %v5903 = vpop.f32.mrf.mxu0
        %v5904 = vadd.f32 %v5751, %v5903
        %v5905 = vpop.f32.mrf.mxu0
        %v5906 = vadd.f32 %v5753, %v5905
        %v5907 = vpop.f32.mrf.mxu0
        %v5908 = vadd.f32 %v5755, %v5907
        %v5909 = vpop.f32.mrf.mxu0
        %v5910 = vadd.f32 %v5757, %v5909
        %5911 = vmatprep.mubr.bf16.mxu0 %v3215
        %5912 = vmatmul.mubr.bf16.gmra.mxu0 %v3214
        %v5913 = vpop.f32.mrf.mxu0
        %v5914 = vadd.f32 %v5761, %v5913
        %v5915 = vpop.f32.mrf.mxu0
        %v5916 = vadd.f32 %v5763, %v5915
        %v5917 = vpop.f32.mrf.mxu0
        %v5918 = vadd.f32 %v5765, %v5917
        %v5919 = vpop.f32.mrf.mxu0
        %v5920 = vadd.f32 %v5767, %v5919
        %5921 = vmatprep.mubr.bf16.mxu0 %v3221
        %5922 = vmatmul.mubr.bf16.gmra.mxu0 %v3220
        %v5923 = vpop.f32.mrf.mxu0
        %v5924 = vadd.f32 %v5771, %v5923
        %v5925 = vpop.f32.mrf.mxu0
        %v5926 = vadd.f32 %v5773, %v5925
        %v5927 = vpop.f32.mrf.mxu0
        %v5928 = vadd.f32 %v5775, %v5927
        %v5929 = vpop.f32.mrf.mxu0
        %v5930 = vadd.f32 %v5777, %v5929
        %5931 = vmatprep.mubr.bf16.mxu0 %v3227
        %5932 = vmatmul.mubr.bf16.gmra.mxu0 %v3226
        %v5933 = vpop.f32.mrf.mxu0
        %v5934 = vadd.f32 %v5781, %v5933
        %v5935 = vpop.f32.mrf.mxu0
        %v5936 = vadd.f32 %v5783, %v5935
        %v5937 = vpop.f32.mrf.mxu0
        %v5938 = vadd.f32 %v5785, %v5937
        %v5939 = vpop.f32.mrf.mxu0
        %v5940 = vadd.f32 %v5787, %v5939
        %5941 = vmatprep.mubr.bf16.mxu0 %v3233
        %5942 = vmatmul.mubr.bf16.gmra.mxu0 %v3232
        %v5943 = vpop.f32.mrf.mxu0
        %v5944 = vadd.f32 %v5791, %v5943
        %v5945 = vpop.f32.mrf.mxu0
        %v5946 = vadd.f32 %v5793, %v5945
        %v5947 = vpop.f32.mrf.mxu0
        %v5948 = vadd.f32 %v5795, %v5947
        %v5949 = vpop.f32.mrf.mxu0
        %v5950 = vadd.f32 %v5797, %v5949
        %5951 = vmatprep.mubr.bf16.mxu0 %v3239
        %5952 = vmatmul.mubr.bf16.gmra.mxu0 %v3238
        %v5953 = vpop.f32.mrf.mxu0
        %v5954 = vadd.f32 %v5801, %v5953
        %v5955 = vpop.f32.mrf.mxu0
        %v5956 = vadd.f32 %v5803, %v5955
        %v5957 = vpop.f32.mrf.mxu0
        %v5958 = vadd.f32 %v5805, %v5957
        %v5959 = vpop.f32.mrf.mxu0
        %v5960 = vadd.f32 %v5807, %v5959
        %5961 = vmatprep.mubr.bf16.mxu0 %v3245
        %5962 = vmatmul.mubr.bf16.gmra.mxu0 %v3244
        %v5963 = vpop.f32.mrf.mxu0
        %v5964 = vadd.f32 %v5811, %v5963
        %v5965 = vpop.f32.mrf.mxu0
        %v5966 = vadd.f32 %v5813, %v5965
        %v5967 = vpop.f32.mrf.mxu0
        %v5968 = vadd.f32 %v5815, %v5967
        %v5969 = vpop.f32.mrf.mxu0
        %v5970 = vadd.f32 %v5817, %v5969
        %5971 = vmatprep.mubr.bf16.mxu0 %v3251
        %5972 = vmatmul.mubr.bf16.gmra.mxu0 %v3250
        %v5973 = vpop.f32.mrf.mxu0
        %v5974 = vadd.f32 %v5821, %v5973
        %v5975 = vpop.f32.mrf.mxu0
        %v5976 = vadd.f32 %v5823, %v5975
        %v5977 = vpop.f32.mrf.mxu0
        %v5978 = vadd.f32 %v5825, %v5977
        %v5979 = vpop.f32.mrf.mxu0
        %v5980 = vadd.f32 %v5827, %v5979
        %5981 = vmatprep.mubr.bf16.mxu0 %v3257
        %5982 = vmatmul.mubr.bf16.gmra.mxu0 %v3256
        %v5983 = vpop.f32.mrf.mxu0
        %v5984 = vadd.f32 %v5831, %v5983
        %v5985 = vpop.f32.mrf.mxu0
        %v5986 = vadd.f32 %v5833, %v5985
        %v5987 = vpop.f32.mrf.mxu0
        %v5988 = vadd.f32 %v5835, %v5987
        %v5989 = vpop.f32.mrf.mxu0
        %v5990 = vadd.f32 %v5837, %v5989
        %5991 = vmatprep.mubr.bf16.mxu0 %v3263
        %5992 = vmatmul.mubr.bf16.gmra.mxu0 %v3262
        %v5993 = vpop.f32.mrf.mxu0
        %v5994 = vadd.f32 %v5841, %v5993
        %v5995 = vpop.f32.mrf.mxu0
        %v5996 = vadd.f32 %v5843, %v5995
        %v5997 = vpop.f32.mrf.mxu0
        %v5998 = vadd.f32 %v5845, %v5997
        %v5999 = vpop.f32.mrf.mxu0
        %v6000 = vadd.f32 %v5847, %v5999
        %6001 = vdwg.mxu0
        %6002 = vmatprep.subr.bf16.mxu0 %v4441
        %6003 = vmatpush1.bf16.msra.mxu0 %v4440
        %6004 = vmatprep.subr.bf16.mxu0 %v4435
        %6005 = vmatpush1.bf16.msra.mxu0 %v4434
        %6006 = vmatprep.subr.bf16.mxu0 %v4429
        %6007 = vmatpush1.bf16.msra.mxu0 %v4428
        %6008 = vmatprep.subr.bf16.mxu0 %v4423
        %6009 = vmatpush1.bf16.msra.mxu0 %v4422
        %6010 = vmatprep.subr.bf16.mxu0 %v4417
        %6011 = vmatpush1.bf16.msra.mxu0 %v4416
        %6012 = vmatprep.subr.bf16.mxu0 %v4411
        %6013 = vmatpush1.bf16.msra.mxu0 %v4410
        %6014 = vmatprep.subr.bf16.mxu0 %v4405
        %6015 = vmatpush1.bf16.msra.mxu0 %v4404
        %6016 = vmatprep.subr.bf16.mxu0 %v4399
        %6017 = vmatpush1.bf16.msra.mxu0 %v4398
        %6018 = vmatprep.subr.bf16.mxu0 %v4489
        %6019 = vmatpush2.bf16.msra.mxu0 %v4488
        %6020 = vmatprep.subr.bf16.mxu0 %v4483
        %6021 = vmatpush2.bf16.msra.mxu0 %v4482
        %6022 = vmatprep.subr.bf16.mxu0 %v4477
        %6023 = vmatpush2.bf16.msra.mxu0 %v4476
        %6024 = vmatprep.subr.bf16.mxu0 %v4471
        %6025 = vmatpush2.bf16.msra.mxu0 %v4470
        %6026 = vmatprep.subr.bf16.mxu0 %v4465
        %6027 = vmatpush2.bf16.msra.mxu0 %v4464
        %6028 = vmatprep.subr.bf16.mxu0 %v4459
        %6029 = vmatpush2.bf16.msra.mxu0 %v4458
        %6030 = vmatprep.subr.bf16.mxu0 %v4453
        %6031 = vmatpush2.bf16.msra.mxu0 %v4452
        %6032 = vmatprep.subr.bf16.mxu0 %v4447
        %6033 = vmatpush2.bf16.msra.mxu0 %v4446
        %6034 = vmatprep.mubr.bf16.mxu0 %v3199
        %6035 = vmatmul.mubr.bf16.gmra.mxu0 %v3198
        %v6036 = vpop.f32.mrf.mxu0
        %v6037 = vadd.f32 %v5884, %v6036
        %v6038 = vpop.f32.mrf.mxu0
        %v6039 = vadd.f32 %v5886, %v6038
        %v6040 = vpop.f32.mrf.mxu0
        %v6041 = vadd.f32 %v5888, %v6040
        %v6042 = vpop.f32.mrf.mxu0
        %v6043 = vadd.f32 %v5890, %v6042
        %6044 = vmatprep.mubr.bf16.mxu0 %v3205
        %6045 = vmatmul.mubr.bf16.gmra.mxu0 %v3204
        %v6046 = vpop.f32.mrf.mxu0
        %v6047 = vadd.f32 %v5894, %v6046
        %v6048 = vpop.f32.mrf.mxu0
        %v6049 = vadd.f32 %v5896, %v6048
        %v6050 = vpop.f32.mrf.mxu0
        %v6051 = vadd.f32 %v5898, %v6050
        %v6052 = vpop.f32.mrf.mxu0
        %v6053 = vadd.f32 %v5900, %v6052
        %6054 = vmatprep.mubr.bf16.mxu0 %v3211
        %6055 = vmatmul.mubr.bf16.gmra.mxu0 %v3210
        %v6056 = vpop.f32.mrf.mxu0
        %v6057 = vadd.f32 %v5904, %v6056
        %v6058 = vpop.f32.mrf.mxu0
        %v6059 = vadd.f32 %v5906, %v6058
        %v6060 = vpop.f32.mrf.mxu0
        %v6061 = vadd.f32 %v5908, %v6060
        %v6062 = vpop.f32.mrf.mxu0
        %v6063 = vadd.f32 %v5910, %v6062
        %6064 = vmatprep.mubr.bf16.mxu0 %v3217
        %6065 = vmatmul.mubr.bf16.gmra.mxu0 %v3216
        %v6066 = vpop.f32.mrf.mxu0
        %v6067 = vadd.f32 %v5914, %v6066
        %v6068 = vpop.f32.mrf.mxu0
        %v6069 = vadd.f32 %v5916, %v6068
        %v6070 = vpop.f32.mrf.mxu0
        %v6071 = vadd.f32 %v5918, %v6070
        %v6072 = vpop.f32.mrf.mxu0
        %v6073 = vadd.f32 %v5920, %v6072
        %6074 = vmatprep.mubr.bf16.mxu0 %v3223
        %6075 = vmatmul.mubr.bf16.gmra.mxu0 %v3222
        %v6076 = vpop.f32.mrf.mxu0
        %v6077 = vadd.f32 %v5924, %v6076
        %v6078 = vpop.f32.mrf.mxu0
        %v6079 = vadd.f32 %v5926, %v6078
        %v6080 = vpop.f32.mrf.mxu0
        %v6081 = vadd.f32 %v5928, %v6080
        %v6082 = vpop.f32.mrf.mxu0
        %v6083 = vadd.f32 %v5930, %v6082
        %6084 = vmatprep.mubr.bf16.mxu0 %v3229
        %6085 = vmatmul.mubr.bf16.gmra.mxu0 %v3228
        %v6086 = vpop.f32.mrf.mxu0
        %v6087 = vadd.f32 %v5934, %v6086
        %v6088 = vpop.f32.mrf.mxu0
        %v6089 = vadd.f32 %v5936, %v6088
        %v6090 = vpop.f32.mrf.mxu0
        %v6091 = vadd.f32 %v5938, %v6090
        %v6092 = vpop.f32.mrf.mxu0
        %v6093 = vadd.f32 %v5940, %v6092
        %6094 = vmatprep.mubr.bf16.mxu0 %v3235
        %6095 = vmatmul.mubr.bf16.gmra.mxu0 %v3234
        %v6096 = vpop.f32.mrf.mxu0
        %v6097 = vadd.f32 %v5944, %v6096
        %v6098 = vpop.f32.mrf.mxu0
        %v6099 = vadd.f32 %v5946, %v6098
        %v6100 = vpop.f32.mrf.mxu0
        %v6101 = vadd.f32 %v5948, %v6100
        %v6102 = vpop.f32.mrf.mxu0
        %v6103 = vadd.f32 %v5950, %v6102
        %6104 = vmatprep.mubr.bf16.mxu0 %v3241
        %6105 = vmatmul.mubr.bf16.gmra.mxu0 %v3240
        %v6106 = vpop.f32.mrf.mxu0
        %v6107 = vadd.f32 %v5954, %v6106
        %v6108 = vpop.f32.mrf.mxu0
        %v6109 = vadd.f32 %v5956, %v6108
        %v6110 = vpop.f32.mrf.mxu0
        %v6111 = vadd.f32 %v5958, %v6110
        %v6112 = vpop.f32.mrf.mxu0
        %v6113 = vadd.f32 %v5960, %v6112
        %6114 = vmatprep.mubr.bf16.mxu0 %v3247
        %6115 = vmatmul.mubr.bf16.gmra.mxu0 %v3246
        %v6116 = vpop.f32.mrf.mxu0
        %v6117 = vadd.f32 %v5964, %v6116
        %v6118 = vpop.f32.mrf.mxu0
        %v6119 = vadd.f32 %v5966, %v6118
        %v6120 = vpop.f32.mrf.mxu0
        %v6121 = vadd.f32 %v5968, %v6120
        %v6122 = vpop.f32.mrf.mxu0
        %v6123 = vadd.f32 %v5970, %v6122
        %6124 = vmatprep.mubr.bf16.mxu0 %v3253
        %6125 = vmatmul.mubr.bf16.gmra.mxu0 %v3252
        %v6126 = vpop.f32.mrf.mxu0
        %v6127 = vadd.f32 %v5974, %v6126
        %v6128 = vpop.f32.mrf.mxu0
        %v6129 = vadd.f32 %v5976, %v6128
        %v6130 = vpop.f32.mrf.mxu0
        %v6131 = vadd.f32 %v5978, %v6130
        %v6132 = vpop.f32.mrf.mxu0
        %v6133 = vadd.f32 %v5980, %v6132
        %6134 = vmatprep.mubr.bf16.mxu0 %v3259
        %6135 = vmatmul.mubr.bf16.gmra.mxu0 %v3258
        %v6136 = vpop.f32.mrf.mxu0
        %v6137 = vadd.f32 %v5984, %v6136
        %v6138 = vpop.f32.mrf.mxu0
        %v6139 = vadd.f32 %v5986, %v6138
        %v6140 = vpop.f32.mrf.mxu0
        %v6141 = vadd.f32 %v5988, %v6140
        %v6142 = vpop.f32.mrf.mxu0
        %v6143 = vadd.f32 %v5990, %v6142
        %6144 = vmatprep.mubr.bf16.mxu0 %v3265
        %6145 = vmatmul.mubr.bf16.gmra.mxu0 %v3264
        %v6146 = vpop.f32.mrf.mxu0
        %v6147 = vadd.f32 %v5994, %v6146
        %v6148 = vpop.f32.mrf.mxu0
        %v6149 = vadd.f32 %v5996, %v6148
        %v6150 = vpop.f32.mrf.mxu0
        %v6151 = vadd.f32 %v5998, %v6150
        %v6152 = vpop.f32.mrf.mxu0
        %v6153 = vadd.f32 %v6000, %v6152
        %6154 = vdwg.mxu0
        %6155 = vst [vmem:[%s422] sm:$0xff] %v5119
        %6156 = vst [vmem:[%s422 + $0x8] sm:$0xff] %v5121
        %6157 = vst [vmem:[%s422 + $0x10] sm:$0xff] %v5578
        %6158 = vst [vmem:[%s422 + $0x18] sm:$0xff] %v5580
        %6159 = vst [vmem:[%s422 + $0x20] sm:$0xff] %v6037
        %6160 = vst [vmem:[%s422 + $0x28] sm:$0xff] %v6039
        %6161 = vst [vmem:[%s422 + $0x30] sm:$0xff] %v5123
        %6162 = vst [vmem:[%s422 + $0x38] sm:$0xff] %v5125
        %6163 = vst [vmem:[%s422 + $0x40] sm:$0xff] %v5582
        %6164 = vst [vmem:[%s422 + $0x48] sm:$0xff] %v5584
        %6165 = vst [vmem:[%s422 + $0x50] sm:$0xff] %v6041
        %6166 = vst [vmem:[%s422 + $0x58] sm:$0xff] %v6043
        %6167 = vst [vmem:[%s422 + $0x60] sm:$0xff] %v5129
        %6168 = vst [vmem:[%s422 + $0x68] sm:$0xff] %v5131
        %6169 = vst [vmem:[%s422 + $0x70] sm:$0xff] %v5588
        %6170 = vst [vmem:[%s422 + $0x78] sm:$0xff] %v5590
        %6171 = vst [vmem:[%s422 + $0x80] sm:$0xff] %v6047
        %6172 = vst [vmem:[%s422 + $0x88] sm:$0xff] %v6049
        %6173 = vst [vmem:[%s422 + $0x90] sm:$0xff] %v5133
        %6174 = vst [vmem:[%s422 + $0x98] sm:$0xff] %v5135
        %6175 = vst [vmem:[%s422 + $0xa0] sm:$0xff] %v5592
        %6176 = vst [vmem:[%s422 + $0xa8] sm:$0xff] %v5594
        %6177 = vst [vmem:[%s422 + $0xb0] sm:$0xff] %v6051
        %6178 = vst [vmem:[%s422 + $0xb8] sm:$0xff] %v6053
        %6179 = vst [vmem:[%s422 + $0xc0] sm:$0xff] %v5139
        %6180 = vst [vmem:[%s422 + $0xc8] sm:$0xff] %v5141
        %6181 = vst [vmem:[%s422 + $0xd0] sm:$0xff] %v5598
        %6182 = vst [vmem:[%s422 + $0xd8] sm:$0xff] %v5600
        %6183 = vst [vmem:[%s422 + $0xe0] sm:$0xff] %v6057
        %6184 = vst [vmem:[%s422 + $0xe8] sm:$0xff] %v6059
        %6185 = vst [vmem:[%s422 + $0xf0] sm:$0xff] %v5143
        %6186 = vst [vmem:[%s422 + $0xf8] sm:$0xff] %v5145
        %6187 = vst [vmem:[%s422 + $0x100] sm:$0xff] %v5602
        %6188 = vst [vmem:[%s422 + $0x108] sm:$0xff] %v5604
        %6189 = vst [vmem:[%s422 + $0x110] sm:$0xff] %v6061
        %6190 = vst [vmem:[%s422 + $0x118] sm:$0xff] %v6063
        %6191 = vst [vmem:[%s422 + $0x120] sm:$0xff] %v5149
        %6192 = vst [vmem:[%s422 + $0x128] sm:$0xff] %v5151
        %6193 = vst [vmem:[%s422 + $0x130] sm:$0xff] %v5608
        %6194 = vst [vmem:[%s422 + $0x138] sm:$0xff] %v5610
        %6195 = vst [vmem:[%s422 + $0x140] sm:$0xff] %v6067
        %6196 = vst [vmem:[%s422 + $0x148] sm:$0xff] %v6069
        %6197 = vst [vmem:[%s422 + $0x150] sm:$0xff] %v5153
        %6198 = vst [vmem:[%s422 + $0x158] sm:$0xff] %v5155
        %6199 = vst [vmem:[%s422 + $0x160] sm:$0xff] %v5612
        %6200 = vst [vmem:[%s422 + $0x168] sm:$0xff] %v5614
        %6201 = vst [vmem:[%s422 + $0x170] sm:$0xff] %v6071
        %6202 = vst [vmem:[%s422 + $0x178] sm:$0xff] %v6073
        %6203 = vst [vmem:[%s422 + $0x180] sm:$0xff] %v5159
        %6204 = vst [vmem:[%s422 + $0x188] sm:$0xff] %v5161
        %6205 = vst [vmem:[%s422 + $0x190] sm:$0xff] %v5618
        %6206 = vst [vmem:[%s422 + $0x198] sm:$0xff] %v5620
        %6207 = vst [vmem:[%s422 + $0x1a0] sm:$0xff] %v6077
        %6208 = vst [vmem:[%s422 + $0x1a8] sm:$0xff] %v6079
        %6209 = vst [vmem:[%s422 + $0x1b0] sm:$0xff] %v5163
        %6210 = vst [vmem:[%s422 + $0x1b8] sm:$0xff] %v5165
        %6211 = vst [vmem:[%s422 + $0x1c0] sm:$0xff] %v5622
        %6212 = vst [vmem:[%s422 + $0x1c8] sm:$0xff] %v5624
        %6213 = vst [vmem:[%s422 + $0x1d0] sm:$0xff] %v6081
        %6214 = vst [vmem:[%s422 + $0x1d8] sm:$0xff] %v6083
        %6215 = vst [vmem:[%s422 + $0x1e0] sm:$0xff] %v5169
        %6216 = vst [vmem:[%s422 + $0x1e8] sm:$0xff] %v5171
        %6217 = vst [vmem:[%s422 + $0x1f0] sm:$0xff] %v5628
        %6218 = vst [vmem:[%s422 + $0x1f8] sm:$0xff] %v5630
        %6219 = vst [vmem:[%s422 + $0x200] sm:$0xff] %v6087
        %6220 = vst [vmem:[%s422 + $0x208] sm:$0xff] %v6089
        %6221 = vst [vmem:[%s422 + $0x210] sm:$0xff] %v5173
        %6222 = vst [vmem:[%s422 + $0x218] sm:$0xff] %v5175
        %6223 = vst [vmem:[%s422 + $0x220] sm:$0xff] %v5632
        %6224 = vst [vmem:[%s422 + $0x228] sm:$0xff] %v5634
        %6225 = vst [vmem:[%s422 + $0x230] sm:$0xff] %v6091
        %6226 = vst [vmem:[%s422 + $0x238] sm:$0xff] %v6093
        %6227 = vst [vmem:[%s422 + $0x240] sm:$0xff] %v5179
        %6228 = vst [vmem:[%s422 + $0x248] sm:$0xff] %v5181
        %6229 = vst [vmem:[%s422 + $0x250] sm:$0xff] %v5638
        %6230 = vst [vmem:[%s422 + $0x258] sm:$0xff] %v5640
        %6231 = vst [vmem:[%s422 + $0x260] sm:$0xff] %v6097
        %6232 = vst [vmem:[%s422 + $0x268] sm:$0xff] %v6099
        %6233 = vst [vmem:[%s422 + $0x270] sm:$0xff] %v5183
        %6234 = vst [vmem:[%s422 + $0x278] sm:$0xff] %v5185
        %6235 = vst [vmem:[%s422 + $0x280] sm:$0xff] %v5642
        %6236 = vst [vmem:[%s422 + $0x288] sm:$0xff] %v5644
        %6237 = vst [vmem:[%s422 + $0x290] sm:$0xff] %v6101
        %6238 = vst [vmem:[%s422 + $0x298] sm:$0xff] %v6103
        %6239 = vst [vmem:[%s422 + $0x2a0] sm:$0xff] %v5189
        %6240 = vst [vmem:[%s422 + $0x2a8] sm:$0xff] %v5191
        %6241 = vst [vmem:[%s422 + $0x2b0] sm:$0xff] %v5648
        %6242 = vst [vmem:[%s422 + $0x2b8] sm:$0xff] %v5650
        %6243 = vst [vmem:[%s422 + $0x2c0] sm:$0xff] %v6107
        %6244 = vst [vmem:[%s422 + $0x2c8] sm:$0xff] %v6109
        %6245 = vst [vmem:[%s422 + $0x2d0] sm:$0xff] %v5193
        %6246 = vst [vmem:[%s422 + $0x2d8] sm:$0xff] %v5195
        %6247 = vst [vmem:[%s422 + $0x2e0] sm:$0xff] %v5652
        %6248 = vst [vmem:[%s422 + $0x2e8] sm:$0xff] %v5654
        %6249 = vst [vmem:[%s422 + $0x2f0] sm:$0xff] %v6111
        %6250 = vst [vmem:[%s422 + $0x2f8] sm:$0xff] %v6113
        %6251 = vst [vmem:[%s422 + $0x300] sm:$0xff] %v5199
        %6252 = vst [vmem:[%s422 + $0x308] sm:$0xff] %v5201
        %6253 = vst [vmem:[%s422 + $0x310] sm:$0xff] %v5658
        %6254 = vst [vmem:[%s422 + $0x318] sm:$0xff] %v5660
        %6255 = vst [vmem:[%s422 + $0x320] sm:$0xff] %v6117
        %6256 = vst [vmem:[%s422 + $0x328] sm:$0xff] %v6119
        %6257 = vst [vmem:[%s422 + $0x330] sm:$0xff] %v5203
        %6258 = vst [vmem:[%s422 + $0x338] sm:$0xff] %v5205
        %6259 = vst [vmem:[%s422 + $0x340] sm:$0xff] %v5662
        %6260 = vst [vmem:[%s422 + $0x348] sm:$0xff] %v5664
        %6261 = vst [vmem:[%s422 + $0x350] sm:$0xff] %v6121
        %6262 = vst [vmem:[%s422 + $0x358] sm:$0xff] %v6123
        %6263 = vst [vmem:[%s422 + $0x360] sm:$0xff] %v5209
        %6264 = vst [vmem:[%s422 + $0x368] sm:$0xff] %v5211
        %6265 = vst [vmem:[%s422 + $0x370] sm:$0xff] %v5668
        %6266 = vst [vmem:[%s422 + $0x378] sm:$0xff] %v5670
        %6267 = vst [vmem:[%s422 + $0x380] sm:$0xff] %v6127
        %6268 = vst [vmem:[%s422 + $0x388] sm:$0xff] %v6129
        %6269 = vst [vmem:[%s422 + $0x390] sm:$0xff] %v5213
        %6270 = vst [vmem:[%s422 + $0x398] sm:$0xff] %v5215
        %6271 = vst [vmem:[%s422 + $0x3a0] sm:$0xff] %v5672
        %6272 = vst [vmem:[%s422 + $0x3a8] sm:$0xff] %v5674
        %6273 = vst [vmem:[%s422 + $0x3b0] sm:$0xff] %v6131
        %6274 = vst [vmem:[%s422 + $0x3b8] sm:$0xff] %v6133
        %6275 = vst [vmem:[%s422 + $0x3c0] sm:$0xff] %v5219
        %6276 = vst [vmem:[%s422 + $0x3c8] sm:$0xff] %v5221
        %6277 = vst [vmem:[%s422 + $0x3d0] sm:$0xff] %v5678
        %6278 = vst [vmem:[%s422 + $0x3d8] sm:$0xff] %v5680
        %6279 = vst [vmem:[%s422 + $0x3e0] sm:$0xff] %v6137
        %6280 = vst [vmem:[%s422 + $0x3e8] sm:$0xff] %v6139
        %6281 = vst [vmem:[%s422 + $0x3f0] sm:$0xff] %v5223
        %6282 = vst [vmem:[%s422 + $0x3f8] sm:$0xff] %v5225
        %6283 = vst [vmem:[%s422 + $0x400] sm:$0xff] %v5682
        %6284 = vst [vmem:[%s422 + $0x408] sm:$0xff] %v5684
        %6285 = vst [vmem:[%s422 + $0x410] sm:$0xff] %v6141
        %6286 = vst [vmem:[%s422 + $0x418] sm:$0xff] %v6143
        %6287 = vst [vmem:[%s422 + $0x420] sm:$0xff] %v5229
        %6288 = vst [vmem:[%s422 + $0x428] sm:$0xff] %v5231
        %6289 = vst [vmem:[%s422 + $0x430] sm:$0xff] %v5688
        %6290 = vst [vmem:[%s422 + $0x438] sm:$0xff] %v5690
        %6291 = vst [vmem:[%s422 + $0x440] sm:$0xff] %v6147
        %6292 = vst [vmem:[%s422 + $0x448] sm:$0xff] %v6149
        %6293 = vst [vmem:[%s422 + $0x450] sm:$0xff] %v5233
        %6294 = vst [vmem:[%s422 + $0x458] sm:$0xff] %v5235
        %6295 = vst [vmem:[%s422 + $0x460] sm:$0xff] %v5692
        %6296 = vst [vmem:[%s422 + $0x468] sm:$0xff] %v5694
        %6297 = vst [vmem:[%s422 + $0x470] sm:$0xff] %v6151
        %6298 = vst [vmem:[%s422 + $0x478] sm:$0xff] %v6153
        %s6299 = sand.u32 %s195, 1
        %s6300 = scalar_lea.sflag [#allocation5], %s6299
        %s6301 = sand.u32 %s195, 1
        %s6302 = smul.addr %s6301, 1152
        %s6303 = scalar_lea.vmem [#allocation13], %s6302
        // Predicated region
        $region73: #{tpu_custom_call.1} parent=43 // pred_check
          %p6304 = pneg %p205
        $region74: #{tpu_custom_call.1} parent=43 // pred_check_branch
          %6306 = sbr.rel (%p6304) target = $region76
        $region75: #{tpu_custom_call.1} parent=43 // pred_region
          %s6307 = smul.u32 24, %s31
          %s6308 = smul.u32 6, %s32
          %s6310 = ssub.s32 18432, 18432
          %6311 = vsyncadd %s6300, %s6310
          %s6312 = smul.addr %s6307, 24
          %s6313 = sadd.s32 %s6308, %s6312
          %s6314 = smul.addr %s6313, 128
          %s6315 = scalar_lea.hbm %s6, %s6314
          %s6316 = sshll.u32 %s6303, 4
          %s6317 = int_to_ptr.vmem [resolvable:$true] %s6316
          %6322 = dma.vmem_to_hbm [thread:$0]  %s6317, 18432, %s6315, %s6300, 768, 3072, 48
        $region76: #{tpu_custom_call.1} parent=43 // pred_fallthru
          _
      $region44: #{tpu_custom_call.1} parent=5 // pred_fallthru
        _
      %p6323 = scmp.le.s32.totalorder 2, %s22
      // Predicated region
      $region77: #{tpu_custom_call.1} parent=5 // pred_check
        %p6324 = pneg %p6323
      $region78: #{tpu_custom_call.1} parent=5 // pred_check_branch
        %6326 = sbr.rel (%p6324) target = $region80
      $region79: #{tpu_custom_call.1} parent=5 // pred_region
        %s6327 = ssub.s32 %s22, 2
        // Predicated region
        $region81: #{tpu_custom_call.1} parent=79 // pred_check
          %p6328 = pneg %p211
        $region82: #{tpu_custom_call.1} parent=79 // pred_check_branch
          %6330 = sbr.rel (%p6328) target = $region84
        $region83: #{tpu_custom_call.1} parent=79 // pred_region
          %s6331 = sand.u32 %s196, 1
          %s6332 = scalar_lea.sflag [#allocation5], %s6331
          %s6333 = sand.u32 %s196, 1
          %s6334 = smul.addr %s6333, 1152
          %s6335 = scalar_lea.vmem [#allocation13], %s6334
          %6336 = dma.done %s6332, 18432
        $region84: #{tpu_custom_call.1} parent=79 // pred_fallthru
          _
      $region80: #{tpu_custom_call.1} parent=5 // pred_fallthru
        _
    $region6: #{tpu_custom_call.1} parent=1 // loop_footer
      %s26 = sadd.s32 1, %s22
    $region7: #{tpu_custom_call.1} parent=1 // loop_footer_branch
      %21 = sbr.rel target = $region3
    $region8: #{tpu_custom_call.1} parent=1 // loop_exit
      _
    %6337 = vsyncpa [#allocation4], 1
    %s6338 = scalar_lea.sflag [#allocation4], 1
    %6339 = vsyncpa %s6338, 1
    %6340 = vsyncpa [#allocation7], 1
    %s6341 = scalar_lea.sflag [#allocation7], 1
    %6342 = vsyncpa %s6341, 1
    %6343 = vsyncpa [#allocation10], 1
    %6344 = vsyncpa [#allocation5], 1
    %s6345 = scalar_lea.sflag [#allocation5], 1
    %6346 = vsyncpa %s6345, 1

</llo_original>
